<compile_context>
chip_gen: v6e
topology: v6e:2x2x1
jax: 0.10.0
libtpu: 0.0.40
codegen_flags: <defaults>
</compile_context>

<pallas_src>
import functools

import numpy as np
import jax
import jax.numpy as jnp
from jax import lax
from jax.experimental import pallas as pl
from jax.experimental.pallas import tpu as pltpu


def _bilinear_matrix(n_in, n_out):
    """1-D interpolation matrix (n_out, n_in) for align_corners=True bilinear."""
    m = np.zeros((n_out, n_in), dtype=np.float32)
    if n_out == 1 or n_in == 1:
        m[:, 0] = 1.0
        return m
    scale = (n_in - 1) / (n_out - 1)
    for o in range(n_out):
        src = o * scale
        i0 = min(int(np.floor(src)), n_in - 1)
        i1 = min(i0 + 1, n_in - 1)
        f = src - i0
        m[o, i0] += 1.0 - f
        m[o, i1] += f
    return m


def _justup_kernel(x_ref, awt_ref, ahb_ref, wmask_ref,
                   w1_ref, s1_ref, b1_ref, w2_ref, s2_ref, b2_ref,
                   out_ref, f1_ref, pat1_ref, pat2_ref,
                   *, H, W, Hup, Wup, Cin, Cout):
    f32 = jnp.float32
    P = Hup * Wup

    # ---- 1) separable bilinear x2 upsample: two small 2-D MXU matmuls ------
    # x_ref[0] is already (Cin*H, W) (free wrapper reshape, rows ordered (c, h)).
    u = jnp.dot(x_ref[0], awt_ref[...], preferred_element_type=f32)   # (Cin*H, Wup)
    # H-operator rows ordered (row_out, channel): v[i*Cin + c, :] = upsampled
    # row i of channel c.  Makes the flatten below contiguous sublane slices.
    v = jnp.dot(ahb_ref[...], u, preferred_element_type=f32)          # (Hup*Cin, Wup)

    # flatten spatial onto lanes (row-major i*Wup + j) -> lane-dense (Cin, P)
    for i in range(Hup):
        f1_ref[:, i * Wup:(i + 1) * Wup] = v[i * Cin:(i + 1) * Cin, :]
    f1 = f1_ref[...]

    mask_l = wmask_ref[0:1, :]          # 0.0 at flattened columns with j == 0
    mask_r = wmask_ref[1:2, :]          # 0.0 at flattened columns with j == Wup-1

    def conv3x3_bn_relu(f, pat_ref, w_ref, s_ref, b_ref):
        # f: (C, P) lane-dense map.  Build the im2col matrix (9*C, P) in VMEM
        # scratch via 9 static window stores (shift = (dy-1)*Wup + (dx-1) on
        # the flat lane index; W-edge wrap is killed by the precomputed masks,
        # H-edge rows stay at the zero fill), then one MXU matmul.
        C = f.shape[0]
        pat_ref[...] = jnp.zeros_like(pat_ref)   # cheap; re-done every step (megacore-safe)
        fl = f * mask_l                          # source for dx = 2 taps (kills j_src == 0)
        fr = f * mask_r                          # source for dx = 0 taps (kills j_src == Wup-1)
        srcs = (fr, f, fl)
        for dx in range(3):
            src = srcs[dx]
            for dy in range(3):
                kb = dx * 3 + dy
                s = (dy - 1) * Wup + (dx - 1)
                if s >= 0:
                    pat_ref[kb * C:(kb + 1) * C, 0:P - s] = src[:, s:P]
                else:
                    pat_ref[kb * C:(kb + 1) * C, -s:P] = src[:, 0:P + s]
        acc = jnp.dot(w_ref[...], pat_ref[...],
                      preferred_element_type=f32)                    # (Cout, P)
        return jnp.maximum(acc * s_ref[...] + b_ref[...], 0.0)

    # ---- 2) conv1 + folded BN + ReLU, 3) conv2 + folded BN + ReLU ----------
    y1 = conv3x3_bn_relu(f1, pat1_ref, w1_ref, s1_ref, b1_ref)       # (Cout, P)
    y2 = conv3x3_bn_relu(y1, pat2_ref, w2_ref, s2_ref, b2_ref)       # (Cout, P)

    out_ref[0] = y2.astype(out_ref.dtype)        # lane-dense (Cout, 1024) store


def just_up(x_nchw, params):
    """JustUp forward.  x_nchw: (N, Cin, H, W) -> (N, Cout, 2H, 2W)."""
    N, Cin, H, W = x_nchw.shape
    Hup, Wup = 2 * H, 2 * W
    P = Hup * Wup
    Cout = params["s1"].shape[0]

    # separable upsample operators (tiny constants, no dense kron(Ah, Aw))
    ah = _bilinear_matrix(H, Hup)                               # (Hup, H)
    aw = _bilinear_matrix(W, Wup)                               # (Wup, W)
    awt = jnp.asarray(aw.T)                                     # (W, Wup)
    # H-operator with (row_out, channel)-ordered output rows and
    # (channel, row_in)-ordered input rows:  ahb[i*Cin + c, c*H + h] = ah[i, h]
    ahb_np = np.zeros((Hup * Cin, Cin * H), np.float32)
    for c in range(Cin):
        ahb_np[c::Cin, c * H:(c + 1) * H] = ah
    ahb = jnp.asarray(ahb_np)                                   # (Hup*Cin, Cin*H)

    # column-edge masks for the flat row-major (i*Wup + j) layout
    wmask_np = np.ones((2, P), np.float32)
    wmask_np[0, 0::Wup] = 0.0            # zero where j == 0
    wmask_np[1, Wup - 1::Wup] = 0.0      # zero where j == Wup-1
    wmask = jnp.asarray(wmask_np)

    kernel = functools.partial(_justup_kernel, H=H, W=W, Hup=Hup, Wup=Wup,
                               Cin=Cin, Cout=Cout)

    # free reshape: the kernel wants x as (N, Cin*H, W), rows ordered (c, h)
    x_flat = x_nchw.astype(jnp.float32).reshape(N, Cin * H, W)

    out_flat = pl.pallas_call(
        kernel,
        out_shape=jax.ShapeDtypeStruct((N, Cout, P), jnp.float32),
        grid_spec=pltpu.PrefetchScalarGridSpec(
            num_scalar_prefetch=0,
            grid=(N,),
            in_specs=[
                pl.BlockSpec((1, Cin * H, W), lambda n: (n, 0, 0)),     # NCHW input, no transpose
                pl.BlockSpec((W, Wup), lambda n: (0, 0)),
                pl.BlockSpec((Cin * Hup, Cin * H), lambda n: (0, 0)),
                pl.BlockSpec((2, P), lambda n: (0, 0)),
                pl.BlockSpec((Cout, 9 * Cin), lambda n: (0, 0)),
                pl.BlockSpec((Cout, 1), lambda n: (0, 0)),
                pl.BlockSpec((Cout, 1), lambda n: (0, 0)),
                pl.BlockSpec((Cout, 9 * Cout), lambda n: (0, 0)),
                pl.BlockSpec((Cout, 1), lambda n: (0, 0)),
                pl.BlockSpec((Cout, 1), lambda n: (0, 0)),
            ],
            out_specs=pl.BlockSpec((1, Cout, P), lambda n: (n, 0, 0)),
            scratch_shapes=[
                pltpu.VMEM((Cin, P), jnp.float32),          # flattened upsampled map
                pltpu.VMEM((9 * Cin, P), jnp.float32),      # conv1 im2col patches
                pltpu.VMEM((9 * Cout, P), jnp.float32),     # conv2 im2col patches
            ],
        ),
        compiler_params=pltpu.CompilerParams(dimension_semantics=("parallel",)),
    )(x_flat, awt, ahb, wmask,
      params["w1m"], params["s1"], params["b1"],
      params["w2m"], params["s2"], params["b2"])

    # kernel already emits NCHW with flat spatial; this reshape is free.
    return out_flat.reshape(N, Cout, Hup, Wup)


def init_params(key, in_ch, out_ch, eps=1e-5):
    """Deterministic synthetic parameters for Conv2d + BatchNorm2d (x2)."""
    ks = jax.random.split(key, 12)
    f32 = jnp.float32
    w1 = 0.1 * jax.random.normal(ks[0], (3, 3, in_ch, out_ch), f32)    # HWIO
    b1 = 0.05 * jax.random.normal(ks[1], (out_ch,), f32)
    w2 = 0.1 * jax.random.normal(ks[2], (3, 3, out_ch, out_ch), f32)
    b2 = 0.05 * jax.random.normal(ks[3], (out_ch,), f32)
    g1 = 1.0 + 0.1 * jax.random.normal(ks[4], (out_ch,), f32)
    be1 = 0.1 * jax.random.normal(ks[5], (out_ch,), f32)
    mu1 = 0.1 * jax.random.normal(ks[6], (out_ch,), f32)
    v1 = 1.0 + 0.2 * jax.random.uniform(ks[7], (out_ch,), dtype=f32)
    g2 = 1.0 + 0.1 * jax.random.normal(ks[8], (out_ch,), f32)
    be2 = 0.1 * jax.random.normal(ks[9], (out_ch,), f32)
    mu2 = 0.1 * jax.random.normal(ks[10], (out_ch,), f32)
    v2 = 1.0 + 0.2 * jax.random.uniform(ks[11], (out_ch,), dtype=f32)
    # fold conv bias + inference BatchNorm into per-channel scale/shift
    s1 = g1 / jnp.sqrt(v1 + eps)
    sh1 = be1 + (b1 - mu1) * s1
    s2 = g2 / jnp.sqrt(v2 + eps)
    sh2 = be2 + (b2 - mu2) * s2
    # im2col weights, row order (dx, dy, ci) to match the kernel's patch rows:
    # w_mat[co, (dx*3+dy)*C + ci] = w_hwio[dy, dx, ci, co]
    w1m = jnp.transpose(w1, (3, 1, 0, 2)).reshape(out_ch, 9 * in_ch)
    w2m = jnp.transpose(w2, (3, 1, 0, 2)).reshape(out_ch, 9 * out_ch)
    return {
        "w1_hwio": w1, "w2_hwio": w2,
        "w1m": w1m, "w2m": w2m,
        "s1": s1.reshape(out_ch, 1), "b1": sh1.reshape(out_ch, 1),
        "s2": s2.reshape(out_ch, 1), "b2": sh2.reshape(out_ch, 1),
    }


def reference(x_nchw, params):
    """Pure-JAX reference with identical semantics (for a sanity check)."""
    N, Cin, H, W = x_nchw.shape
    Hup, Wup = 2 * H, 2 * W
    ah = jnp.asarray(_bilinear_matrix(H, Hup))
    aw = jnp.asarray(_bilinear_matrix(W, Wup))
    x = jnp.transpose(x_nchw, (0, 2, 3, 1)).astype(jnp.float32)
    up = jnp.einsum("oh,nhwc->nowc", ah, x, precision="highest")
    up = jnp.einsum("pw,nowc->nopc", aw, up, precision="highest")
    s1 = params["s1"].reshape(1, 1, 1, -1)
    b1 = params["b1"].reshape(1, 1, 1, -1)
    s2 = params["s2"].reshape(1, 1, 1, -1)
    b2 = params["b2"].reshape(1, 1, 1, -1)
    y = lax.conv_general_dilated(up, params["w1_hwio"], (1, 1), "SAME",
                                 dimension_numbers=("NHWC", "HWIO", "NHWC"),
                                 precision=lax.Precision.HIGHEST)
    y = jnp.maximum(y * s1 + b1, 0.0)
    y = lax.conv_general_dilated(y, params["w2_hwio"], (1, 1), "SAME",
                                 dimension_numbers=("NHWC", "HWIO", "NHWC"),
                                 precision=lax.Precision.HIGHEST)
    y = jnp.maximum(y * s2 + b2, 0.0)
    return jnp.transpose(y, (0, 3, 1, 2))


if __name__ == "__main__":
    key = jax.random.PRNGKey(0)
    kx, kp = jax.random.split(key)
    N, Cin, H, W = 2, 4, 16, 16           # JustUp(in_ch=4, out_ch=8)
    Cout = 8

    x = jax.random.normal(kx, (N, Cin, H, W), jnp.float32)   # NCHW like PyTorch
    params = init_params(kp, Cin, Cout)

    out = jax.block_until_ready(just_up(x, params))
    assert out.shape == (N, Cout, 2 * H, 2 * W), out.shape

    ref = jax.block_until_ready(reference(x, params))
    max_err = float(jnp.max(jnp.abs(out - ref)))
    if max_err > 2e-3:
        raise AssertionError(f"kernel/reference mismatch: max abs err = {max_err}")

    print("KERNEL_OK")
</pallas_src>

<mosaic_0001>
module attributes {stable_mosaic.version = 11 : i64} {
  func.func @_justup_kernel(%arg0: i32, %arg1: memref<1x64x16xf32, #tpu.memory_space<vmem>>, %arg2: memref<16x32xf32, #tpu.memory_space<vmem>>, %arg3: memref<128x64xf32, #tpu.memory_space<vmem>>, %arg4: memref<2x1024xf32, #tpu.memory_space<vmem>>, %arg5: memref<8x36xf32, #tpu.memory_space<vmem>>, %arg6: memref<8x1xf32, #tpu.memory_space<vmem>>, %arg7: memref<8x1xf32, #tpu.memory_space<vmem>>, %arg8: memref<8x72xf32, #tpu.memory_space<vmem>>, %arg9: memref<8x1xf32, #tpu.memory_space<vmem>>, %arg10: memref<8x1xf32, #tpu.memory_space<vmem>>, %arg11: memref<1x8x1024xf32, #tpu.memory_space<vmem>>, %arg12: memref<4x1024xf32, #tpu.memory_space<vmem>>, %arg13: memref<36x1024xf32, #tpu.memory_space<vmem>>, %arg14: memref<72x1024xf32, #tpu.memory_space<vmem>>) attributes {dimension_semantics = [#tpu.dimension_semantics<parallel>], iteration_bounds = array<i64: 2>, scalar_prefetch = 0 : i64, scratch_operands = 3 : i64, tpu.core_type = #tpu.core_type<tc>, window_params = [{transform_indices = @transform_0, window_bounds = array<i64: 1, 64, 16>}, {pipeline_mode = #tpu.pipeline_mode<synchronous>, transform_indices = @transform_1, window_bounds = array<i64: 16, 32>}, {pipeline_mode = #tpu.pipeline_mode<synchronous>, transform_indices = @transform_2, window_bounds = array<i64: 128, 64>}, {pipeline_mode = #tpu.pipeline_mode<synchronous>, transform_indices = @transform_3, window_bounds = array<i64: 2, 1024>}, {pipeline_mode = #tpu.pipeline_mode<synchronous>, transform_indices = @transform_4, window_bounds = array<i64: 8, 36>}, {pipeline_mode = #tpu.pipeline_mode<synchronous>, transform_indices = @transform_5, window_bounds = array<i64: 8, 1>}, {pipeline_mode = #tpu.pipeline_mode<synchronous>, transform_indices = @transform_6, window_bounds = array<i64: 8, 1>}, {pipeline_mode = #tpu.pipeline_mode<synchronous>, transform_indices = @transform_7, window_bounds = array<i64: 8, 72>}, {pipeline_mode = #tpu.pipeline_mode<synchronous>, transform_indices = @transform_8, window_bounds = array<i64: 8, 1>}, {pipeline_mode = #tpu.pipeline_mode<synchronous>, transform_indices = @transform_9, window_bounds = array<i64: 8, 1>}, {transform_indices = @transform_10, window_bounds = array<i64: 1, 8, 1024>}]} {
    %c0 = arith.constant 0 : index
    %c0_0 = arith.constant 0 : index
    %c0_1 = arith.constant 0 : index
    %0 = vector.load %arg1[%c0, %c0_0, %c0_1] : memref<1x64x16xf32, #tpu.memory_space<vmem>>, vector<1x64x16xf32>
    %1 = vector.shape_cast %0 : vector<1x64x16xf32> to vector<64x16xf32>
    %c0_2 = arith.constant 0 : index
    %c0_3 = arith.constant 0 : index
    %2 = vector.load %arg2[%c0_2, %c0_3] : memref<16x32xf32, #tpu.memory_space<vmem>>, vector<16x32xf32>
    %cst = arith.constant dense<0.000000e+00> : vector<64x32xf32>
    %3 = tpu.matmul %1, %2, %cst {dimension_numbers = #tpu.dot_dimension_numbers<[1], [0], [0], [1], [0, 0, 1, 1], [], []>} : vector<64x16xf32>, vector<16x32xf32>, vector<64x32xf32> -> vector<64x32xf32>
    %c0_4 = arith.constant 0 : index
    %c0_5 = arith.constant 0 : index
    %4 = vector.load %arg3[%c0_4, %c0_5] : memref<128x64xf32, #tpu.memory_space<vmem>>, vector<128x64xf32>
    %cst_6 = arith.constant dense<0.000000e+00> : vector<128x32xf32>
    %5 = tpu.matmul %4, %3, %cst_6 {dimension_numbers = #tpu.dot_dimension_numbers<[1], [0], [0], [1], [0, 0, 1, 1], [], []>} : vector<128x64xf32>, vector<64x32xf32>, vector<128x32xf32> -> vector<128x32xf32>
    %6 = vector.extract_strided_slice %5 {offsets = [0, 0], sizes = [4, 32], strides = [1, 1]} : vector<128x32xf32> to vector<4x32xf32>
    %c0_7 = arith.constant 0 : index
    %c0_8 = arith.constant 0 : index
    %7 = vector.load %arg12[%c0_7, %c0_8] : memref<4x1024xf32, #tpu.memory_space<vmem>>, vector<4x32xf32>
    tpu.vector_store %arg12[%c0_7, %c0_8], %6 {strides = array<i32>} : memref<4x1024xf32, #tpu.memory_space<vmem>>, vector<4x32xf32>,
    %8 = vector.extract_strided_slice %5 {offsets = [4, 0], sizes = [4, 32], strides = [1, 1]} : vector<128x32xf32> to vector<4x32xf32>
    %c0_9 = arith.constant 0 : index
    %c32 = arith.constant 32 : index
    %9 = vector.load %arg12[%c0_9, %c32] : memref<4x1024xf32, #tpu.memory_space<vmem>>, vector<4x32xf32>
    tpu.vector_store %arg12[%c0_9, %c32], %8 {strides = array<i32>} : memref<4x1024xf32, #tpu.memory_space<vmem>>, vector<4x32xf32>,
    %10 = vector.extract_strided_slice %5 {offsets = [8, 0], sizes = [4, 32], strides = [1, 1]} : vector<128x32xf32> to vector<4x32xf32>
    %c0_10 = arith.constant 0 : index
    %c64 = arith.constant 64 : index
    %11 = vector.load %arg12[%c0_10, %c64] : memref<4x1024xf32, #tpu.memory_space<vmem>>, vector<4x32xf32>
    tpu.vector_store %arg12[%c0_10, %c64], %10 {strides = array<i32>} : memref<4x1024xf32, #tpu.memory_space<vmem>>, vector<4x32xf32>,
    %12 = vector.extract_strided_slice %5 {offsets = [12, 0], sizes = [4, 32], strides = [1, 1]} : vector<128x32xf32> to vector<4x32xf32>
    %c0_11 = arith.constant 0 : index
    %c96 = arith.constant 96 : index
    %13 = vector.load %arg12[%c0_11, %c96] : memref<4x1024xf32, #tpu.memory_space<vmem>>, vector<4x32xf32>
    tpu.vector_store %arg12[%c0_11, %c96], %12 {strides = array<i32>} : memref<4x1024xf32, #tpu.memory_space<vmem>>, vector<4x32xf32>,
    %14 = vector.extract_strided_slice %5 {offsets = [16, 0], sizes = [4, 32], strides = [1, 1]} : vector<128x32xf32> to vector<4x32xf32>
    %c0_12 = arith.constant 0 : index
    %c128 = arith.constant 128 : index
    %15 = vector.load %arg12[%c0_12, %c128] : memref<4x1024xf32, #tpu.memory_space<vmem>>, vector<4x32xf32>
    tpu.vector_store %arg12[%c0_12, %c128], %14 {strides = array<i32>} : memref<4x1024xf32, #tpu.memory_space<vmem>>, vector<4x32xf32>,
    %16 = vector.extract_strided_slice %5 {offsets = [20, 0], sizes = [4, 32], strides = [1, 1]} : vector<128x32xf32> to vector<4x32xf32>
    %c0_13 = arith.constant 0 : index
    %c160 = arith.constant 160 : index
    %17 = vector.load %arg12[%c0_13, %c160] : memref<4x1024xf32, #tpu.memory_space<vmem>>, vector<4x32xf32>
    tpu.vector_store %arg12[%c0_13, %c160], %16 {strides = array<i32>} : memref<4x1024xf32, #tpu.memory_space<vmem>>, vector<4x32xf32>,
    %18 = vector.extract_strided_slice %5 {offsets = [24, 0], sizes = [4, 32], strides = [1, 1]} : vector<128x32xf32> to vector<4x32xf32>
    %c0_14 = arith.constant 0 : index
    %c192 = arith.constant 192 : index
    %19 = vector.load %arg12[%c0_14, %c192] : memref<4x1024xf32, #tpu.memory_space<vmem>>, vector<4x32xf32>
    tpu.vector_store %arg12[%c0_14, %c192], %18 {strides = array<i32>} : memref<4x1024xf32, #tpu.memory_space<vmem>>, vector<4x32xf32>,
    %20 = vector.extract_strided_slice %5 {offsets = [28, 0], sizes = [4, 32], strides = [1, 1]} : vector<128x32xf32> to vector<4x32xf32>
    %c0_15 = arith.constant 0 : index
    %c224 = arith.constant 224 : index
    %21 = vector.load %arg12[%c0_15, %c224] : memref<4x1024xf32, #tpu.memory_space<vmem>>, vector<4x32xf32>
    tpu.vector_store %arg12[%c0_15, %c224], %20 {strides = array<i32>} : memref<4x1024xf32, #tpu.memory_space<vmem>>, vector<4x32xf32>,
    %22 = vector.extract_strided_slice %5 {offsets = [32, 0], sizes = [4, 32], strides = [1, 1]} : vector<128x32xf32> to vector<4x32xf32>
    %c0_16 = arith.constant 0 : index
    %c256 = arith.constant 256 : index
    %23 = vector.load %arg12[%c0_16, %c256] : memref<4x1024xf32, #tpu.memory_space<vmem>>, vector<4x32xf32>
    tpu.vector_store %arg12[%c0_16, %c256], %22 {strides = array<i32>} : memref<4x1024xf32, #tpu.memory_space<vmem>>, vector<4x32xf32>,
    %24 = vector.extract_strided_slice %5 {offsets = [36, 0], sizes = [4, 32], strides = [1, 1]} : vector<128x32xf32> to vector<4x32xf32>
    %c0_17 = arith.constant 0 : index
    %c288 = arith.constant 288 : index
    %25 = vector.load %arg12[%c0_17, %c288] : memref<4x1024xf32, #tpu.memory_space<vmem>>, vector<4x32xf32>
    tpu.vector_store %arg12[%c0_17, %c288], %24 {strides = array<i32>} : memref<4x1024xf32, #tpu.memory_space<vmem>>, vector<4x32xf32>,
    %26 = vector.extract_strided_slice %5 {offsets = [40, 0], sizes = [4, 32], strides = [1, 1]} : vector<128x32xf32> to vector<4x32xf32>
    %c0_18 = arith.constant 0 : index
    %c320 = arith.constant 320 : index
    %27 = vector.load %arg12[%c0_18, %c320] : memref<4x1024xf32, #tpu.memory_space<vmem>>, vector<4x32xf32>
    tpu.vector_store %arg12[%c0_18, %c320], %26 {strides = array<i32>} : memref<4x1024xf32, #tpu.memory_space<vmem>>, vector<4x32xf32>,
    %28 = vector.extract_strided_slice %5 {offsets = [44, 0], sizes = [4, 32], strides = [1, 1]} : vector<128x32xf32> to vector<4x32xf32>
    %c0_19 = arith.constant 0 : index
    %c352 = arith.constant 352 : index
    %29 = vector.load %arg12[%c0_19, %c352] : memref<4x1024xf32, #tpu.memory_space<vmem>>, vector<4x32xf32>
    tpu.vector_store %arg12[%c0_19, %c352], %28 {strides = array<i32>} : memref<4x1024xf32, #tpu.memory_space<vmem>>, vector<4x32xf32>,
    %30 = vector.extract_strided_slice %5 {offsets = [48, 0], sizes = [4, 32], strides = [1, 1]} : vector<128x32xf32> to vector<4x32xf32>
    %c0_20 = arith.constant 0 : index
    %c384 = arith.constant 384 : index
    %31 = vector.load %arg12[%c0_20, %c384] : memref<4x1024xf32, #tpu.memory_space<vmem>>, vector<4x32xf32>
    tpu.vector_store %arg12[%c0_20, %c384], %30 {strides = array<i32>} : memref<4x1024xf32, #tpu.memory_space<vmem>>, vector<4x32xf32>,
    %32 = vector.extract_strided_slice %5 {offsets = [52, 0], sizes = [4, 32], strides = [1, 1]} : vector<128x32xf32> to vector<4x32xf32>
    %c0_21 = arith.constant 0 : index
    %c416 = arith.constant 416 : index
    %33 = vector.load %arg12[%c0_21, %c416] : memref<4x1024xf32, #tpu.memory_space<vmem>>, vector<4x32xf32>
    tpu.vector_store %arg12[%c0_21, %c416], %32 {strides = array<i32>} : memref<4x1024xf32, #tpu.memory_space<vmem>>, vector<4x32xf32>,
    %34 = vector.extract_strided_slice %5 {offsets = [56, 0], sizes = [4, 32], strides = [1, 1]} : vector<128x32xf32> to vector<4x32xf32>
    %c0_22 = arith.constant 0 : index
    %c448 = arith.constant 448 : index
    %35 = vector.load %arg12[%c0_22, %c448] : memref<4x1024xf32, #tpu.memory_space<vmem>>, vector<4x32xf32>
    tpu.vector_store %arg12[%c0_22, %c448], %34 {strides = array<i32>} : memref<4x1024xf32, #tpu.memory_space<vmem>>, vector<4x32xf32>,
    %36 = vector.extract_strided_slice %5 {offsets = [60, 0], sizes = [4, 32], strides = [1, 1]} : vector<128x32xf32> to vector<4x32xf32>
    %c0_23 = arith.constant 0 : index
    %c480 = arith.constant 480 : index
    %37 = vector.load %arg12[%c0_23, %c480] : memref<4x1024xf32, #tpu.memory_space<vmem>>, vector<4x32xf32>
    tpu.vector_store %arg12[%c0_23, %c480], %36 {strides = array<i32>} : memref<4x1024xf32, #tpu.memory_space<vmem>>, vector<4x32xf32>,
    %38 = vector.extract_strided_slice %5 {offsets = [64, 0], sizes = [4, 32], strides = [1, 1]} : vector<128x32xf32> to vector<4x32xf32>
    %c0_24 = arith.constant 0 : index
    %c512 = arith.constant 512 : index
    %39 = vector.load %arg12[%c0_24, %c512] : memref<4x1024xf32, #tpu.memory_space<vmem>>, vector<4x32xf32>
    tpu.vector_store %arg12[%c0_24, %c512], %38 {strides = array<i32>} : memref<4x1024xf32, #tpu.memory_space<vmem>>, vector<4x32xf32>,
    %40 = vector.extract_strided_slice %5 {offsets = [68, 0], sizes = [4, 32], strides = [1, 1]} : vector<128x32xf32> to vector<4x32xf32>
    %c0_25 = arith.constant 0 : index
    %c544 = arith.constant 544 : index
    %41 = vector.load %arg12[%c0_25, %c544] : memref<4x1024xf32, #tpu.memory_space<vmem>>, vector<4x32xf32>
    tpu.vector_store %arg12[%c0_25, %c544], %40 {strides = array<i32>} : memref<4x1024xf32, #tpu.memory_space<vmem>>, vector<4x32xf32>,
    %42 = vector.extract_strided_slice %5 {offsets = [72, 0], sizes = [4, 32], strides = [1, 1]} : vector<128x32xf32> to vector<4x32xf32>
    %c0_26 = arith.constant 0 : index
    %c576 = arith.constant 576 : index
    %43 = vector.load %arg12[%c0_26, %c576] : memref<4x1024xf32, #tpu.memory_space<vmem>>, vector<4x32xf32>
    tpu.vector_store %arg12[%c0_26, %c576], %42 {strides = array<i32>} : memref<4x1024xf32, #tpu.memory_space<vmem>>, vector<4x32xf32>,
    %44 = vector.extract_strided_slice %5 {offsets = [76, 0], sizes = [4, 32], strides = [1, 1]} : vector<128x32xf32> to vector<4x32xf32>
    %c0_27 = arith.constant 0 : index
    %c608 = arith.constant 608 : index
    %45 = vector.load %arg12[%c0_27, %c608] : memref<4x1024xf32, #tpu.memory_space<vmem>>, vector<4x32xf32>
    tpu.vector_store %arg12[%c0_27, %c608], %44 {strides = array<i32>} : memref<4x1024xf32, #tpu.memory_space<vmem>>, vector<4x32xf32>,
    %46 = vector.extract_strided_slice %5 {offsets = [80, 0], sizes = [4, 32], strides = [1, 1]} : vector<128x32xf32> to vector<4x32xf32>
    %c0_28 = arith.constant 0 : index
    %c640 = arith.constant 640 : index
    %47 = vector.load %arg12[%c0_28, %c640] : memref<4x1024xf32, #tpu.memory_space<vmem>>, vector<4x32xf32>
    tpu.vector_store %arg12[%c0_28, %c640], %46 {strides = array<i32>} : memref<4x1024xf32, #tpu.memory_space<vmem>>, vector<4x32xf32>,
    %48 = vector.extract_strided_slice %5 {offsets = [84, 0], sizes = [4, 32], strides = [1, 1]} : vector<128x32xf32> to vector<4x32xf32>
    %c0_29 = arith.constant 0 : index
    %c672 = arith.constant 672 : index
    %49 = vector.load %arg12[%c0_29, %c672] : memref<4x1024xf32, #tpu.memory_space<vmem>>, vector<4x32xf32>
    tpu.vector_store %arg12[%c0_29, %c672], %48 {strides = array<i32>} : memref<4x1024xf32, #tpu.memory_space<vmem>>, vector<4x32xf32>,
    %50 = vector.extract_strided_slice %5 {offsets = [88, 0], sizes = [4, 32], strides = [1, 1]} : vector<128x32xf32> to vector<4x32xf32>
    %c0_30 = arith.constant 0 : index
    %c704 = arith.constant 704 : index
    %51 = vector.load %arg12[%c0_30, %c704] : memref<4x1024xf32, #tpu.memory_space<vmem>>, vector<4x32xf32>
    tpu.vector_store %arg12[%c0_30, %c704], %50 {strides = array<i32>} : memref<4x1024xf32, #tpu.memory_space<vmem>>, vector<4x32xf32>,
    %52 = vector.extract_strided_slice %5 {offsets = [92, 0], sizes = [4, 32], strides = [1, 1]} : vector<128x32xf32> to vector<4x32xf32>
    %c0_31 = arith.constant 0 : index
    %c736 = arith.constant 736 : index
    %53 = vector.load %arg12[%c0_31, %c736] : memref<4x1024xf32, #tpu.memory_space<vmem>>, vector<4x32xf32>
    tpu.vector_store %arg12[%c0_31, %c736], %52 {strides = array<i32>} : memref<4x1024xf32, #tpu.memory_space<vmem>>, vector<4x32xf32>,
    %54 = vector.extract_strided_slice %5 {offsets = [96, 0], sizes = [4, 32], strides = [1, 1]} : vector<128x32xf32> to vector<4x32xf32>
    %c0_32 = arith.constant 0 : index
    %c768 = arith.constant 768 : index
    %55 = vector.load %arg12[%c0_32, %c768] : memref<4x1024xf32, #tpu.memory_space<vmem>>, vector<4x32xf32>
    tpu.vector_store %arg12[%c0_32, %c768], %54 {strides = array<i32>} : memref<4x1024xf32, #tpu.memory_space<vmem>>, vector<4x32xf32>,
    %56 = vector.extract_strided_slice %5 {offsets = [100, 0], sizes = [4, 32], strides = [1, 1]} : vector<128x32xf32> to vector<4x32xf32>
    %c0_33 = arith.constant 0 : index
    %c800 = arith.constant 800 : index
    %57 = vector.load %arg12[%c0_33, %c800] : memref<4x1024xf32, #tpu.memory_space<vmem>>, vector<4x32xf32>
    tpu.vector_store %arg12[%c0_33, %c800], %56 {strides = array<i32>} : memref<4x1024xf32, #tpu.memory_space<vmem>>, vector<4x32xf32>,
    %58 = vector.extract_strided_slice %5 {offsets = [104, 0], sizes = [4, 32], strides = [1, 1]} : vector<128x32xf32> to vector<4x32xf32>
    %c0_34 = arith.constant 0 : index
    %c832 = arith.constant 832 : index
    %59 = vector.load %arg12[%c0_34, %c832] : memref<4x1024xf32, #tpu.memory_space<vmem>>, vector<4x32xf32>
    tpu.vector_store %arg12[%c0_34, %c832], %58 {strides = array<i32>} : memref<4x1024xf32, #tpu.memory_space<vmem>>, vector<4x32xf32>,
    %60 = vector.extract_strided_slice %5 {offsets = [108, 0], sizes = [4, 32], strides = [1, 1]} : vector<128x32xf32> to vector<4x32xf32>
    %c0_35 = arith.constant 0 : index
    %c864 = arith.constant 864 : index
    %61 = vector.load %arg12[%c0_35, %c864] : memref<4x1024xf32, #tpu.memory_space<vmem>>, vector<4x32xf32>
    tpu.vector_store %arg12[%c0_35, %c864], %60 {strides = array<i32>} : memref<4x1024xf32, #tpu.memory_space<vmem>>, vector<4x32xf32>,
    %62 = vector.extract_strided_slice %5 {offsets = [112, 0], sizes = [4, 32], strides = [1, 1]} : vector<128x32xf32> to vector<4x32xf32>
    %c0_36 = arith.constant 0 : index
    %c896 = arith.constant 896 : index
    %63 = vector.load %arg12[%c0_36, %c896] : memref<4x1024xf32, #tpu.memory_space<vmem>>, vector<4x32xf32>
    tpu.vector_store %arg12[%c0_36, %c896], %62 {strides = array<i32>} : memref<4x1024xf32, #tpu.memory_space<vmem>>, vector<4x32xf32>,
    %64 = vector.extract_strided_slice %5 {offsets = [116, 0], sizes = [4, 32], strides = [1, 1]} : vector<128x32xf32> to vector<4x32xf32>
    %c0_37 = arith.constant 0 : index
    %c928 = arith.constant 928 : index
    %65 = vector.load %arg12[%c0_37, %c928] : memref<4x1024xf32, #tpu.memory_space<vmem>>, vector<4x32xf32>
    tpu.vector_store %arg12[%c0_37, %c928], %64 {strides = array<i32>} : memref<4x1024xf32, #tpu.memory_space<vmem>>, vector<4x32xf32>,
    %66 = vector.extract_strided_slice %5 {offsets = [120, 0], sizes = [4, 32], strides = [1, 1]} : vector<128x32xf32> to vector<4x32xf32>
    %c0_38 = arith.constant 0 : index
    %c960 = arith.constant 960 : index
    %67 = vector.load %arg12[%c0_38, %c960] : memref<4x1024xf32, #tpu.memory_space<vmem>>, vector<4x32xf32>
    tpu.vector_store %arg12[%c0_38, %c960], %66 {strides = array<i32>} : memref<4x1024xf32, #tpu.memory_space<vmem>>, vector<4x32xf32>,
    %68 = vector.extract_strided_slice %5 {offsets = [124, 0], sizes = [4, 32], strides = [1, 1]} : vector<128x32xf32> to vector<4x32xf32>
    %c0_39 = arith.constant 0 : index
    %c992 = arith.constant 992 : index
    %69 = vector.load %arg12[%c0_39, %c992] : memref<4x1024xf32, #tpu.memory_space<vmem>>, vector<4x32xf32>
    tpu.vector_store %arg12[%c0_39, %c992], %68 {strides = array<i32>} : memref<4x1024xf32, #tpu.memory_space<vmem>>, vector<4x32xf32>,
    %c0_40 = arith.constant 0 : index
    %c0_41 = arith.constant 0 : index
    %70 = vector.load %arg12[%c0_40, %c0_41] : memref<4x1024xf32, #tpu.memory_space<vmem>>, vector<4x1024xf32>
    %c0_42 = arith.constant 0 : index
    %c0_43 = arith.constant 0 : index
    %71 = vector.load %arg4[%c0_42, %c0_43] : memref<2x1024xf32, #tpu.memory_space<vmem>>, vector<1x1024xf32>
    %c1 = arith.constant 1 : index
    %c0_44 = arith.constant 0 : index
    %72 = vector.load %arg4[%c1, %c0_44] : memref<2x1024xf32, #tpu.memory_space<vmem>>, vector<1x1024xf32>
    %cst_45 = arith.constant 0.000000e+00 : f32
    %73 = vector.broadcast %cst_45 : f32 to vector<36x1024xf32>
    %c0_46 = arith.constant 0 : index
    %c0_47 = arith.constant 0 : index
    %74 = vector.load %arg13[%c0_46, %c0_47] : memref<36x1024xf32, #tpu.memory_space<vmem>>, vector<36x1024xf32>
    tpu.vector_store %arg13[%c0_46, %c0_47], %73 {strides = array<i32>} : memref<36x1024xf32, #tpu.memory_space<vmem>>, vector<36x1024xf32>,
    %75 = vector.broadcast %71 : vector<1x1024xf32> to vector<4x1024xf32>
    %76 = arith.mulf %70, %75 : vector<4x1024xf32>
    %77 = vector.broadcast %72 : vector<1x1024xf32> to vector<4x1024xf32>
    %78 = arith.mulf %70, %77 : vector<4x1024xf32>
    %79 = vector.extract_strided_slice %78 {offsets = [0, 0], sizes = [4, 991], strides = [1, 1]} : vector<4x1024xf32> to vector<4x991xf32>
    %c0_48 = arith.constant 0 : index
    %c33 = arith.constant 33 : index
    %80 = vector.load %arg13[%c0_48, %c33] : memref<36x1024xf32, #tpu.memory_space<vmem>>, vector<4x991xf32>
    tpu.vector_store %arg13[%c0_48, %c33], %79 {strides = array<i32>} : memref<36x1024xf32, #tpu.memory_space<vmem>>, vector<4x991xf32>,
    %81 = vector.extract_strided_slice %78 {offsets = [0, 0], sizes = [4, 1023], strides = [1, 1]} : vector<4x1024xf32> to vector<4x1023xf32>
    %c4 = arith.constant 4 : index
    %c1_49 = arith.constant 1 : index
    %82 = vector.load %arg13[%c4, %c1_49] : memref<36x1024xf32, #tpu.memory_space<vmem>>, vector<4x1023xf32>
    tpu.vector_store %arg13[%c4, %c1_49], %81 {strides = array<i32>} : memref<36x1024xf32, #tpu.memory_space<vmem>>, vector<4x1023xf32>,
    %83 = vector.extract_strided_slice %78 {offsets = [0, 31], sizes = [4, 993], strides = [1, 1]} : vector<4x1024xf32> to vector<4x993xf32>
    %c8 = arith.constant 8 : index
    %c0_50 = arith.constant 0 : index
    %84 = vector.load %arg13[%c8, %c0_50] : memref<36x1024xf32, #tpu.memory_space<vmem>>, vector<4x993xf32>
    tpu.vector_store %arg13[%c8, %c0_50], %83 {strides = array<i32>} : memref<36x1024xf32, #tpu.memory_space<vmem>>, vector<4x993xf32>,
    %85 = vector.extract_strided_slice %70 {offsets = [0, 0], sizes = [4, 992], strides = [1, 1]} : vector<4x1024xf32> to vector<4x992xf32>
    %c12 = arith.constant 12 : index
    %c32_51 = arith.constant 32 : index
    %86 = vector.load %arg13[%c12, %c32_51] : memref<36x1024xf32, #tpu.memory_space<vmem>>, vector<4x992xf32>
    tpu.vector_store %arg13[%c12, %c32_51], %85 {strides = array<i32>} : memref<36x1024xf32, #tpu.memory_space<vmem>>, vector<4x992xf32>,
    %c16 = arith.constant 16 : index
    %c0_52 = arith.constant 0 : index
    %87 = vector.load %arg13[%c16, %c0_52] : memref<36x1024xf32, #tpu.memory_space<vmem>>, vector<4x1024xf32>
    tpu.vector_store %arg13[%c16, %c0_52], %70 {strides = array<i32>} : memref<36x1024xf32, #tpu.memory_space<vmem>>, vector<4x1024xf32>,
    %88 = vector.extract_strided_slice %70 {offsets = [0, 32], sizes = [4, 992], strides = [1, 1]} : vector<4x1024xf32> to vector<4x992xf32>
    %c20 = arith.constant 20 : index
    %c0_53 = arith.constant 0 : index
    %89 = vector.load %arg13[%c20, %c0_53] : memref<36x1024xf32, #tpu.memory_space<vmem>>, vector<4x992xf32>
    tpu.vector_store %arg13[%c20, %c0_53], %88 {strides = array<i32>} : memref<36x1024xf32, #tpu.memory_space<vmem>>, vector<4x992xf32>,
    %90 = vector.extract_strided_slice %76 {offsets = [0, 0], sizes = [4, 993], strides = [1, 1]} : vector<4x1024xf32> to vector<4x993xf32>
    %c24 = arith.constant 24 : index
    %c31 = arith.constant 31 : index
    %91 = vector.load %arg13[%c24, %c31] : memref<36x1024xf32, #tpu.memory_space<vmem>>, vector<4x993xf32>
    tpu.vector_store %arg13[%c24, %c31], %90 {strides = array<i32>} : memref<36x1024xf32, #tpu.memory_space<vmem>>, vector<4x993xf32>,
    %92 = vector.extract_strided_slice %76 {offsets = [0, 1], sizes = [4, 1023], strides = [1, 1]} : vector<4x1024xf32> to vector<4x1023xf32>
    %c28 = arith.constant 28 : index
    %c0_54 = arith.constant 0 : index
    %93 = vector.load %arg13[%c28, %c0_54] : memref<36x1024xf32, #tpu.memory_space<vmem>>, vector<4x1023xf32>
    tpu.vector_store %arg13[%c28, %c0_54], %92 {strides = array<i32>} : memref<36x1024xf32, #tpu.memory_space<vmem>>, vector<4x1023xf32>,
    %94 = vector.extract_strided_slice %76 {offsets = [0, 33], sizes = [4, 991], strides = [1, 1]} : vector<4x1024xf32> to vector<4x991xf32>
    %c32_55 = arith.constant 32 : index
    %c0_56 = arith.constant 0 : index
    %95 = vector.load %arg13[%c32_55, %c0_56] : memref<36x1024xf32, #tpu.memory_space<vmem>>, vector<4x991xf32>
    tpu.vector_store %arg13[%c32_55, %c0_56], %94 {strides = array<i32>} : memref<36x1024xf32, #tpu.memory_space<vmem>>, vector<4x991xf32>,
    %c0_57 = arith.constant 0 : index
    %c0_58 = arith.constant 0 : index
    %96 = vector.load %arg5[%c0_57, %c0_58] : memref<8x36xf32, #tpu.memory_space<vmem>>, vector<8x36xf32>
    %c0_59 = arith.constant 0 : index
    %c0_60 = arith.constant 0 : index
    %97 = vector.load %arg13[%c0_59, %c0_60] : memref<36x1024xf32, #tpu.memory_space<vmem>>, vector<36x1024xf32>
    %cst_61 = arith.constant dense<0.000000e+00> : vector<8x1024xf32>
    %98 = tpu.matmul %96, %97, %cst_61 {dimension_numbers = #tpu.dot_dimension_numbers<[1], [0], [0], [1], [0, 0, 1, 1], [], []>} : vector<8x36xf32>, vector<36x1024xf32>, vector<8x1024xf32> -> vector<8x1024xf32>
    %c0_62 = arith.constant 0 : index
    %c0_63 = arith.constant 0 : index
    %99 = vector.load %arg6[%c0_62, %c0_63] : memref<8x1xf32, #tpu.memory_space<vmem>>, vector<8x1xf32>
    %100 = vector.broadcast %99 : vector<8x1xf32> to vector<8x1024xf32>
    %101 = arith.mulf %98, %100 : vector<8x1024xf32>
    %c0_64 = arith.constant 0 : index
    %c0_65 = arith.constant 0 : index
    %102 = vector.load %arg7[%c0_64, %c0_65] : memref<8x1xf32, #tpu.memory_space<vmem>>, vector<8x1xf32>
    %103 = vector.broadcast %102 : vector<8x1xf32> to vector<8x1024xf32>
    %104 = arith.addf %101, %103 : vector<8x1024xf32>
    %cst_66 = arith.constant 0.000000e+00 : f32
    %105 = vector.broadcast %cst_66 : f32 to vector<8x1024xf32>
    %106 = arith.maximumf %104, %105 : vector<8x1024xf32>
    %cst_67 = arith.constant 0.000000e+00 : f32
    %107 = vector.broadcast %cst_67 : f32 to vector<72x1024xf32>
    %c0_68 = arith.constant 0 : index
    %c0_69 = arith.constant 0 : index
    %108 = vector.load %arg14[%c0_68, %c0_69] : memref<72x1024xf32, #tpu.memory_space<vmem>>, vector<72x1024xf32>
    tpu.vector_store %arg14[%c0_68, %c0_69], %107 {strides = array<i32>} : memref<72x1024xf32, #tpu.memory_space<vmem>>, vector<72x1024xf32>,
    %109 = vector.broadcast %71 : vector<1x1024xf32> to vector<8x1024xf32>
    %110 = arith.mulf %106, %109 : vector<8x1024xf32>
    %111 = vector.broadcast %72 : vector<1x1024xf32> to vector<8x1024xf32>
    %112 = arith.mulf %106, %111 : vector<8x1024xf32>
    %113 = vector.extract_strided_slice %112 {offsets = [0, 0], sizes = [8, 991], strides = [1, 1]} : vector<8x1024xf32> to vector<8x991xf32>
    %c0_70 = arith.constant 0 : index
    %c33_71 = arith.constant 33 : index
    %114 = vector.load %arg14[%c0_70, %c33_71] : memref<72x1024xf32, #tpu.memory_space<vmem>>, vector<8x991xf32>
    tpu.vector_store %arg14[%c0_70, %c33_71], %113 {strides = array<i32>} : memref<72x1024xf32, #tpu.memory_space<vmem>>, vector<8x991xf32>,
    %115 = vector.extract_strided_slice %112 {offsets = [0, 0], sizes = [8, 1023], strides = [1, 1]} : vector<8x1024xf32> to vector<8x1023xf32>
    %c8_72 = arith.constant 8 : index
    %c1_73 = arith.constant 1 : index
    %116 = vector.load %arg14[%c8_72, %c1_73] : memref<72x1024xf32, #tpu.memory_space<vmem>>, vector<8x1023xf32>
    tpu.vector_store %arg14[%c8_72, %c1_73], %115 {strides = array<i32>} : memref<72x1024xf32, #tpu.memory_space<vmem>>, vector<8x1023xf32>,
    %117 = vector.extract_strided_slice %112 {offsets = [0, 31], sizes = [8, 993], strides = [1, 1]} : vector<8x1024xf32> to vector<8x993xf32>
    %c16_74 = arith.constant 16 : index
    %c0_75 = arith.constant 0 : index
    %118 = vector.load %arg14[%c16_74, %c0_75] : memref<72x1024xf32, #tpu.memory_space<vmem>>, vector<8x993xf32>
    tpu.vector_store %arg14[%c16_74, %c0_75], %117 {strides = array<i32>} : memref<72x1024xf32, #tpu.memory_space<vmem>>, vector<8x993xf32>,
    %119 = vector.extract_strided_slice %106 {offsets = [0, 0], sizes = [8, 992], strides = [1, 1]} : vector<8x1024xf32> to vector<8x992xf32>
    %c24_76 = arith.constant 24 : index
    %c32_77 = arith.constant 32 : index
    %120 = vector.load %arg14[%c24_76, %c32_77] : memref<72x1024xf32, #tpu.memory_space<vmem>>, vector<8x992xf32>
    tpu.vector_store %arg14[%c24_76, %c32_77], %119 {strides = array<i32>} : memref<72x1024xf32, #tpu.memory_space<vmem>>, vector<8x992xf32>,
    %c32_78 = arith.constant 32 : index
    %c0_79 = arith.constant 0 : index
    %121 = vector.load %arg14[%c32_78, %c0_79] : memref<72x1024xf32, #tpu.memory_space<vmem>>, vector<8x1024xf32>
    tpu.vector_store %arg14[%c32_78, %c0_79], %106 {strides = array<i32>} : memref<72x1024xf32, #tpu.memory_space<vmem>>, vector<8x1024xf32>,
    %122 = vector.extract_strided_slice %106 {offsets = [0, 32], sizes = [8, 992], strides = [1, 1]} : vector<8x1024xf32> to vector<8x992xf32>
    %c40 = arith.constant 40 : index
    %c0_80 = arith.constant 0 : index
    %123 = vector.load %arg14[%c40, %c0_80] : memref<72x1024xf32, #tpu.memory_space<vmem>>, vector<8x992xf32>
    tpu.vector_store %arg14[%c40, %c0_80], %122 {strides = array<i32>} : memref<72x1024xf32, #tpu.memory_space<vmem>>, vector<8x992xf32>,
    %124 = vector.extract_strided_slice %110 {offsets = [0, 0], sizes = [8, 993], strides = [1, 1]} : vector<8x1024xf32> to vector<8x993xf32>
    %c48 = arith.constant 48 : index
    %c31_81 = arith.constant 31 : index
    %125 = vector.load %arg14[%c48, %c31_81] : memref<72x1024xf32, #tpu.memory_space<vmem>>, vector<8x993xf32>
    tpu.vector_store %arg14[%c48, %c31_81], %124 {strides = array<i32>} : memref<72x1024xf32, #tpu.memory_space<vmem>>, vector<8x993xf32>,
    %126 = vector.extract_strided_slice %110 {offsets = [0, 1], sizes = [8, 1023], strides = [1, 1]} : vector<8x1024xf32> to vector<8x1023xf32>
    %c56 = arith.constant 56 : index
    %c0_82 = arith.constant 0 : index
    %127 = vector.load %arg14[%c56, %c0_82] : memref<72x1024xf32, #tpu.memory_space<vmem>>, vector<8x1023xf32>
    tpu.vector_store %arg14[%c56, %c0_82], %126 {strides = array<i32>} : memref<72x1024xf32, #tpu.memory_space<vmem>>, vector<8x1023xf32>,
    %128 = vector.extract_strided_slice %110 {offsets = [0, 33], sizes = [8, 991], strides = [1, 1]} : vector<8x1024xf32> to vector<8x991xf32>
    %c64_83 = arith.constant 64 : index
    %c0_84 = arith.constant 0 : index
    %129 = vector.load %arg14[%c64_83, %c0_84] : memref<72x1024xf32, #tpu.memory_space<vmem>>, vector<8x991xf32>
    tpu.vector_store %arg14[%c64_83, %c0_84], %128 {strides = array<i32>} : memref<72x1024xf32, #tpu.memory_space<vmem>>, vector<8x991xf32>,
    %c0_85 = arith.constant 0 : index
    %c0_86 = arith.constant 0 : index
    %130 = vector.load %arg8[%c0_85, %c0_86] : memref<8x72xf32, #tpu.memory_space<vmem>>, vector<8x72xf32>
    %c0_87 = arith.constant 0 : index
    %c0_88 = arith.constant 0 : index
    %131 = vector.load %arg14[%c0_87, %c0_88] : memref<72x1024xf32, #tpu.memory_space<vmem>>, vector<72x1024xf32>
    %cst_89 = arith.constant dense<0.000000e+00> : vector<8x1024xf32>
    %132 = tpu.matmul %130, %131, %cst_89 {dimension_numbers = #tpu.dot_dimension_numbers<[1], [0], [0], [1], [0, 0, 1, 1], [], []>} : vector<8x72xf32>, vector<72x1024xf32>, vector<8x1024xf32> -> vector<8x1024xf32>
    %c0_90 = arith.constant 0 : index
    %c0_91 = arith.constant 0 : index
    %133 = vector.load %arg9[%c0_90, %c0_91] : memref<8x1xf32, #tpu.memory_space<vmem>>, vector<8x1xf32>
    %134 = vector.broadcast %133 : vector<8x1xf32> to vector<8x1024xf32>
    %135 = arith.mulf %132, %134 : vector<8x1024xf32>
    %c0_92 = arith.constant 0 : index
    %c0_93 = arith.constant 0 : index
    %136 = vector.load %arg10[%c0_92, %c0_93] : memref<8x1xf32, #tpu.memory_space<vmem>>, vector<8x1xf32>
    %137 = vector.broadcast %136 : vector<8x1xf32> to vector<8x1024xf32>
    %138 = arith.addf %135, %137 : vector<8x1024xf32>
    %cst_94 = arith.constant 0.000000e+00 : f32
    %139 = vector.broadcast %cst_94 : f32 to vector<8x1024xf32>
    %140 = arith.maximumf %138, %139 : vector<8x1024xf32>
    %c0_95 = arith.constant 0 : index
    %c0_96 = arith.constant 0 : index
    %c0_97 = arith.constant 0 : index
    %141 = vector.load %arg11[%c0_95, %c0_96, %c0_97] : memref<1x8x1024xf32, #tpu.memory_space<vmem>>, vector<1x8x1024xf32>
    %142 = vector.shape_cast %141 : vector<1x8x1024xf32> to vector<8x1024xf32>
    %143 = vector.shape_cast %140 : vector<8x1024xf32> to vector<1x8x1024xf32>
    tpu.vector_store %arg11[%c0_95, %c0_96, %c0_97], %143 {strides = array<i32>} : memref<1x8x1024xf32, #tpu.memory_space<vmem>>, vector<1x8x1024xf32>,
    return
  }
  func.func @transform_0(%arg0: i32) -> (i32, i32, i32) {
    %c0_i32 = arith.constant 0 : i32
    %c0_i32_0 = arith.constant 0 : i32
    %c0_i32_1 = arith.constant 0 : i32
    return %arg0, %c0_i32, %c0_i32_0 : i32, i32, i32
  }
  func.func @transform_1(%arg0: i32) -> (i32, i32) {
    %c0_i32 = arith.constant 0 : i32
    %c0_i32_0 = arith.constant 0 : i32
    %c0_i32_1 = arith.constant 0 : i32
    return %c0_i32, %c0_i32_0 : i32, i32
  }
  func.func @transform_2(%arg0: i32) -> (i32, i32) {
    %c0_i32 = arith.constant 0 : i32
    %c0_i32_0 = arith.constant 0 : i32
    %c0_i32_1 = arith.constant 0 : i32
    return %c0_i32, %c0_i32_0 : i32, i32
  }
  func.func @transform_3(%arg0: i32) -> (i32, i32) {
    %c0_i32 = arith.constant 0 : i32
    %c0_i32_0 = arith.constant 0 : i32
    %c0_i32_1 = arith.constant 0 : i32
    return %c0_i32, %c0_i32_0 : i32, i32
  }
  func.func @transform_4(%arg0: i32) -> (i32, i32) {
    %c0_i32 = arith.constant 0 : i32
    %c0_i32_0 = arith.constant 0 : i32
    %c0_i32_1 = arith.constant 0 : i32
    return %c0_i32, %c0_i32_0 : i32, i32
  }
  func.func @transform_5(%arg0: i32) -> (i32, i32) {
    %c0_i32 = arith.constant 0 : i32
    %c0_i32_0 = arith.constant 0 : i32
    %c0_i32_1 = arith.constant 0 : i32
    return %c0_i32, %c0_i32_0 : i32, i32
  }
  func.func @transform_6(%arg0: i32) -> (i32, i32) {
    %c0_i32 = arith.constant 0 : i32
    %c0_i32_0 = arith.constant 0 : i32
    %c0_i32_1 = arith.constant 0 : i32
    return %c0_i32, %c0_i32_0 : i32, i32
  }
  func.func @transform_7(%arg0: i32) -> (i32, i32) {
    %c0_i32 = arith.constant 0 : i32
    %c0_i32_0 = arith.constant 0 : i32
    %c0_i32_1 = arith.constant 0 : i32
    return %c0_i32, %c0_i32_0 : i32, i32
  }
  func.func @transform_8(%arg0: i32) -> (i32, i32) {
    %c0_i32 = arith.constant 0 : i32
    %c0_i32_0 = arith.constant 0 : i32
    %c0_i32_1 = arith.constant 0 : i32
    return %c0_i32, %c0_i32_0 : i32, i32
  }
  func.func @transform_9(%arg0: i32) -> (i32, i32) {
    %c0_i32 = arith.constant 0 : i32
    %c0_i32_0 = arith.constant 0 : i32
    %c0_i32_1 = arith.constant 0 : i32
    return %c0_i32, %c0_i32_0 : i32, i32
  }
  func.func @transform_10(%arg0: i32) -> (i32, i32, i32) {
    %c0_i32 = arith.constant 0 : i32
    %c0_i32_0 = arith.constant 0 : i32
    %c0_i32_1 = arith.constant 0 : i32
    return %arg0, %c0_i32, %c0_i32_0 : i32, i32, i32
  }
}

</mosaic_0001>

<llo_original>
// kernel: tpu_custom_call.1
$region0: #{tpu_custom_call.1}
  #allocation0 [shape = 'u32[]', space=smem, size = 0x4, offset = 0x4, fixed_abs, tag = 'smem constant byte address 0x4 - core index']
  #allocation1 [shape = 'u32[144,128]{1,0:T(1,128)}', space=vmem, size = 0x12000, scoped, tag = 'internal scratch']
  #allocation2 [shape = 'f32[4,1024]{1,0:T(4,128)}', space=vmem, size = 0x4000, scoped, tag = 'scratch operand']
  #allocation3 [shape = 'f32[36,1024]{1,0:T(8,128)}', space=vmem, size = 0x28000, scoped, tag = 'scratch operand']
  #allocation4 [shape = 'f32[72,1024]{1,0:T(8,128)}', space=vmem, size = 0x48000, scoped, tag = 'scratch operand']
  %s0 = inlined_call_operand.vmem [shape: f32[2,64,16], index: 0, kind: input, shape index: {}]
  %s1 = inlined_call_operand.vmem [shape: f32[16,32], index: 1, kind: input, shape index: {}]
  %s2 = inlined_call_operand.vmem [shape: f32[128,64], index: 2, kind: input, shape index: {}]
  %s3 = inlined_call_operand.vmem [shape: f32[2,1024], index: 3, kind: input, shape index: {}]
  %s4 = inlined_call_operand.vmem [shape: f32[8,36], index: 4, kind: input, shape index: {}]
  %s5 = inlined_call_operand.vmem [shape: f32[8,1], index: 5, kind: input, shape index: {}]
  %s6 = inlined_call_operand.vmem [shape: f32[8,1], index: 6, kind: input, shape index: {}]
  %s7 = inlined_call_operand.vmem [shape: f32[8,72], index: 7, kind: input, shape index: {}]
  %s8 = inlined_call_operand.vmem [shape: f32[8,1], index: 8, kind: input, shape index: {}]
  %s9 = inlined_call_operand.vmem [shape: f32[8,1], index: 9, kind: input, shape index: {}]
  %s10 = inlined_call_operand.hbm [shape: f32[2,8,1024], index: 10, kind: output, shape index: {}]
  %s11 = sld [smem:[#allocation0]]
  $region73: #{tpu_custom_call.1} parent=0
    _
  %s13 = ssub.s32 1, %s11
  %s14 = scalar_select 0, %s13, %s11
  $region1: #{tpu_custom_call.1} parent=0
    #allocation5 [shape = 'u8[65536]{0}', space=vmem, size = 0x10000, scoped, tag = 'output window, operand 0']
    #allocation6 [shape = 's32[2]{0}', space=sflag, size = 0x8, scoped, tag = 'scoped memory for tpu_custom_call.1']
    %15 = vsyncpa [#allocation6], 0
    %s16 = scalar_lea.sflag [#allocation6], 1
    %17 = vsyncpa %s16, 0
    loop: start=0, step=1, limit=4
    $region2: #{tpu_custom_call.1} parent=1 // loop_pre_header
      _
    $region3: #{tpu_custom_call.1} parent=1 // loop_header
      %s19 = sphi 0, %s23
      %p20 = scmp.ge.s32.totalorder %s19, 4
      %s29 = sphi 0, %s31
      %s32 = sphi 0, %s29
      %s33 = sphi 0, %s32
      %s49 = sphi 0, %s33
      %s53 = sphi 0, %s53
      %s55 = sphi 0, %s53
      %s56 = sphi 0, %s55
      %s70 = sphi 0, %s56
      %s74 = sphi 0, %s74
      %s76 = sphi 0, %s74
      %s77 = sphi 0, %s76
      %s91 = sphi 0, %s77
      %s95 = sphi 0, %s95
      %s97 = sphi 0, %s95
      %s98 = sphi 0, %s97
      %s112 = sphi 0, %s98
      %s116 = sphi 0, %s116
      %s118 = sphi 0, %s116
      %s119 = sphi 0, %s118
      %s133 = sphi 0, %s119
      %s137 = sphi 0, %s137
      %s139 = sphi 0, %s137
      %s140 = sphi 0, %s139
      %s154 = sphi 0, %s140
      %s158 = sphi 0, %s158
      %s160 = sphi 0, %s158
      %s161 = sphi 0, %s160
      %s175 = sphi 0, %s161
      %s179 = sphi 0, %s179
      %s181 = sphi 0, %s179
      %s182 = sphi 0, %s181
      %s196 = sphi 0, %s182
      %s200 = sphi 0, %s200
      %s202 = sphi 0, %s200
      %s203 = sphi 0, %s202
      %s217 = sphi 0, %s203
      %s221 = sphi 0, %s221
      %s223 = sphi 0, %s221
      %s224 = sphi 0, %s223
      %s238 = sphi 0, %s224
      %s244 = sphi 0, %s246
      %s247 = sphi 0, %s244
      %s248 = sphi 0, %s247
      %s264 = sphi 0, %s248
    $region4: #{tpu_custom_call.1} parent=1 // loop_header_branch
      %22 = sbr.rel (%p20) target = $region8
    $region5: #{tpu_custom_call.1} parent=1 // loop_body
      %s24 = ssub.s32 %s19, 1
      %s25 = ssub.s32 %s19, 2
      %s26 = sadd.s32 %s19, 1
      %s27 = ssub.s32 %s19, %s26
      %p28 = scmp.eq.s32.totalorder %s27, 0
      %s30 = sadd.s32 %s29, 1
      %s31 = scalar_select %p28, %s29, %s30
      %p34 = pneg %p28
      %p35 = scmp.eq.s32.totalorder %s19, 1
      %p36 = por %p34, %p35
      %p37 = scmp.ne.s32.totalorder %s29, %s32
      %p38 = scmp.eq.s32.totalorder %s19, 0
      %p39 = por %p37, %p38
      %p40 = scmp.ne.s32.totalorder %s29, %s32
      %p41 = scmp.eq.s32.totalorder %s24, 1
      %p42 = por %p40, %p41
      %p43 = scmp.ne.s32.totalorder %s32, %s33
      %p44 = scmp.eq.s32.totalorder %s24, 0
      %p45 = por %p43, %p44
      %p46 = scmp.ne.s32.totalorder %s32, %s33
      %p47 = scmp.eq.s32.totalorder %s25, 1
      %p48 = por %p46, %p47
      %p50 = scmp.ne.s32.totalorder %s33, %s49
      %p51 = scmp.eq.s32.totalorder %s25, 0
      %p52 = por %p50, %p51
      %s54 = sadd.s32 %s53, 1
      %p57 = scmp.eq.s32.totalorder %s19, 1
      %p58 = scmp.ne.s32.totalorder %s53, %s55
      %p59 = scmp.eq.s32.totalorder %s19, 0
      %p60 = por %p58, %p59
      %p61 = scmp.ne.s32.totalorder %s53, %s55
      %p62 = scmp.eq.s32.totalorder %s24, 1
      %p63 = por %p61, %p62
      %p64 = scmp.ne.s32.totalorder %s55, %s56
      %p65 = scmp.eq.s32.totalorder %s24, 0
      %p66 = por %p64, %p65
      %p67 = scmp.ne.s32.totalorder %s55, %s56
      %p68 = scmp.eq.s32.totalorder %s25, 1
      %p69 = por %p67, %p68
      %p71 = scmp.ne.s32.totalorder %s56, %s70
      %p72 = scmp.eq.s32.totalorder %s25, 0
      %p73 = por %p71, %p72
      %s75 = sadd.s32 %s74, 1
      %p78 = scmp.eq.s32.totalorder %s19, 1
      %p79 = scmp.ne.s32.totalorder %s74, %s76
      %p80 = scmp.eq.s32.totalorder %s19, 0
      %p81 = por %p79, %p80
      %p82 = scmp.ne.s32.totalorder %s74, %s76
      %p83 = scmp.eq.s32.totalorder %s24, 1
      %p84 = por %p82, %p83
      %p85 = scmp.ne.s32.totalorder %s76, %s77
      %p86 = scmp.eq.s32.totalorder %s24, 0
      %p87 = por %p85, %p86
      %p88 = scmp.ne.s32.totalorder %s76, %s77
      %p89 = scmp.eq.s32.totalorder %s25, 1
      %p90 = por %p88, %p89
      %p92 = scmp.ne.s32.totalorder %s77, %s91
      %p93 = scmp.eq.s32.totalorder %s25, 0
      %p94 = por %p92, %p93
      %s96 = sadd.s32 %s95, 1
      %p99 = scmp.eq.s32.totalorder %s19, 1
      %p100 = scmp.ne.s32.totalorder %s95, %s97
      %p101 = scmp.eq.s32.totalorder %s19, 0
      %p102 = por %p100, %p101
      %p103 = scmp.ne.s32.totalorder %s95, %s97
      %p104 = scmp.eq.s32.totalorder %s24, 1
      %p105 = por %p103, %p104
      %p106 = scmp.ne.s32.totalorder %s97, %s98
      %p107 = scmp.eq.s32.totalorder %s24, 0
      %p108 = por %p106, %p107
      %p109 = scmp.ne.s32.totalorder %s97, %s98
      %p110 = scmp.eq.s32.totalorder %s25, 1
      %p111 = por %p109, %p110
      %p113 = scmp.ne.s32.totalorder %s98, %s112
      %p114 = scmp.eq.s32.totalorder %s25, 0
      %p115 = por %p113, %p114
      %s117 = sadd.s32 %s116, 1
      %p120 = scmp.eq.s32.totalorder %s19, 1
      %p121 = scmp.ne.s32.totalorder %s116, %s118
      %p122 = scmp.eq.s32.totalorder %s19, 0
      %p123 = por %p121, %p122
      %p124 = scmp.ne.s32.totalorder %s116, %s118
      %p125 = scmp.eq.s32.totalorder %s24, 1
      %p126 = por %p124, %p125
      %p127 = scmp.ne.s32.totalorder %s118, %s119
      %p128 = scmp.eq.s32.totalorder %s24, 0
      %p129 = por %p127, %p128
      %p130 = scmp.ne.s32.totalorder %s118, %s119
      %p131 = scmp.eq.s32.totalorder %s25, 1
      %p132 = por %p130, %p131
      %p134 = scmp.ne.s32.totalorder %s119, %s133
      %p135 = scmp.eq.s32.totalorder %s25, 0
      %p136 = por %p134, %p135
      %s138 = sadd.s32 %s137, 1
      %p141 = scmp.eq.s32.totalorder %s19, 1
      %p142 = scmp.ne.s32.totalorder %s137, %s139
      %p143 = scmp.eq.s32.totalorder %s19, 0
      %p144 = por %p142, %p143
      %p145 = scmp.ne.s32.totalorder %s137, %s139
      %p146 = scmp.eq.s32.totalorder %s24, 1
      %p147 = por %p145, %p146
      %p148 = scmp.ne.s32.totalorder %s139, %s140
      %p149 = scmp.eq.s32.totalorder %s24, 0
      %p150 = por %p148, %p149
      %p151 = scmp.ne.s32.totalorder %s139, %s140
      %p152 = scmp.eq.s32.totalorder %s25, 1
      %p153 = por %p151, %p152
      %p155 = scmp.ne.s32.totalorder %s140, %s154
      %p156 = scmp.eq.s32.totalorder %s25, 0
      %p157 = por %p155, %p156
      %s159 = sadd.s32 %s158, 1
      %p162 = scmp.eq.s32.totalorder %s19, 1
      %p163 = scmp.ne.s32.totalorder %s158, %s160
      %p164 = scmp.eq.s32.totalorder %s19, 0
      %p165 = por %p163, %p164
      %p166 = scmp.ne.s32.totalorder %s158, %s160
      %p167 = scmp.eq.s32.totalorder %s24, 1
      %p168 = por %p166, %p167
      %p169 = scmp.ne.s32.totalorder %s160, %s161
      %p170 = scmp.eq.s32.totalorder %s24, 0
      %p171 = por %p169, %p170
      %p172 = scmp.ne.s32.totalorder %s160, %s161
      %p173 = scmp.eq.s32.totalorder %s25, 1
      %p174 = por %p172, %p173
      %p176 = scmp.ne.s32.totalorder %s161, %s175
      %p177 = scmp.eq.s32.totalorder %s25, 0
      %p178 = por %p176, %p177
      %s180 = sadd.s32 %s179, 1
      %p183 = scmp.eq.s32.totalorder %s19, 1
      %p184 = scmp.ne.s32.totalorder %s179, %s181
      %p185 = scmp.eq.s32.totalorder %s19, 0
      %p186 = por %p184, %p185
      %p187 = scmp.ne.s32.totalorder %s179, %s181
      %p188 = scmp.eq.s32.totalorder %s24, 1
      %p189 = por %p187, %p188
      %p190 = scmp.ne.s32.totalorder %s181, %s182
      %p191 = scmp.eq.s32.totalorder %s24, 0
      %p192 = por %p190, %p191
      %p193 = scmp.ne.s32.totalorder %s181, %s182
      %p194 = scmp.eq.s32.totalorder %s25, 1
      %p195 = por %p193, %p194
      %p197 = scmp.ne.s32.totalorder %s182, %s196
      %p198 = scmp.eq.s32.totalorder %s25, 0
      %p199 = por %p197, %p198
      %s201 = sadd.s32 %s200, 1
      %p204 = scmp.eq.s32.totalorder %s19, 1
      %p205 = scmp.ne.s32.totalorder %s200, %s202
      %p206 = scmp.eq.s32.totalorder %s19, 0
      %p207 = por %p205, %p206
      %p208 = scmp.ne.s32.totalorder %s200, %s202
      %p209 = scmp.eq.s32.totalorder %s24, 1
      %p210 = por %p208, %p209
      %p211 = scmp.ne.s32.totalorder %s202, %s203
      %p212 = scmp.eq.s32.totalorder %s24, 0
      %p213 = por %p211, %p212
      %p214 = scmp.ne.s32.totalorder %s202, %s203
      %p215 = scmp.eq.s32.totalorder %s25, 1
      %p216 = por %p214, %p215
      %p218 = scmp.ne.s32.totalorder %s203, %s217
      %p219 = scmp.eq.s32.totalorder %s25, 0
      %p220 = por %p218, %p219
      %s222 = sadd.s32 %s221, 1
      %p225 = scmp.eq.s32.totalorder %s19, 1
      %p226 = scmp.ne.s32.totalorder %s221, %s223
      %p227 = scmp.eq.s32.totalorder %s19, 0
      %p228 = por %p226, %p227
      %p229 = scmp.ne.s32.totalorder %s221, %s223
      %p230 = scmp.eq.s32.totalorder %s24, 1
      %p231 = por %p229, %p230
      %p232 = scmp.ne.s32.totalorder %s223, %s224
      %p233 = scmp.eq.s32.totalorder %s24, 0
      %p234 = por %p232, %p233
      %p235 = scmp.ne.s32.totalorder %s223, %s224
      %p236 = scmp.eq.s32.totalorder %s25, 1
      %p237 = por %p235, %p236
      %p239 = scmp.ne.s32.totalorder %s224, %s238
      %p240 = scmp.eq.s32.totalorder %s25, 0
      %p241 = por %p239, %p240
      %s242 = ssub.s32 %s19, %s26
      %p243 = scmp.eq.s32.totalorder %s242, 0
      %s245 = sadd.s32 %s244, 1
      %s246 = scalar_select %p243, %s244, %s245
      %p249 = pneg %p243
      %p250 = scmp.eq.s32.totalorder %s19, 1
      %p251 = por %p249, %p250
      %p252 = scmp.ne.s32.totalorder %s244, %s247
      %p253 = scmp.eq.s32.totalorder %s19, 0
      %p254 = por %p252, %p253
      %p255 = scmp.ne.s32.totalorder %s244, %s247
      %p256 = scmp.eq.s32.totalorder %s24, 1
      %p257 = por %p255, %p256
      %p258 = scmp.ne.s32.totalorder %s247, %s248
      %p259 = scmp.eq.s32.totalorder %s24, 0
      %p260 = por %p258, %p259
      %p261 = scmp.ne.s32.totalorder %s247, %s248
      %p262 = scmp.eq.s32.totalorder %s25, 1
      %p263 = por %p261, %p262
      %p265 = scmp.ne.s32.totalorder %s248, %s264
      %p266 = scmp.eq.s32.totalorder %s25, 0
      %p267 = por %p265, %p266
      %p268 = scmp.le.s32.totalorder 1, %s19
      %p269 = scmp.lt.s32.totalorder %s19, 3
      %p270 = pnand %p268, %p269
      %p271 = pneg %p270
      // Predicated region
      $region9: #{tpu_custom_call.1} parent=5 // pred_check
        _
      $region10: #{tpu_custom_call.1} parent=5 // pred_check_branch
        %273 = sbr.rel (%p270) target = $region12
      $region11: #{tpu_custom_call.1} parent=5 // pred_region
        %s274 = ssub.s32 %s19, 1
        // Predicated region
        $region13: #{tpu_custom_call.1} parent=11 // pred_check
          %p275 = pneg %p66
        $region14: #{tpu_custom_call.1} parent=11 // pred_check_branch
          %277 = sbr.rel (%p275) target = $region16
        $region15: #{tpu_custom_call.1} parent=11 // pred_region
          _
        $region16: #{tpu_custom_call.1} parent=11 // pred_fallthru
          _
        // Predicated region
        $region17: #{tpu_custom_call.1} parent=11 // pred_check
          %p278 = pneg %p87
        $region18: #{tpu_custom_call.1} parent=11 // pred_check_branch
          %280 = sbr.rel (%p278) target = $region20
        $region19: #{tpu_custom_call.1} parent=11 // pred_region
          _
        $region20: #{tpu_custom_call.1} parent=11 // pred_fallthru
          _
        // Predicated region
        $region21: #{tpu_custom_call.1} parent=11 // pred_check
          %p281 = pneg %p108
        $region22: #{tpu_custom_call.1} parent=11 // pred_check_branch
          %283 = sbr.rel (%p281) target = $region24
        $region23: #{tpu_custom_call.1} parent=11 // pred_region
          _
        $region24: #{tpu_custom_call.1} parent=11 // pred_fallthru
          _
        // Predicated region
        $region25: #{tpu_custom_call.1} parent=11 // pred_check
          %p284 = pneg %p129
        $region26: #{tpu_custom_call.1} parent=11 // pred_check_branch
          %286 = sbr.rel (%p284) target = $region28
        $region27: #{tpu_custom_call.1} parent=11 // pred_region
          _
        $region28: #{tpu_custom_call.1} parent=11 // pred_fallthru
          _
        // Predicated region
        $region29: #{tpu_custom_call.1} parent=11 // pred_check
          %p287 = pneg %p150
        $region30: #{tpu_custom_call.1} parent=11 // pred_check_branch
          %289 = sbr.rel (%p287) target = $region32
        $region31: #{tpu_custom_call.1} parent=11 // pred_region
          _
        $region32: #{tpu_custom_call.1} parent=11 // pred_fallthru
          _
        // Predicated region
        $region33: #{tpu_custom_call.1} parent=11 // pred_check
          %p290 = pneg %p171
        $region34: #{tpu_custom_call.1} parent=11 // pred_check_branch
          %292 = sbr.rel (%p290) target = $region36
        $region35: #{tpu_custom_call.1} parent=11 // pred_region
          _
        $region36: #{tpu_custom_call.1} parent=11 // pred_fallthru
          _
        // Predicated region
        $region37: #{tpu_custom_call.1} parent=11 // pred_check
          %p293 = pneg %p192
        $region38: #{tpu_custom_call.1} parent=11 // pred_check_branch
          %295 = sbr.rel (%p293) target = $region40
        $region39: #{tpu_custom_call.1} parent=11 // pred_region
          _
        $region40: #{tpu_custom_call.1} parent=11 // pred_fallthru
          _
        // Predicated region
        $region41: #{tpu_custom_call.1} parent=11 // pred_check
          %p296 = pneg %p213
        $region42: #{tpu_custom_call.1} parent=11 // pred_check_branch
          %298 = sbr.rel (%p296) target = $region44
        $region43: #{tpu_custom_call.1} parent=11 // pred_region
          _
        $region44: #{tpu_custom_call.1} parent=11 // pred_fallthru
          _
        // Predicated region
        $region45: #{tpu_custom_call.1} parent=11 // pred_check
          %p299 = pneg %p234
        $region46: #{tpu_custom_call.1} parent=11 // pred_check_branch
          %301 = sbr.rel (%p299) target = $region48
        $region47: #{tpu_custom_call.1} parent=11 // pred_region
          _
        $region48: #{tpu_custom_call.1} parent=11 // pred_fallthru
          _
      $region12: #{tpu_custom_call.1} parent=5 // pred_fallthru
        _
      %p302 = scmp.lt.s32.totalorder %s19, 2
      // Predicated region
      $region49: #{tpu_custom_call.1} parent=5 // pred_check
        %p303 = pneg %p302
      $region50: #{tpu_custom_call.1} parent=5 // pred_check_branch
        %305 = sbr.rel (%p303) target = $region52
      $region51: #{tpu_custom_call.1} parent=5 // pred_region
        // Predicated region
        $region53: #{tpu_custom_call.1} parent=51 // pred_check
          %p306 = pneg %p39
        $region54: #{tpu_custom_call.1} parent=51 // pred_check_branch
          %308 = sbr.rel (%p306) target = $region56
        $region55: #{tpu_custom_call.1} parent=51 // pred_region
          %p309 = scmp.lt.s32.totalorder %s19, 1
          %s310 = scalar_select %p309, %s19, 1
          %s311 = smul.addr %s310, 8
          %s312 = smul.addr %s311, 8
          %s313 = scalar_lea.vmem %s0, %s312
        $region56: #{tpu_custom_call.1} parent=51 // pred_fallthru
          _
      $region52: #{tpu_custom_call.1} parent=5 // pred_fallthru
        _
      %p314 = scmp.le.s32.totalorder 1, %s19
      %p315 = scmp.lt.s32.totalorder %s19, 3
      %p316 = pnand %p314, %p315
      %p317 = pneg %p316
      // Predicated region
      $region57: #{tpu_custom_call.1} parent=5 // pred_check
        _
      $region58: #{tpu_custom_call.1} parent=5 // pred_check_branch
        %319 = sbr.rel (%p316) target = $region60
      $region59: #{tpu_custom_call.1} parent=5 // pred_region
        %s320 = ssub.s32 %s19, 1
        %p321 = scmp.lt.s32.totalorder %s24, 1
        %s322 = scalar_select %p321, %s24, 1
        %s323 = smul.addr %s322, 8
        %s324 = smul.addr %s323, 8
        %s325 = scalar_lea.vmem %s0, %s324
        %p326 = pneg %p45
        %p327 = pneg %p42
        %p328 = pneg %p66
        %p329 = pneg %p63
        %p330 = pneg %p87
        %p331 = pneg %p84
        %p332 = pneg %p108
        %p333 = pneg %p105
        %p334 = pneg %p129
        %p335 = pneg %p126
        %p336 = pneg %p150
        %p337 = pneg %p147
        %p338 = pneg %p171
        %p339 = pneg %p168
        %p340 = pneg %p192
        %p341 = pneg %p189
        %p342 = pneg %p213
        %p343 = pneg %p210
        %p344 = pneg %p234
        %p345 = pneg %p231
        %p346 = pneg %p260
        %p347 = pneg %p257
        %s348 = sand.u32 %s247, 1
        %s349 = scalar_lea.sflag [#allocation6], %s348
        %s350 = sand.u32 %s247, 1
        %s351 = smul.addr %s350, 64
        %s352 = scalar_lea.vmem [#allocation5], %s351
        %p353 = scmp.lt.s32.totalorder %s24, 1
        %s354 = scalar_select %p353, %s24, 1
        %s355 = smul.addr %s354, 8
        %s356 = smul.addr %s355, 8
        %s357 = scalar_lea.vmem %s0, %s356
        %v358 = vld [vmem:[%s357] sm:$0xff]
        %v359 = vld [vmem:[%s357 + $0x8] sm:$0xff]
        %v360 = vld [vmem:[%s357 + $0x10] sm:$0xff]
        %v361 = vld [vmem:[%s357 + $0x18] sm:$0xff]
        %v362 = vld [vmem:[%s357 + $0x20] sm:$0xff]
        %v363 = vld [vmem:[%s357 + $0x28] sm:$0xff]
        %v364 = vld [vmem:[%s357 + $0x30] sm:$0xff]
        %v365 = vld [vmem:[%s357 + $0x38] sm:$0xff]
        %v366 = vld [vmem:[%s1] sm:$0xff]
        %v367 = vld [vmem:[%s1 + $0x8] sm:$0xff]
        %vm368 = vcmask 130048
        %v370 = vsel %vm368, %v358, 0
        %v373 = vsel %vm368, %v359, 0
        %v376 = vsel %vm368, %v360, 0
        %v379 = vsel %vm368, %v361, 0
        %v382 = vsel %vm368, %v362, 0
        %v385 = vsel %vm368, %v363, 0
        %v388 = vsel %vm368, %v364, 0
        %v391 = vsel %vm368, %v365, 0
        %393 = vmatprep.subr.mxu0 0.0
        %394 = vmatpush1.msra.mxu0 0.0
        %395 = vmatprep.subr.mxu0 0.0
        %396 = vmatpush1.msra.mxu0 0.0
        %397 = vmatprep.subr.mxu0 0.0
        %398 = vmatpush1.msra.mxu0 0.0
        %399 = vmatprep.subr.mxu0 0.0
        %400 = vmatpush1.msra.mxu0 0.0
        %401 = vmatprep.subr.mxu0 0.0
        %402 = vmatpush1.msra.mxu0 0.0
        %403 = vmatprep.subr.mxu0 0.0
        %404 = vmatpush1.msra.mxu0 0.0
        %405 = vmatprep.subr.mxu0 0.0
        %406 = vmatpush1.msra.mxu0 0.0
        %407 = vmatprep.subr.mxu0 0.0
        %408 = vmatpush1.msra.mxu0 0.0
        %409 = vmatprep.subr.mxu0 0.0
        %410 = vmatpush1.msra.mxu0 0.0
        %411 = vmatprep.subr.mxu0 0.0
        %412 = vmatpush1.msra.mxu0 0.0
        %413 = vmatprep.subr.mxu0 0.0
        %414 = vmatpush1.msra.mxu0 0.0
        %415 = vmatprep.subr.mxu0 0.0
        %416 = vmatpush1.msra.mxu0 0.0
        %417 = vmatprep.subr.mxu0 0.0
        %418 = vmatpush1.msra.mxu0 0.0
        %419 = vmatprep.subr.mxu0 0.0
        %420 = vmatpush1.msra.mxu0 0.0
        %421 = vmatprep.subr.mxu0 0.0
        %422 = vmatpush1.msra.mxu0 %v367
        %423 = vmatprep.subr.mxu0 0.0
        %424 = vmatpush1.msra.mxu0 %v366
        %425 = vmatprep.subr.mxu0 0.0
        %426 = vmatpush2.msra.mxu0 0.0
        %427 = vmatprep.subr.mxu0 0.0
        %428 = vmatpush2.msra.mxu0 0.0
        %429 = vmatprep.subr.mxu0 0.0
        %430 = vmatpush2.msra.mxu0 0.0
        %431 = vmatprep.subr.mxu0 0.0
        %432 = vmatpush2.msra.mxu0 0.0
        %433 = vmatprep.subr.mxu0 0.0
        %434 = vmatpush2.msra.mxu0 0.0
        %435 = vmatprep.subr.mxu0 0.0
        %436 = vmatpush2.msra.mxu0 0.0
        %437 = vmatprep.subr.mxu0 0.0
        %438 = vmatpush2.msra.mxu0 0.0
        %439 = vmatprep.subr.mxu0 0.0
        %440 = vmatpush2.msra.mxu0 0.0
        %441 = vmatprep.subr.mxu0 0.0
        %442 = vmatpush2.msra.mxu0 0.0
        %443 = vmatprep.subr.mxu0 0.0
        %444 = vmatpush2.msra.mxu0 0.0
        %445 = vmatprep.subr.mxu0 0.0
        %446 = vmatpush2.msra.mxu0 0.0
        %447 = vmatprep.subr.mxu0 0.0
        %448 = vmatpush2.msra.mxu0 0.0
        %449 = vmatprep.subr.mxu0 0.0
        %450 = vmatpush2.msra.mxu0 0.0
        %451 = vmatprep.subr.mxu0 0.0
        %452 = vmatpush2.msra.mxu0 0.0
        %453 = vmatprep.subr.mxu0 0.0
        %454 = vmatpush2.msra.mxu0 0.0
        %455 = vmatprep.subr.mxu0 0.0
        %456 = vmatpush2.msra.mxu0 0.0
        %457 = vmatprep.mubr.f32.mxu0 0.0
        %458 = vmatmul.mubr.f32.gmra.mxu0 %v370
        %v459 = vpop.f32.mrf.mxu0
        %v460 = vadd.f32 0.0, %v459
        %v461 = vpop.f32.mrf.mxu0
        %462 = vmatprep.mubr.f32.mxu0 0.0
        %463 = vmatmul.mubr.f32.gmra.mxu0 %v373
        %v464 = vpop.f32.mrf.mxu0
        %v465 = vadd.f32 0.0, %v464
        %v466 = vpop.f32.mrf.mxu0
        %467 = vmatprep.mubr.f32.mxu0 0.0
        %468 = vmatmul.mubr.f32.gmra.mxu0 %v376
        %v469 = vpop.f32.mrf.mxu0
        %v470 = vadd.f32 0.0, %v469
        %v471 = vpop.f32.mrf.mxu0
        %472 = vmatprep.mubr.f32.mxu0 0.0
        %473 = vmatmul.mubr.f32.gmra.mxu0 %v379
        %v474 = vpop.f32.mrf.mxu0
        %v475 = vadd.f32 0.0, %v474
        %v476 = vpop.f32.mrf.mxu0
        %477 = vmatprep.mubr.f32.mxu0 0.0
        %478 = vmatmul.mubr.f32.gmra.mxu0 %v382
        %v479 = vpop.f32.mrf.mxu0
        %v480 = vadd.f32 0.0, %v479
        %v481 = vpop.f32.mrf.mxu0
        %482 = vmatprep.mubr.f32.mxu0 0.0
        %483 = vmatmul.mubr.f32.gmra.mxu0 %v385
        %v484 = vpop.f32.mrf.mxu0
        %v485 = vadd.f32 0.0, %v484
        %v486 = vpop.f32.mrf.mxu0
        %487 = vmatprep.mubr.f32.mxu0 0.0
        %488 = vmatmul.mubr.f32.gmra.mxu0 %v388
        %v489 = vpop.f32.mrf.mxu0
        %v490 = vadd.f32 0.0, %v489
        %v491 = vpop.f32.mrf.mxu0
        %492 = vmatprep.mubr.f32.mxu0 0.0
        %493 = vmatmul.mubr.f32.gmra.mxu0 %v391
        %v494 = vpop.f32.mrf.mxu0
        %v495 = vadd.f32 0.0, %v494
        %v496 = vpop.f32.mrf.mxu0
        %497 = vdwg.mxu0
        %v498 = vld [vmem:[%s2] sm:$0xff]
        %v499 = vld [vmem:[%s2 + $0x8] sm:$0xff]
        %v500 = vld [vmem:[%s2 + $0x10] sm:$0xff]
        %v501 = vld [vmem:[%s2 + $0x18] sm:$0xff]
        %v502 = vld [vmem:[%s2 + $0x20] sm:$0xff]
        %v503 = vld [vmem:[%s2 + $0x28] sm:$0xff]
        %v504 = vld [vmem:[%s2 + $0x30] sm:$0xff]
        %v505 = vld [vmem:[%s2 + $0x38] sm:$0xff]
        %v506 = vld [vmem:[%s2 + $0x40] sm:$0xff]
        %v507 = vld [vmem:[%s2 + $0x48] sm:$0xff]
        %v508 = vld [vmem:[%s2 + $0x50] sm:$0xff]
        %v509 = vld [vmem:[%s2 + $0x58] sm:$0xff]
        %v510 = vld [vmem:[%s2 + $0x60] sm:$0xff]
        %v511 = vld [vmem:[%s2 + $0x68] sm:$0xff]
        %v512 = vld [vmem:[%s2 + $0x70] sm:$0xff]
        %v513 = vld [vmem:[%s2 + $0x78] sm:$0xff]
        %vm514 = vcmask 523264
        %v516 = vsel %vm514, %v498, 0
        %v519 = vsel %vm514, %v499, 0
        %v522 = vsel %vm514, %v500, 0
        %v525 = vsel %vm514, %v501, 0
        %v528 = vsel %vm514, %v502, 0
        %v531 = vsel %vm514, %v503, 0
        %v534 = vsel %vm514, %v504, 0
        %v537 = vsel %vm514, %v505, 0
        %v540 = vsel %vm514, %v506, 0
        %v543 = vsel %vm514, %v507, 0
        %v546 = vsel %vm514, %v508, 0
        %v549 = vsel %vm514, %v509, 0
        %v552 = vsel %vm514, %v510, 0
        %v555 = vsel %vm514, %v511, 0
        %v558 = vsel %vm514, %v512, 0
        %v561 = vsel %vm514, %v513, 0
        %563 = vmatprep.subr.mxu0 0.0
        %564 = vmatpush1.msra.mxu0 0.0
        %565 = vmatprep.subr.mxu0 0.0
        %566 = vmatpush1.msra.mxu0 0.0
        %567 = vmatprep.subr.mxu0 0.0
        %568 = vmatpush1.msra.mxu0 0.0
        %569 = vmatprep.subr.mxu0 0.0
        %570 = vmatpush1.msra.mxu0 0.0
        %571 = vmatprep.subr.mxu0 0.0
        %572 = vmatpush1.msra.mxu0 0.0
        %573 = vmatprep.subr.mxu0 0.0
        %574 = vmatpush1.msra.mxu0 0.0
        %575 = vmatprep.subr.mxu0 0.0
        %576 = vmatpush1.msra.mxu0 0.0
        %577 = vmatprep.subr.mxu0 0.0
        %578 = vmatpush1.msra.mxu0 0.0
        %579 = vmatprep.subr.mxu0 0.0
        %580 = vmatpush1.msra.mxu0 %v495
        %581 = vmatprep.subr.mxu0 0.0
        %582 = vmatpush1.msra.mxu0 %v490
        %583 = vmatprep.subr.mxu0 0.0
        %584 = vmatpush1.msra.mxu0 %v485
        %585 = vmatprep.subr.mxu0 0.0
        %586 = vmatpush1.msra.mxu0 %v480
        %587 = vmatprep.subr.mxu0 0.0
        %588 = vmatpush1.msra.mxu0 %v475
        %589 = vmatprep.subr.mxu0 0.0
        %590 = vmatpush1.msra.mxu0 %v470
        %591 = vmatprep.subr.mxu0 0.0
        %592 = vmatpush1.msra.mxu0 %v465
        %593 = vmatprep.subr.mxu0 0.0
        %594 = vmatpush1.msra.mxu0 %v460
        %595 = vmatprep.subr.mxu0 0.0
        %596 = vmatpush2.msra.mxu0 0.0
        %597 = vmatprep.subr.mxu0 0.0
        %598 = vmatpush2.msra.mxu0 0.0
        %599 = vmatprep.subr.mxu0 0.0
        %600 = vmatpush2.msra.mxu0 0.0
        %601 = vmatprep.subr.mxu0 0.0
        %602 = vmatpush2.msra.mxu0 0.0
        %603 = vmatprep.subr.mxu0 0.0
        %604 = vmatpush2.msra.mxu0 0.0
        %605 = vmatprep.subr.mxu0 0.0
        %606 = vmatpush2.msra.mxu0 0.0
        %607 = vmatprep.subr.mxu0 0.0
        %608 = vmatpush2.msra.mxu0 0.0
        %609 = vmatprep.subr.mxu0 0.0
        %610 = vmatpush2.msra.mxu0 0.0
        %611 = vmatprep.subr.mxu0 0.0
        %612 = vmatpush2.msra.mxu0 0.0
        %613 = vmatprep.subr.mxu0 0.0
        %614 = vmatpush2.msra.mxu0 0.0
        %615 = vmatprep.subr.mxu0 0.0
        %616 = vmatpush2.msra.mxu0 0.0
        %617 = vmatprep.subr.mxu0 0.0
        %618 = vmatpush2.msra.mxu0 0.0
        %619 = vmatprep.subr.mxu0 0.0
        %620 = vmatpush2.msra.mxu0 0.0
        %621 = vmatprep.subr.mxu0 0.0
        %622 = vmatpush2.msra.mxu0 0.0
        %623 = vmatprep.subr.mxu0 0.0
        %624 = vmatpush2.msra.mxu0 0.0
        %625 = vmatprep.subr.mxu0 0.0
        %626 = vmatpush2.msra.mxu0 0.0
        %627 = vmatprep.mubr.f32.mxu0 0.0
        %628 = vmatmul.mubr.f32.gmra.mxu0 %v516
        %v629 = vpop.f32.mrf.mxu0
        %v630 = vadd.f32 0.0, %v629
        %v631 = vpop.f32.mrf.mxu0
        %632 = vmatprep.mubr.f32.mxu0 0.0
        %633 = vmatmul.mubr.f32.gmra.mxu0 %v519
        %v634 = vpop.f32.mrf.mxu0
        %v635 = vadd.f32 0.0, %v634
        %v636 = vpop.f32.mrf.mxu0
        %637 = vmatprep.mubr.f32.mxu0 0.0
        %638 = vmatmul.mubr.f32.gmra.mxu0 %v522
        %v639 = vpop.f32.mrf.mxu0
        %v640 = vadd.f32 0.0, %v639
        %v641 = vpop.f32.mrf.mxu0
        %642 = vmatprep.mubr.f32.mxu0 0.0
        %643 = vmatmul.mubr.f32.gmra.mxu0 %v525
        %v644 = vpop.f32.mrf.mxu0
        %v645 = vadd.f32 0.0, %v644
        %v646 = vpop.f32.mrf.mxu0
        %647 = vmatprep.mubr.f32.mxu0 0.0
        %648 = vmatmul.mubr.f32.gmra.mxu0 %v528
        %v649 = vpop.f32.mrf.mxu0
        %v650 = vadd.f32 0.0, %v649
        %v651 = vpop.f32.mrf.mxu0
        %652 = vmatprep.mubr.f32.mxu0 0.0
        %653 = vmatmul.mubr.f32.gmra.mxu0 %v531
        %v654 = vpop.f32.mrf.mxu0
        %v655 = vadd.f32 0.0, %v654
        %v656 = vpop.f32.mrf.mxu0
        %657 = vmatprep.mubr.f32.mxu0 0.0
        %658 = vmatmul.mubr.f32.gmra.mxu0 %v534
        %v659 = vpop.f32.mrf.mxu0
        %v660 = vadd.f32 0.0, %v659
        %v661 = vpop.f32.mrf.mxu0
        %662 = vmatprep.mubr.f32.mxu0 0.0
        %663 = vmatmul.mubr.f32.gmra.mxu0 %v537
        %v664 = vpop.f32.mrf.mxu0
        %v665 = vadd.f32 0.0, %v664
        %v666 = vpop.f32.mrf.mxu0
        %667 = vmatprep.mubr.f32.mxu0 0.0
        %668 = vmatmul.mubr.f32.gmra.mxu0 %v540
        %v669 = vpop.f32.mrf.mxu0
        %v670 = vadd.f32 0.0, %v669
        %v671 = vpop.f32.mrf.mxu0
        %672 = vmatprep.mubr.f32.mxu0 0.0
        %673 = vmatmul.mubr.f32.gmra.mxu0 %v543
        %v674 = vpop.f32.mrf.mxu0
        %v675 = vadd.f32 0.0, %v674
        %v676 = vpop.f32.mrf.mxu0
        %677 = vmatprep.mubr.f32.mxu0 0.0
        %678 = vmatmul.mubr.f32.gmra.mxu0 %v546
        %v679 = vpop.f32.mrf.mxu0
        %v680 = vadd.f32 0.0, %v679
        %v681 = vpop.f32.mrf.mxu0
        %682 = vmatprep.mubr.f32.mxu0 0.0
        %683 = vmatmul.mubr.f32.gmra.mxu0 %v549
        %v684 = vpop.f32.mrf.mxu0
        %v685 = vadd.f32 0.0, %v684
        %v686 = vpop.f32.mrf.mxu0
        %687 = vmatprep.mubr.f32.mxu0 0.0
        %688 = vmatmul.mubr.f32.gmra.mxu0 %v552
        %v689 = vpop.f32.mrf.mxu0
        %v690 = vadd.f32 0.0, %v689
        %v691 = vpop.f32.mrf.mxu0
        %692 = vmatprep.mubr.f32.mxu0 0.0
        %693 = vmatmul.mubr.f32.gmra.mxu0 %v555
        %v694 = vpop.f32.mrf.mxu0
        %v695 = vadd.f32 0.0, %v694
        %v696 = vpop.f32.mrf.mxu0
        %697 = vmatprep.mubr.f32.mxu0 0.0
        %698 = vmatmul.mubr.f32.gmra.mxu0 %v558
        %v699 = vpop.f32.mrf.mxu0
        %v700 = vadd.f32 0.0, %v699
        %v701 = vpop.f32.mrf.mxu0
        %702 = vmatprep.mubr.f32.mxu0 0.0
        %703 = vmatmul.mubr.f32.gmra.mxu0 %v561
        %v704 = vpop.f32.mrf.mxu0
        %v705 = vadd.f32 0.0, %v704
        %v706 = vpop.f32.mrf.mxu0
        %707 = vdwg.mxu0
        %vm708 = vcmask 257024
        %709 = vst.msk [vmem:[#allocation2] sm:$0xf] %vm708, %v630
        %v711 = vcombine.high %v630, %v630
        %712 = vrot.lane.b32.xlu0 %v711, 32
        %v713 = vpop.permute.xlu0 %712
        %vm715 = vcmask 519424
        %716 = vst.msk [vmem:[#allocation2] sm:$0xf] %vm715, %v713
        %718 = vrot.lane.b32.xlu0 %v635, 64
        %v719 = vpop.permute.xlu0 %718
        %vm721 = vcmask 781824
        %722 = vst.msk [vmem:[#allocation2] sm:$0xf] %vm721, %v719
        %v723 = vcombine.high %v635, %v635
        %724 = vrot.lane.b32.xlu0 %v723, 96
        %v725 = vpop.permute.xlu0 %724
        %vm727 = vcmask 1044224
        %728 = vst.msk [vmem:[#allocation2] sm:$0xf] %vm727, %v725
        %729 = vst.msk [vmem:[#allocation2 + $0x4] sm:$0xf] %vm708, %v640
        %v731 = vcombine.high %v640, %v640
        %732 = vrot.lane.b32.xlu0 %v731, 32
        %v733 = vpop.permute.xlu0 %732
        %735 = vst.msk [vmem:[#allocation2 + $0x4] sm:$0xf] %vm715, %v733
        %737 = vrot.lane.b32.xlu0 %v645, 64
        %v738 = vpop.permute.xlu0 %737
        %740 = vst.msk [vmem:[#allocation2 + $0x4] sm:$0xf] %vm721, %v738
        %v741 = vcombine.high %v645, %v645
        %742 = vrot.lane.b32.xlu0 %v741, 96
        %v743 = vpop.permute.xlu0 %742
        %745 = vst.msk [vmem:[#allocation2 + $0x4] sm:$0xf] %vm727, %v743
        %746 = vst.msk [vmem:[#allocation2 + $0x8] sm:$0xf] %vm708, %v650
        %v748 = vcombine.high %v650, %v650
        %749 = vrot.lane.b32.xlu0 %v748, 32
        %v750 = vpop.permute.xlu0 %749
        %752 = vst.msk [vmem:[#allocation2 + $0x8] sm:$0xf] %vm715, %v750
        %754 = vrot.lane.b32.xlu0 %v655, 64
        %v755 = vpop.permute.xlu0 %754
        %757 = vst.msk [vmem:[#allocation2 + $0x8] sm:$0xf] %vm721, %v755
        %v758 = vcombine.high %v655, %v655
        %759 = vrot.lane.b32.xlu0 %v758, 96
        %v760 = vpop.permute.xlu0 %759
        %762 = vst.msk [vmem:[#allocation2 + $0x8] sm:$0xf] %vm727, %v760
        %763 = vst.msk [vmem:[#allocation2 + $0xc] sm:$0xf] %vm708, %v660
        %v765 = vcombine.high %v660, %v660
        %766 = vrot.lane.b32.xlu0 %v765, 32
        %v767 = vpop.permute.xlu0 %766
        %769 = vst.msk [vmem:[#allocation2 + $0xc] sm:$0xf] %vm715, %v767
        %771 = vrot.lane.b32.xlu0 %v665, 64
        %v772 = vpop.permute.xlu0 %771
        %774 = vst.msk [vmem:[#allocation2 + $0xc] sm:$0xf] %vm721, %v772
        %v775 = vcombine.high %v665, %v665
        %776 = vrot.lane.b32.xlu0 %v775, 96
        %v777 = vpop.permute.xlu0 %776
        %779 = vst.msk [vmem:[#allocation2 + $0xc] sm:$0xf] %vm727, %v777
        %780 = vst.msk [vmem:[#allocation2 + $0x10] sm:$0xf] %vm708, %v670
        %v782 = vcombine.high %v670, %v670
        %783 = vrot.lane.b32.xlu0 %v782, 32
        %v784 = vpop.permute.xlu0 %783
        %786 = vst.msk [vmem:[#allocation2 + $0x10] sm:$0xf] %vm715, %v784
        %788 = vrot.lane.b32.xlu0 %v675, 64
        %v789 = vpop.permute.xlu0 %788
        %791 = vst.msk [vmem:[#allocation2 + $0x10] sm:$0xf] %vm721, %v789
        %v792 = vcombine.high %v675, %v675
        %793 = vrot.lane.b32.xlu0 %v792, 96
        %v794 = vpop.permute.xlu0 %793
        %796 = vst.msk [vmem:[#allocation2 + $0x10] sm:$0xf] %vm727, %v794
        %797 = vst.msk [vmem:[#allocation2 + $0x14] sm:$0xf] %vm708, %v680
        %v799 = vcombine.high %v680, %v680
        %800 = vrot.lane.b32.xlu0 %v799, 32
        %v801 = vpop.permute.xlu0 %800
        %803 = vst.msk [vmem:[#allocation2 + $0x14] sm:$0xf] %vm715, %v801
        %805 = vrot.lane.b32.xlu0 %v685, 64
        %v806 = vpop.permute.xlu0 %805
        %808 = vst.msk [vmem:[#allocation2 + $0x14] sm:$0xf] %vm721, %v806
        %v809 = vcombine.high %v685, %v685
        %810 = vrot.lane.b32.xlu0 %v809, 96
        %v811 = vpop.permute.xlu0 %810
        %813 = vst.msk [vmem:[#allocation2 + $0x14] sm:$0xf] %vm727, %v811
        %814 = vst.msk [vmem:[#allocation2 + $0x18] sm:$0xf] %vm708, %v690
        %v816 = vcombine.high %v690, %v690
        %817 = vrot.lane.b32.xlu0 %v816, 32
        %v818 = vpop.permute.xlu0 %817
        %820 = vst.msk [vmem:[#allocation2 + $0x18] sm:$0xf] %vm715, %v818
        %822 = vrot.lane.b32.xlu0 %v695, 64
        %v823 = vpop.permute.xlu0 %822
        %825 = vst.msk [vmem:[#allocation2 + $0x18] sm:$0xf] %vm721, %v823
        %v826 = vcombine.high %v695, %v695
        %827 = vrot.lane.b32.xlu0 %v826, 96
        %v828 = vpop.permute.xlu0 %827
        %830 = vst.msk [vmem:[#allocation2 + $0x18] sm:$0xf] %vm727, %v828
        %831 = vst.msk [vmem:[#allocation2 + $0x1c] sm:$0xf] %vm708, %v700
        %v833 = vcombine.high %v700, %v700
        %834 = vrot.lane.b32.xlu0 %v833, 32
        %v835 = vpop.permute.xlu0 %834
        %837 = vst.msk [vmem:[#allocation2 + $0x1c] sm:$0xf] %vm715, %v835
        %839 = vrot.lane.b32.xlu0 %v705, 64
        %v840 = vpop.permute.xlu0 %839
        %842 = vst.msk [vmem:[#allocation2 + $0x1c] sm:$0xf] %vm721, %v840
        %v843 = vcombine.high %v705, %v705
        %844 = vrot.lane.b32.xlu0 %v843, 96
        %v845 = vpop.permute.xlu0 %844
        %847 = vst.msk [vmem:[#allocation2 + $0x1c] sm:$0xf] %vm727, %v845
        %v848 = vld [vmem:[#allocation2] sm:$0xff]
        %v849 = vld [vmem:[#allocation2 + $0x8] sm:$0xff]
        %v850 = vld [vmem:[#allocation2 + $0x10] sm:$0xff]
        %v851 = vld [vmem:[#allocation2 + $0x18] sm:$0xff]
        %v852 = vld [vmem:[%s3] ss:$2 sm:$0xff]
        %s853 = scalar_lea.vmem %s3, 1
        %v854 = vld [vmem:[%s853] ss:$2 sm:$0xff]
        %855 = vst [vmem:[#allocation3] sm:$0xff] 0.0
        %856 = vst [vmem:[#allocation3 + $0x8] sm:$0xff] 0.0
        %857 = vst [vmem:[#allocation3 + $0x10] sm:$0xff] 0.0
        %858 = vst [vmem:[#allocation3 + $0x18] sm:$0xff] 0.0
        %859 = vst [vmem:[#allocation3 + $0x20] sm:$0xff] 0.0
        %860 = vst [vmem:[#allocation3 + $0x28] sm:$0xff] 0.0
        %861 = vst [vmem:[#allocation3 + $0x30] sm:$0xff] 0.0
        %862 = vst [vmem:[#allocation3 + $0x38] sm:$0xff] 0.0
        %863 = vst [vmem:[#allocation3 + $0x40] sm:$0xff] 0.0
        %864 = vst [vmem:[#allocation3 + $0x48] sm:$0xff] 0.0
        %865 = vst [vmem:[#allocation3 + $0x50] sm:$0xff] 0.0
        %866 = vst [vmem:[#allocation3 + $0x58] sm:$0xff] 0.0
        %867 = vst [vmem:[#allocation3 + $0x60] sm:$0xff] 0.0
        %868 = vst [vmem:[#allocation3 + $0x68] sm:$0xff] 0.0
        %869 = vst [vmem:[#allocation3 + $0x70] sm:$0xff] 0.0
        %870 = vst [vmem:[#allocation3 + $0x78] sm:$0xff] 0.0
        %871 = vst [vmem:[#allocation3 + $0x80] sm:$0xff] 0.0
        %872 = vst [vmem:[#allocation3 + $0x88] sm:$0xff] 0.0
        %873 = vst [vmem:[#allocation3 + $0x90] sm:$0xff] 0.0
        %874 = vst [vmem:[#allocation3 + $0x98] sm:$0xff] 0.0
        %875 = vst [vmem:[#allocation3 + $0xa0] sm:$0xff] 0.0
        %876 = vst [vmem:[#allocation3 + $0xa8] sm:$0xff] 0.0
        %877 = vst [vmem:[#allocation3 + $0xb0] sm:$0xff] 0.0
        %878 = vst [vmem:[#allocation3 + $0xb8] sm:$0xff] 0.0
        %879 = vst [vmem:[#allocation3 + $0xc0] sm:$0xff] 0.0
        %880 = vst [vmem:[#allocation3 + $0xc8] sm:$0xff] 0.0
        %881 = vst [vmem:[#allocation3 + $0xd0] sm:$0xff] 0.0
        %882 = vst [vmem:[#allocation3 + $0xd8] sm:$0xff] 0.0
        %883 = vst [vmem:[#allocation3 + $0xe0] sm:$0xff] 0.0
        %884 = vst [vmem:[#allocation3 + $0xe8] sm:$0xff] 0.0
        %885 = vst [vmem:[#allocation3 + $0xf0] sm:$0xff] 0.0
        %886 = vst [vmem:[#allocation3 + $0xf8] sm:$0xff] 0.0
        %887 = vst [vmem:[#allocation3 + $0x100] sm:$0xf] 0.0
        %888 = vst [vmem:[#allocation3 + $0x108] sm:$0xf] 0.0
        %889 = vst [vmem:[#allocation3 + $0x110] sm:$0xf] 0.0
        %890 = vst [vmem:[#allocation3 + $0x118] sm:$0xf] 0.0
        %891 = vst [vmem:[#allocation3 + $0x120] sm:$0xf] 0.0
        %892 = vst [vmem:[#allocation3 + $0x128] sm:$0xf] 0.0
        %893 = vst [vmem:[#allocation3 + $0x130] sm:$0xf] 0.0
        %894 = vst [vmem:[#allocation3 + $0x138] sm:$0xf] 0.0
        %v896 = vlaneseq
        %v897 = vshrl.u32 %v896, 7
        %v898 = vsub.s32 0, %v897
        %v899 = vrot.slane %v852, %v898
        %v900 = vlaneseq
        %v901 = vshrl.u32 %v900, 7
        %v902 = vsub.s32 1, %v901
        %v903 = vrot.slane %v852, %v902
        %v904 = vlaneseq
        %v905 = vshrl.u32 %v904, 7
        %v906 = vsub.s32 2, %v905
        %v907 = vrot.slane %v852, %v906
        %v908 = vlaneseq
        %v909 = vshrl.u32 %v908, 7
        %v910 = vsub.s32 3, %v909
        %v911 = vrot.slane %v852, %v910
        %v912 = vlaneseq
        %v913 = vshrl.u32 %v912, 7
        %v914 = vsub.s32 4, %v913
        %v915 = vrot.slane %v852, %v914
        %v916 = vlaneseq
        %v917 = vshrl.u32 %v916, 7
        %v918 = vsub.s32 5, %v917
        %v919 = vrot.slane %v852, %v918
        %v920 = vlaneseq
        %v921 = vshrl.u32 %v920, 7
        %v922 = vsub.s32 6, %v921
        %v923 = vrot.slane %v852, %v922
        %v924 = vlaneseq
        %v925 = vshrl.u32 %v924, 7
        %v926 = vsub.s32 7, %v925
        %v927 = vrot.slane %v852, %v926
        %v928 = vcombine.low %v899, %v903
        %v929 = vcombine.low %v907, %v911
        %v930 = vcombine.low %v915, %v919
        %v931 = vcombine.low %v923, %v927
        %v936 = vmul.f32 %v848, %v928
        %v937 = vmul.f32 %v849, %v929
        %v938 = vmul.f32 %v850, %v930
        %v939 = vmul.f32 %v851, %v931
        %v941 = vlaneseq
        %v942 = vshrl.u32 %v941, 7
        %v943 = vsub.s32 0, %v942
        %v944 = vrot.slane %v854, %v943
        %v945 = vlaneseq
        %v946 = vshrl.u32 %v945, 7
        %v947 = vsub.s32 1, %v946
        %v948 = vrot.slane %v854, %v947
        %v949 = vlaneseq
        %v950 = vshrl.u32 %v949, 7
        %v951 = vsub.s32 2, %v950
        %v952 = vrot.slane %v854, %v951
        %v953 = vlaneseq
        %v954 = vshrl.u32 %v953, 7
        %v955 = vsub.s32 3, %v954
        %v956 = vrot.slane %v854, %v955
        %v957 = vlaneseq
        %v958 = vshrl.u32 %v957, 7
        %v959 = vsub.s32 4, %v958
        %v960 = vrot.slane %v854, %v959
        %v961 = vlaneseq
        %v962 = vshrl.u32 %v961, 7
        %v963 = vsub.s32 5, %v962
        %v964 = vrot.slane %v854, %v963
        %v965 = vlaneseq
        %v966 = vshrl.u32 %v965, 7
        %v967 = vsub.s32 6, %v966
        %v968 = vrot.slane %v854, %v967
        %v969 = vlaneseq
        %v970 = vshrl.u32 %v969, 7
        %v971 = vsub.s32 7, %v970
        %v972 = vrot.slane %v854, %v971
        %v973 = vcombine.low %v944, %v948
        %v974 = vcombine.low %v952, %v956
        %v975 = vcombine.low %v960, %v964
        %v976 = vcombine.low %v968, %v972
        %v981 = vmul.f32 %v848, %v973
        %v982 = vmul.f32 %v849, %v974
        %v983 = vmul.f32 %v850, %v975
        %v984 = vmul.f32 %v851, %v976
        %v989 = vcombine.high %v981, %v981
        %v990 = vcombine.high %v982, %v982
        %v991 = vcombine.high %v983, %v983
        %v992 = vcombine.high %v984, %v984
        %993 = vrot.lane.b32.xlu0 %v981, 33
        %v994 = vpop.permute.xlu0 %993
        %995 = vrot.lane.b32.xlu0 %v989, 33
        %v996 = vpop.permute.xlu0 %995
        %997 = vrot.lane.b32.xlu0 %v982, 33
        %v998 = vpop.permute.xlu0 %997
        %999 = vrot.lane.b32.xlu0 %v990, 33
        %v1000 = vpop.permute.xlu0 %999
        %1001 = vrot.lane.b32.xlu0 %v983, 33
        %v1002 = vpop.permute.xlu0 %1001
        %1003 = vrot.lane.b32.xlu0 %v991, 33
        %v1004 = vpop.permute.xlu0 %1003
        %1005 = vrot.lane.b32.xlu0 %v984, 33
        %v1006 = vpop.permute.xlu0 %1005
        %1007 = vrot.lane.b32.xlu0 %v992, 33
        %v1008 = vpop.permute.xlu0 %1007
        %vm1009 = vcmask 269312
        %v1010 = vsel %vm1009, %v994, %v996
        %v1011 = vsel %vm1009, %v996, %v998
        %v1012 = vsel %vm1009, %v998, %v1000
        %v1013 = vsel %vm1009, %v1000, %v1002
        %v1014 = vsel %vm1009, %v1002, %v1004
        %v1015 = vsel %vm1009, %v1004, %v1006
        %v1016 = vsel %vm1009, %v1006, %v1008
        %vm1025 = vcmask 1043720
        %1026 = vst.msk [vmem:[#allocation3] sm:$0xf] %vm1025, %v994
        %1027 = vst [vmem:[#allocation3 + $0x8] sm:$0xf] %v1010
        %1028 = vst [vmem:[#allocation3 + $0x10] sm:$0xf] %v1011
        %1029 = vst [vmem:[#allocation3 + $0x18] sm:$0xf] %v1012
        %1030 = vst [vmem:[#allocation3 + $0x20] sm:$0xf] %v1013
        %1031 = vst [vmem:[#allocation3 + $0x28] sm:$0xf] %v1014
        %1032 = vst [vmem:[#allocation3 + $0x30] sm:$0xf] %v1015
        %1033 = vst [vmem:[#allocation3 + $0x38] sm:$0xf] %v1016
        %v1034 = vcombine.low %v981, %v981
        %v1035 = vcombine.low %v982, %v982
        %v1036 = vcombine.low %v983, %v983
        %v1037 = vcombine.low %v984, %v984
        %1038 = vrot.lane.b32.xlu0 %v1034, 1
        %v1039 = vpop.permute.xlu0 %1038
        %1040 = vrot.lane.b32.xlu0 %v981, 1
        %v1041 = vpop.permute.xlu0 %1040
        %1042 = vrot.lane.b32.xlu0 %v1035, 1
        %v1043 = vpop.permute.xlu0 %1042
        %1044 = vrot.lane.b32.xlu0 %v982, 1
        %v1045 = vpop.permute.xlu0 %1044
        %1046 = vrot.lane.b32.xlu0 %v1036, 1
        %v1047 = vpop.permute.xlu0 %1046
        %1048 = vrot.lane.b32.xlu0 %v983, 1
        %v1049 = vpop.permute.xlu0 %1048
        %1050 = vrot.lane.b32.xlu0 %v1037, 1
        %v1051 = vpop.permute.xlu0 %1050
        %1052 = vrot.lane.b32.xlu0 %v984, 1
        %v1053 = vpop.permute.xlu0 %1052
        %vm1054 = vcmask 7168
        %v1055 = vsel %vm1054, %v1039, %v1041
        %v1056 = vsel %vm1054, %v1041, %v1043
        %v1057 = vsel %vm1054, %v1043, %v1045
        %v1058 = vsel %vm1054, %v1045, %v1047
        %v1059 = vsel %vm1054, %v1047, %v1049
        %v1060 = vsel %vm1054, %v1049, %v1051
        %v1061 = vsel %vm1054, %v1051, %v1053
        %vm1070 = vcmask 1047564
        %1071 = vst.msk [vmem:[#allocation3] sm:$0xf0] %vm1070, %v1039
        %1072 = vst [vmem:[#allocation3 + $0x8] sm:$0xf0] %v1055
        %1073 = vst [vmem:[#allocation3 + $0x10] sm:$0xf0] %v1056
        %1074 = vst [vmem:[#allocation3 + $0x18] sm:$0xf0] %v1057
        %1075 = vst [vmem:[#allocation3 + $0x20] sm:$0xf0] %v1058
        %1076 = vst [vmem:[#allocation3 + $0x28] sm:$0xf0] %v1059
        %1077 = vst [vmem:[#allocation3 + $0x30] sm:$0xf0] %v1060
        %1078 = vst [vmem:[#allocation3 + $0x38] sm:$0xf0] %v1061
        %1079 = vrot.lane.b32.xlu0 %v981, 97
        %v1080 = vpop.permute.xlu0 %1079
        %1081 = vrot.lane.b32.xlu0 %v989, 97
        %v1082 = vpop.permute.xlu0 %1081
        %1083 = vrot.lane.b32.xlu0 %v982, 97
        %v1084 = vpop.permute.xlu0 %1083
        %1085 = vrot.lane.b32.xlu0 %v990, 97
        %v1086 = vpop.permute.xlu0 %1085
        %1087 = vrot.lane.b32.xlu0 %v983, 97
        %v1088 = vpop.permute.xlu0 %1087
        %1089 = vrot.lane.b32.xlu0 %v991, 97
        %v1090 = vpop.permute.xlu0 %1089
        %1091 = vrot.lane.b32.xlu0 %v984, 97
        %v1092 = vpop.permute.xlu0 %1091
        %1093 = vrot.lane.b32.xlu0 %v992, 97
        %v1094 = vpop.permute.xlu0 %1093
        %vm1095 = vcmask 793600
        %v1096 = vsel %vm1095, %v1080, %v1082
        %v1097 = vsel %vm1095, %v1082, %v1084
        %v1098 = vsel %vm1095, %v1084, %v1086
        %v1099 = vsel %vm1095, %v1086, %v1088
        %v1100 = vsel %vm1095, %v1088, %v1090
        %v1101 = vsel %vm1095, %v1090, %v1092
        %v1102 = vsel %vm1095, %v1092, %v1094
        %1111 = vst [vmem:[#allocation3 + $0x40] sm:$0xf] %v1096
        %1112 = vst [vmem:[#allocation3 + $0x48] sm:$0xf] %v1097
        %1113 = vst [vmem:[#allocation3 + $0x50] sm:$0xf] %v1098
        %1114 = vst [vmem:[#allocation3 + $0x58] sm:$0xf] %v1099
        %1115 = vst [vmem:[#allocation3 + $0x60] sm:$0xf] %v1100
        %1116 = vst [vmem:[#allocation3 + $0x68] sm:$0xf] %v1101
        %1117 = vst [vmem:[#allocation3 + $0x70] sm:$0xf] %v1102
        %vm1118 = vcmask 789504
        %1119 = vst.msk [vmem:[#allocation3 + $0x78] sm:$0xf] %vm1118, %v1094
        %v1124 = vcombine.low %v848, %v848
        %v1125 = vcombine.low %v849, %v849
        %v1126 = vcombine.low %v850, %v850
        %v1127 = vcombine.low %v851, %v851
        %1128 = vrot.lane.b32.xlu0 %v1124, 32
        %v1129 = vpop.permute.xlu0 %1128
        %1130 = vrot.lane.b32.xlu0 %v848, 32
        %v1131 = vpop.permute.xlu0 %1130
        %1132 = vrot.lane.b32.xlu0 %v1125, 32
        %v1133 = vpop.permute.xlu0 %1132
        %1134 = vrot.lane.b32.xlu0 %v849, 32
        %v1135 = vpop.permute.xlu0 %1134
        %1136 = vrot.lane.b32.xlu0 %v1126, 32
        %v1137 = vpop.permute.xlu0 %1136
        %1138 = vrot.lane.b32.xlu0 %v850, 32
        %v1139 = vpop.permute.xlu0 %1138
        %1140 = vrot.lane.b32.xlu0 %v1127, 32
        %v1141 = vpop.permute.xlu0 %1140
        %1142 = vrot.lane.b32.xlu0 %v851, 32
        %v1143 = vpop.permute.xlu0 %1142
        %vm1144 = vcmask 261120
        %v1145 = vsel %vm1144, %v1129, %v1131
        %v1146 = vsel %vm1144, %v1131, %v1133
        %v1147 = vsel %vm1144, %v1133, %v1135
        %v1148 = vsel %vm1144, %v1135, %v1137
        %v1149 = vsel %vm1144, %v1137, %v1139
        %v1150 = vsel %vm1144, %v1139, %v1141
        %v1151 = vsel %vm1144, %v1141, %v1143
        %vm1160 = vcmask 1047812
        %1161 = vst.msk [vmem:[#allocation3 + $0x40] sm:$0xf0] %vm1160, %v1129
        %1162 = vst [vmem:[#allocation3 + $0x48] sm:$0xf0] %v1145
        %1163 = vst [vmem:[#allocation3 + $0x50] sm:$0xf0] %v1146
        %1164 = vst [vmem:[#allocation3 + $0x58] sm:$0xf0] %v1147
        %1165 = vst [vmem:[#allocation3 + $0x60] sm:$0xf0] %v1148
        %1166 = vst [vmem:[#allocation3 + $0x68] sm:$0xf0] %v1149
        %1167 = vst [vmem:[#allocation3 + $0x70] sm:$0xf0] %v1150
        %1168 = vst [vmem:[#allocation3 + $0x78] sm:$0xf0] %v1151
        %v1169 = vcombine.high %v848, %v848
        %v1170 = vcombine.high %v849, %v849
        %v1171 = vcombine.high %v850, %v850
        %v1172 = vcombine.high %v851, %v851
        %1177 = vst [vmem:[#allocation3 + $0x80] sm:$0xf] %v848
        %1178 = vst [vmem:[#allocation3 + $0x88] sm:$0xf] %v1169
        %1179 = vst [vmem:[#allocation3 + $0x90] sm:$0xf] %v849
        %1180 = vst [vmem:[#allocation3 + $0x98] sm:$0xf] %v1170
        %1181 = vst [vmem:[#allocation3 + $0xa0] sm:$0xf] %v850
        %1182 = vst [vmem:[#allocation3 + $0xa8] sm:$0xf] %v1171
        %1183 = vst [vmem:[#allocation3 + $0xb0] sm:$0xf] %v851
        %1184 = vst [vmem:[#allocation3 + $0xb8] sm:$0xf] %v1172
        %1185 = vrot.lane.b32.xlu0 %v1124, 96
        %v1186 = vpop.permute.xlu0 %1185
        %1187 = vrot.lane.b32.xlu0 %v848, 96
        %v1188 = vpop.permute.xlu0 %1187
        %1189 = vrot.lane.b32.xlu0 %v1125, 96
        %v1190 = vpop.permute.xlu0 %1189
        %1191 = vrot.lane.b32.xlu0 %v849, 96
        %v1192 = vpop.permute.xlu0 %1191
        %1193 = vrot.lane.b32.xlu0 %v1126, 96
        %v1194 = vpop.permute.xlu0 %1193
        %1195 = vrot.lane.b32.xlu0 %v850, 96
        %v1196 = vpop.permute.xlu0 %1195
        %1197 = vrot.lane.b32.xlu0 %v1127, 96
        %v1198 = vpop.permute.xlu0 %1197
        %1199 = vrot.lane.b32.xlu0 %v851, 96
        %v1200 = vpop.permute.xlu0 %1199
        %vm1201 = vcmask 785408
        %v1202 = vsel %vm1201, %v1186, %v1188
        %v1203 = vsel %vm1201, %v1188, %v1190
        %v1204 = vsel %vm1201, %v1190, %v1192
        %v1205 = vsel %vm1201, %v1192, %v1194
        %v1206 = vsel %vm1201, %v1194, %v1196
        %v1207 = vsel %vm1201, %v1196, %v1198
        %v1208 = vsel %vm1201, %v1198, %v1200
        %1217 = vst [vmem:[#allocation3 + $0x80] sm:$0xf0] %v1202
        %1218 = vst [vmem:[#allocation3 + $0x88] sm:$0xf0] %v1203
        %1219 = vst [vmem:[#allocation3 + $0x90] sm:$0xf0] %v1204
        %1220 = vst [vmem:[#allocation3 + $0x98] sm:$0xf0] %v1205
        %1221 = vst [vmem:[#allocation3 + $0xa0] sm:$0xf0] %v1206
        %1222 = vst [vmem:[#allocation3 + $0xa8] sm:$0xf0] %v1207
        %1223 = vst [vmem:[#allocation3 + $0xb0] sm:$0xf0] %v1208
        %vm1224 = vcmask 785412
        %1225 = vst.msk [vmem:[#allocation3 + $0xb8] sm:$0xf0] %vm1224, %v1200
        %v1230 = vcombine.high %v936, %v936
        %v1231 = vcombine.high %v937, %v937
        %v1232 = vcombine.high %v938, %v938
        %v1233 = vcombine.high %v939, %v939
        %1234 = vrot.lane.b32.xlu0 %v936, 31
        %v1235 = vpop.permute.xlu0 %1234
        %1236 = vrot.lane.b32.xlu0 %v1230, 31
        %v1237 = vpop.permute.xlu0 %1236
        %1238 = vrot.lane.b32.xlu0 %v937, 31
        %v1239 = vpop.permute.xlu0 %1238
        %1240 = vrot.lane.b32.xlu0 %v1231, 31
        %v1241 = vpop.permute.xlu0 %1240
        %1242 = vrot.lane.b32.xlu0 %v938, 31
        %v1243 = vpop.permute.xlu0 %1242
        %1244 = vrot.lane.b32.xlu0 %v1232, 31
        %v1245 = vpop.permute.xlu0 %1244
        %1246 = vrot.lane.b32.xlu0 %v939, 31
        %v1247 = vpop.permute.xlu0 %1246
        %1248 = vrot.lane.b32.xlu0 %v1233, 31
        %v1249 = vpop.permute.xlu0 %1248
        %vm1250 = vcmask 252928
        %v1251 = vsel %vm1250, %v1235, %v1237
        %v1252 = vsel %vm1250, %v1237, %v1239
        %v1253 = vsel %vm1250, %v1239, %v1241
        %v1254 = vsel %vm1250, %v1241, %v1243
        %v1255 = vsel %vm1250, %v1243, %v1245
        %v1256 = vsel %vm1250, %v1245, %v1247
        %v1257 = vsel %vm1250, %v1247, %v1249
        %vm1266 = vcmask 1043704
        %1267 = vst.msk [vmem:[#allocation3 + $0xc0] sm:$0xf] %vm1266, %v1235
        %1268 = vst [vmem:[#allocation3 + $0xc8] sm:$0xf] %v1251
        %1269 = vst [vmem:[#allocation3 + $0xd0] sm:$0xf] %v1252
        %1270 = vst [vmem:[#allocation3 + $0xd8] sm:$0xf] %v1253
        %1271 = vst [vmem:[#allocation3 + $0xe0] sm:$0xf] %v1254
        %1272 = vst [vmem:[#allocation3 + $0xe8] sm:$0xf] %v1255
        %1273 = vst [vmem:[#allocation3 + $0xf0] sm:$0xf] %v1256
        %1274 = vst [vmem:[#allocation3 + $0xf8] sm:$0xf] %v1257
        %v1275 = vcombine.low %v936, %v936
        %v1276 = vcombine.low %v937, %v937
        %v1277 = vcombine.low %v938, %v938
        %v1278 = vcombine.low %v939, %v939
        %1279 = vrot.lane.b32.xlu0 %v1275, 127
        %v1280 = vpop.permute.xlu0 %1279
        %1281 = vrot.lane.b32.xlu0 %v936, 127
        %v1282 = vpop.permute.xlu0 %1281
        %1283 = vrot.lane.b32.xlu0 %v1276, 127
        %v1284 = vpop.permute.xlu0 %1283
        %1285 = vrot.lane.b32.xlu0 %v937, 127
        %v1286 = vpop.permute.xlu0 %1285
        %1287 = vrot.lane.b32.xlu0 %v1277, 127
        %v1288 = vpop.permute.xlu0 %1287
        %1289 = vrot.lane.b32.xlu0 %v938, 127
        %v1290 = vpop.permute.xlu0 %1289
        %1291 = vrot.lane.b32.xlu0 %v1278, 127
        %v1292 = vpop.permute.xlu0 %1291
        %1293 = vrot.lane.b32.xlu0 %v939, 127
        %v1294 = vpop.permute.xlu0 %1293
        %vm1295 = vcmask 1039360
        %v1296 = vsel %vm1295, %v1280, %v1282
        %v1297 = vsel %vm1295, %v1282, %v1284
        %v1298 = vsel %vm1295, %v1284, %v1286
        %v1299 = vsel %vm1295, %v1286, %v1288
        %v1300 = vsel %vm1295, %v1288, %v1290
        %v1301 = vsel %vm1295, %v1290, %v1292
        %v1302 = vsel %vm1295, %v1292, %v1294
        %1311 = vst [vmem:[#allocation3 + $0xc0] sm:$0xf0] %v1296
        %1312 = vst [vmem:[#allocation3 + $0xc8] sm:$0xf0] %v1297
        %1313 = vst [vmem:[#allocation3 + $0xd0] sm:$0xf0] %v1298
        %1314 = vst [vmem:[#allocation3 + $0xd8] sm:$0xf0] %v1299
        %1315 = vst [vmem:[#allocation3 + $0xe0] sm:$0xf0] %v1300
        %1316 = vst [vmem:[#allocation3 + $0xe8] sm:$0xf0] %v1301
        %1317 = vst [vmem:[#allocation3 + $0xf0] sm:$0xf0] %v1302
        %vm1318 = vcmask 1039364
        %1319 = vst.msk [vmem:[#allocation3 + $0xf8] sm:$0xf0] %vm1318, %v1294
        %1320 = vrot.lane.b32.xlu0 %v936, 95
        %v1321 = vpop.permute.xlu0 %1320
        %1322 = vrot.lane.b32.xlu0 %v1230, 95
        %v1323 = vpop.permute.xlu0 %1322
        %1324 = vrot.lane.b32.xlu0 %v937, 95
        %v1325 = vpop.permute.xlu0 %1324
        %1326 = vrot.lane.b32.xlu0 %v1231, 95
        %v1327 = vpop.permute.xlu0 %1326
        %1328 = vrot.lane.b32.xlu0 %v938, 95
        %v1329 = vpop.permute.xlu0 %1328
        %1330 = vrot.lane.b32.xlu0 %v1232, 95
        %v1331 = vpop.permute.xlu0 %1330
        %1332 = vrot.lane.b32.xlu0 %v939, 95
        %v1333 = vpop.permute.xlu0 %1332
        %1334 = vrot.lane.b32.xlu0 %v1233, 95
        %v1335 = vpop.permute.xlu0 %1334
        %vm1336 = vcmask 777216
        %v1337 = vsel %vm1336, %v1321, %v1323
        %v1338 = vsel %vm1336, %v1323, %v1325
        %v1339 = vsel %vm1336, %v1325, %v1327
        %v1340 = vsel %vm1336, %v1327, %v1329
        %v1341 = vsel %vm1336, %v1329, %v1331
        %v1342 = vsel %vm1336, %v1331, %v1333
        %v1343 = vsel %vm1336, %v1333, %v1335
        %1352 = vst [vmem:[#allocation3 + $0x100] sm:$0xf] %v1337
        %1353 = vst [vmem:[#allocation3 + $0x108] sm:$0xf] %v1338
        %1354 = vst [vmem:[#allocation3 + $0x110] sm:$0xf] %v1339
        %1355 = vst [vmem:[#allocation3 + $0x118] sm:$0xf] %v1340
        %1356 = vst [vmem:[#allocation3 + $0x120] sm:$0xf] %v1341
        %1357 = vst [vmem:[#allocation3 + $0x128] sm:$0xf] %v1342
        %1358 = vst [vmem:[#allocation3 + $0x130] sm:$0xf] %v1343
        %vm1359 = vcmask 773120
        %1360 = vst.msk [vmem:[#allocation3 + $0x138] sm:$0xf] %vm1359, %v1335
        %v1361 = vld [vmem:[%s4] sm:$0xff]
        %v1362 = vld [vmem:[#allocation3] sm:$0xff]
        %v1363 = vld [vmem:[#allocation3 + $0x8] sm:$0xff]
        %v1364 = vld [vmem:[#allocation3 + $0x10] sm:$0xff]
        %v1365 = vld [vmem:[#allocation3 + $0x18] sm:$0xff]
        %v1366 = vld [vmem:[#allocation3 + $0x20] sm:$0xff]
        %v1367 = vld [vmem:[#allocation3 + $0x28] sm:$0xff]
        %v1368 = vld [vmem:[#allocation3 + $0x30] sm:$0xff]
        %v1369 = vld [vmem:[#allocation3 + $0x38] sm:$0xff]
        %v1370 = vld [vmem:[#allocation3 + $0x40] sm:$0xff]
        %v1371 = vld [vmem:[#allocation3 + $0x48] sm:$0xff]
        %v1372 = vld [vmem:[#allocation3 + $0x50] sm:$0xff]
        %v1373 = vld [vmem:[#allocation3 + $0x58] sm:$0xff]
        %v1374 = vld [vmem:[#allocation3 + $0x60] sm:$0xff]
        %v1375 = vld [vmem:[#allocation3 + $0x68] sm:$0xff]
        %v1376 = vld [vmem:[#allocation3 + $0x70] sm:$0xff]
        %v1377 = vld [vmem:[#allocation3 + $0x78] sm:$0xff]
        %v1378 = vld [vmem:[#allocation3 + $0x80] sm:$0xff]
        %v1379 = vld [vmem:[#allocation3 + $0x88] sm:$0xff]
        %v1380 = vld [vmem:[#allocation3 + $0x90] sm:$0xff]
        %v1381 = vld [vmem:[#allocation3 + $0x98] sm:$0xff]
        %v1382 = vld [vmem:[#allocation3 + $0xa0] sm:$0xff]
        %v1383 = vld [vmem:[#allocation3 + $0xa8] sm:$0xff]
        %v1384 = vld [vmem:[#allocation3 + $0xb0] sm:$0xff]
        %v1385 = vld [vmem:[#allocation3 + $0xb8] sm:$0xff]
        %v1386 = vld [vmem:[#allocation3 + $0xc0] sm:$0xff]
        %v1387 = vld [vmem:[#allocation3 + $0xc8] sm:$0xff]
        %v1388 = vld [vmem:[#allocation3 + $0xd0] sm:$0xff]
        %v1389 = vld [vmem:[#allocation3 + $0xd8] sm:$0xff]
        %v1390 = vld [vmem:[#allocation3 + $0xe0] sm:$0xff]
        %v1391 = vld [vmem:[#allocation3 + $0xe8] sm:$0xff]
        %v1392 = vld [vmem:[#allocation3 + $0xf0] sm:$0xff]
        %v1393 = vld [vmem:[#allocation3 + $0xf8] sm:$0xff]
        %v1394 = vld [vmem:[#allocation3 + $0x100] sm:$0xf]
        %v1395 = vld [vmem:[#allocation3 + $0x108] sm:$0xf]
        %v1396 = vld [vmem:[#allocation3 + $0x110] sm:$0xf]
        %v1397 = vld [vmem:[#allocation3 + $0x118] sm:$0xf]
        %v1398 = vld [vmem:[#allocation3 + $0x120] sm:$0xf]
        %v1399 = vld [vmem:[#allocation3 + $0x128] sm:$0xf]
        %v1400 = vld [vmem:[#allocation3 + $0x130] sm:$0xf]
        %v1401 = vld [vmem:[#allocation3 + $0x138] sm:$0xf]
        %vm1402 = vcmask 293888
        %v1404 = vsel %vm1402, %v1361, 0
        %vm1406 = vcmask 1043456
        %v1408 = vsel %vm1406, %v1394, 0
        %v1411 = vsel %vm1406, %v1395, 0
        %v1414 = vsel %vm1406, %v1396, 0
        %v1417 = vsel %vm1406, %v1397, 0
        %v1420 = vsel %vm1406, %v1398, 0
        %v1423 = vsel %vm1406, %v1399, 0
        %v1426 = vsel %vm1406, %v1400, 0
        %v1429 = vsel %vm1406, %v1401, 0
        %1431 = vmatprep.subr.mxu0 0.0
        %1432 = vmatpush1.msra.mxu0 0.0
        %1433 = vmatprep.subr.mxu0 0.0
        %1434 = vmatpush1.msra.mxu0 0.0
        %1435 = vmatprep.subr.mxu0 0.0
        %1436 = vmatpush1.msra.mxu0 0.0
        %1437 = vmatprep.subr.mxu0 0.0
        %1438 = vmatpush1.msra.mxu0 0.0
        %1439 = vmatprep.subr.mxu0 0.0
        %1440 = vmatpush1.msra.mxu0 0.0
        %1441 = vmatprep.subr.mxu0 0.0
        %1442 = vmatpush1.msra.mxu0 0.0
        %1443 = vmatprep.subr.mxu0 0.0
        %1444 = vmatpush1.msra.mxu0 0.0
        %1445 = vmatprep.subr.mxu0 0.0
        %1446 = vmatpush1.msra.mxu0 0.0
        %1447 = vmatprep.subr.mxu0 0.0
        %1448 = vmatpush1.msra.mxu0 0.0
        %1449 = vmatprep.subr.mxu0 0.0
        %1450 = vmatpush1.msra.mxu0 0.0
        %1451 = vmatprep.subr.mxu0 0.0
        %1452 = vmatpush1.msra.mxu0 0.0
        %1453 = vmatprep.subr.mxu0 %v1411
        %1454 = vmatpush1.msra.mxu0 %v1408
        %1455 = vmatprep.subr.mxu0 %v1387
        %1456 = vmatpush1.msra.mxu0 %v1386
        %1457 = vmatprep.subr.mxu0 %v1379
        %1458 = vmatpush1.msra.mxu0 %v1378
        %1459 = vmatprep.subr.mxu0 %v1371
        %1460 = vmatpush1.msra.mxu0 %v1370
        %1461 = vmatprep.subr.mxu0 %v1363
        %1462 = vmatpush1.msra.mxu0 %v1362
        %1463 = vmatprep.subr.mxu0 0.0
        %1464 = vmatpush2.msra.mxu0 0.0
        %1465 = vmatprep.subr.mxu0 0.0
        %1466 = vmatpush2.msra.mxu0 0.0
        %1467 = vmatprep.subr.mxu0 0.0
        %1468 = vmatpush2.msra.mxu0 0.0
        %1469 = vmatprep.subr.mxu0 0.0
        %1470 = vmatpush2.msra.mxu0 0.0
        %1471 = vmatprep.subr.mxu0 0.0
        %1472 = vmatpush2.msra.mxu0 0.0
        %1473 = vmatprep.subr.mxu0 0.0
        %1474 = vmatpush2.msra.mxu0 0.0
        %1475 = vmatprep.subr.mxu0 0.0
        %1476 = vmatpush2.msra.mxu0 0.0
        %1477 = vmatprep.subr.mxu0 0.0
        %1478 = vmatpush2.msra.mxu0 0.0
        %1479 = vmatprep.subr.mxu0 0.0
        %1480 = vmatpush2.msra.mxu0 0.0
        %1481 = vmatprep.subr.mxu0 0.0
        %1482 = vmatpush2.msra.mxu0 0.0
        %1483 = vmatprep.subr.mxu0 0.0
        %1484 = vmatpush2.msra.mxu0 0.0
        %1485 = vmatprep.subr.mxu0 0.0
        %1486 = vmatpush2.msra.mxu0 0.0
        %1487 = vmatprep.subr.mxu0 0.0
        %1488 = vmatpush2.msra.mxu0 0.0
        %1489 = vmatprep.subr.mxu0 0.0
        %1490 = vmatpush2.msra.mxu0 0.0
        %1491 = vmatprep.subr.mxu0 0.0
        %1492 = vmatpush2.msra.mxu0 0.0
        %1493 = vmatprep.subr.mxu0 0.0
        %1494 = vmatpush2.msra.mxu0 0.0
        %1495 = vmatprep.mubr.f32.mxu0 0.0
        %1496 = vmatmul.mubr.f32.gmra.mxu0 %v1404
        %v1497 = vpop.f32.mrf.mxu0
        %v1498 = vadd.f32 0.0, %v1497
        %v1499 = vpop.f32.mrf.mxu0
        %v1500 = vadd.f32 0.0, %v1499
        %1501 = vdwg.mxu0
        %1502 = vmatprep.subr.mxu0 0.0
        %1503 = vmatpush1.msra.mxu0 0.0
        %1504 = vmatprep.subr.mxu0 0.0
        %1505 = vmatpush1.msra.mxu0 0.0
        %1506 = vmatprep.subr.mxu0 0.0
        %1507 = vmatpush1.msra.mxu0 0.0
        %1508 = vmatprep.subr.mxu0 0.0
        %1509 = vmatpush1.msra.mxu0 0.0
        %1510 = vmatprep.subr.mxu0 0.0
        %1511 = vmatpush1.msra.mxu0 0.0
        %1512 = vmatprep.subr.mxu0 0.0
        %1513 = vmatpush1.msra.mxu0 0.0
        %1514 = vmatprep.subr.mxu0 0.0
        %1515 = vmatpush1.msra.mxu0 0.0
        %1516 = vmatprep.subr.mxu0 0.0
        %1517 = vmatpush1.msra.mxu0 0.0
        %1518 = vmatprep.subr.mxu0 0.0
        %1519 = vmatpush1.msra.mxu0 0.0
        %1520 = vmatprep.subr.mxu0 0.0
        %1521 = vmatpush1.msra.mxu0 0.0
        %1522 = vmatprep.subr.mxu0 0.0
        %1523 = vmatpush1.msra.mxu0 0.0
        %1524 = vmatprep.subr.mxu0 %v1417
        %1525 = vmatpush1.msra.mxu0 %v1414
        %1526 = vmatprep.subr.mxu0 %v1389
        %1527 = vmatpush1.msra.mxu0 %v1388
        %1528 = vmatprep.subr.mxu0 %v1381
        %1529 = vmatpush1.msra.mxu0 %v1380
        %1530 = vmatprep.subr.mxu0 %v1373
        %1531 = vmatpush1.msra.mxu0 %v1372
        %1532 = vmatprep.subr.mxu0 %v1365
        %1533 = vmatpush1.msra.mxu0 %v1364
        %1534 = vmatprep.subr.mxu0 0.0
        %1535 = vmatpush2.msra.mxu0 0.0
        %1536 = vmatprep.subr.mxu0 0.0
        %1537 = vmatpush2.msra.mxu0 0.0
        %1538 = vmatprep.subr.mxu0 0.0
        %1539 = vmatpush2.msra.mxu0 0.0
        %1540 = vmatprep.subr.mxu0 0.0
        %1541 = vmatpush2.msra.mxu0 0.0
        %1542 = vmatprep.subr.mxu0 0.0
        %1543 = vmatpush2.msra.mxu0 0.0
        %1544 = vmatprep.subr.mxu0 0.0
        %1545 = vmatpush2.msra.mxu0 0.0
        %1546 = vmatprep.subr.mxu0 0.0
        %1547 = vmatpush2.msra.mxu0 0.0
        %1548 = vmatprep.subr.mxu0 0.0
        %1549 = vmatpush2.msra.mxu0 0.0
        %1550 = vmatprep.subr.mxu0 0.0
        %1551 = vmatpush2.msra.mxu0 0.0
        %1552 = vmatprep.subr.mxu0 0.0
        %1553 = vmatpush2.msra.mxu0 0.0
        %1554 = vmatprep.subr.mxu0 0.0
        %1555 = vmatpush2.msra.mxu0 0.0
        %1556 = vmatprep.subr.mxu0 0.0
        %1557 = vmatpush2.msra.mxu0 0.0
        %1558 = vmatprep.subr.mxu0 0.0
        %1559 = vmatpush2.msra.mxu0 0.0
        %1560 = vmatprep.subr.mxu0 0.0
        %1561 = vmatpush2.msra.mxu0 0.0
        %1562 = vmatprep.subr.mxu0 0.0
        %1563 = vmatpush2.msra.mxu0 0.0
        %1564 = vmatprep.subr.mxu0 0.0
        %1565 = vmatpush2.msra.mxu0 0.0
        %1566 = vmatprep.mubr.f32.mxu0 0.0
        %1567 = vmatmul.mubr.f32.gmra.mxu0 %v1404
        %v1568 = vpop.f32.mrf.mxu0
        %v1569 = vadd.f32 0.0, %v1568
        %v1570 = vpop.f32.mrf.mxu0
        %v1571 = vadd.f32 0.0, %v1570
        %1572 = vdwg.mxu0
        %1573 = vmatprep.subr.mxu0 0.0
        %1574 = vmatpush1.msra.mxu0 0.0
        %1575 = vmatprep.subr.mxu0 0.0
        %1576 = vmatpush1.msra.mxu0 0.0
        %1577 = vmatprep.subr.mxu0 0.0
        %1578 = vmatpush1.msra.mxu0 0.0
        %1579 = vmatprep.subr.mxu0 0.0
        %1580 = vmatpush1.msra.mxu0 0.0
        %1581 = vmatprep.subr.mxu0 0.0
        %1582 = vmatpush1.msra.mxu0 0.0
        %1583 = vmatprep.subr.mxu0 0.0
        %1584 = vmatpush1.msra.mxu0 0.0
        %1585 = vmatprep.subr.mxu0 0.0
        %1586 = vmatpush1.msra.mxu0 0.0
        %1587 = vmatprep.subr.mxu0 0.0
        %1588 = vmatpush1.msra.mxu0 0.0
        %1589 = vmatprep.subr.mxu0 0.0
        %1590 = vmatpush1.msra.mxu0 0.0
        %1591 = vmatprep.subr.mxu0 0.0
        %1592 = vmatpush1.msra.mxu0 0.0
        %1593 = vmatprep.subr.mxu0 0.0
        %1594 = vmatpush1.msra.mxu0 0.0
        %1595 = vmatprep.subr.mxu0 %v1423
        %1596 = vmatpush1.msra.mxu0 %v1420
        %1597 = vmatprep.subr.mxu0 %v1391
        %1598 = vmatpush1.msra.mxu0 %v1390
        %1599 = vmatprep.subr.mxu0 %v1383
        %1600 = vmatpush1.msra.mxu0 %v1382
        %1601 = vmatprep.subr.mxu0 %v1375
        %1602 = vmatpush1.msra.mxu0 %v1374
        %1603 = vmatprep.subr.mxu0 %v1367
        %1604 = vmatpush1.msra.mxu0 %v1366
        %1605 = vmatprep.subr.mxu0 0.0
        %1606 = vmatpush2.msra.mxu0 0.0
        %1607 = vmatprep.subr.mxu0 0.0
        %1608 = vmatpush2.msra.mxu0 0.0
        %1609 = vmatprep.subr.mxu0 0.0
        %1610 = vmatpush2.msra.mxu0 0.0
        %1611 = vmatprep.subr.mxu0 0.0
        %1612 = vmatpush2.msra.mxu0 0.0
        %1613 = vmatprep.subr.mxu0 0.0
        %1614 = vmatpush2.msra.mxu0 0.0
        %1615 = vmatprep.subr.mxu0 0.0
        %1616 = vmatpush2.msra.mxu0 0.0
        %1617 = vmatprep.subr.mxu0 0.0
        %1618 = vmatpush2.msra.mxu0 0.0
        %1619 = vmatprep.subr.mxu0 0.0
        %1620 = vmatpush2.msra.mxu0 0.0
        %1621 = vmatprep.subr.mxu0 0.0
        %1622 = vmatpush2.msra.mxu0 0.0
        %1623 = vmatprep.subr.mxu0 0.0
        %1624 = vmatpush2.msra.mxu0 0.0
        %1625 = vmatprep.subr.mxu0 0.0
        %1626 = vmatpush2.msra.mxu0 0.0
        %1627 = vmatprep.subr.mxu0 0.0
        %1628 = vmatpush2.msra.mxu0 0.0
        %1629 = vmatprep.subr.mxu0 0.0
        %1630 = vmatpush2.msra.mxu0 0.0
        %1631 = vmatprep.subr.mxu0 0.0
        %1632 = vmatpush2.msra.mxu0 0.0
        %1633 = vmatprep.subr.mxu0 0.0
        %1634 = vmatpush2.msra.mxu0 0.0
        %1635 = vmatprep.subr.mxu0 0.0
        %1636 = vmatpush2.msra.mxu0 0.0
        %1637 = vmatprep.mubr.f32.mxu0 0.0
        %1638 = vmatmul.mubr.f32.gmra.mxu0 %v1404
        %v1639 = vpop.f32.mrf.mxu0
        %v1640 = vadd.f32 0.0, %v1639
        %v1641 = vpop.f32.mrf.mxu0
        %v1642 = vadd.f32 0.0, %v1641
        %1643 = vdwg.mxu0
        %1644 = vmatprep.subr.mxu0 0.0
        %1645 = vmatpush1.msra.mxu0 0.0
        %1646 = vmatprep.subr.mxu0 0.0
        %1647 = vmatpush1.msra.mxu0 0.0
        %1648 = vmatprep.subr.mxu0 0.0
        %1649 = vmatpush1.msra.mxu0 0.0
        %1650 = vmatprep.subr.mxu0 0.0
        %1651 = vmatpush1.msra.mxu0 0.0
        %1652 = vmatprep.subr.mxu0 0.0
        %1653 = vmatpush1.msra.mxu0 0.0
        %1654 = vmatprep.subr.mxu0 0.0
        %1655 = vmatpush1.msra.mxu0 0.0
        %1656 = vmatprep.subr.mxu0 0.0
        %1657 = vmatpush1.msra.mxu0 0.0
        %1658 = vmatprep.subr.mxu0 0.0
        %1659 = vmatpush1.msra.mxu0 0.0
        %1660 = vmatprep.subr.mxu0 0.0
        %1661 = vmatpush1.msra.mxu0 0.0
        %1662 = vmatprep.subr.mxu0 0.0
        %1663 = vmatpush1.msra.mxu0 0.0
        %1664 = vmatprep.subr.mxu0 0.0
        %1665 = vmatpush1.msra.mxu0 0.0
        %1666 = vmatprep.subr.mxu0 %v1429
        %1667 = vmatpush1.msra.mxu0 %v1426
        %1668 = vmatprep.subr.mxu0 %v1393
        %1669 = vmatpush1.msra.mxu0 %v1392
        %1670 = vmatprep.subr.mxu0 %v1385
        %1671 = vmatpush1.msra.mxu0 %v1384
        %1672 = vmatprep.subr.mxu0 %v1377
        %1673 = vmatpush1.msra.mxu0 %v1376
        %1674 = vmatprep.subr.mxu0 %v1369
        %1675 = vmatpush1.msra.mxu0 %v1368
        %1676 = vmatprep.subr.mxu0 0.0
        %1677 = vmatpush2.msra.mxu0 0.0
        %1678 = vmatprep.subr.mxu0 0.0
        %1679 = vmatpush2.msra.mxu0 0.0
        %1680 = vmatprep.subr.mxu0 0.0
        %1681 = vmatpush2.msra.mxu0 0.0
        %1682 = vmatprep.subr.mxu0 0.0
        %1683 = vmatpush2.msra.mxu0 0.0
        %1684 = vmatprep.subr.mxu0 0.0
        %1685 = vmatpush2.msra.mxu0 0.0
        %1686 = vmatprep.subr.mxu0 0.0
        %1687 = vmatpush2.msra.mxu0 0.0
        %1688 = vmatprep.subr.mxu0 0.0
        %1689 = vmatpush2.msra.mxu0 0.0
        %1690 = vmatprep.subr.mxu0 0.0
        %1691 = vmatpush2.msra.mxu0 0.0
        %1692 = vmatprep.subr.mxu0 0.0
        %1693 = vmatpush2.msra.mxu0 0.0
        %1694 = vmatprep.subr.mxu0 0.0
        %1695 = vmatpush2.msra.mxu0 0.0
        %1696 = vmatprep.subr.mxu0 0.0
        %1697 = vmatpush2.msra.mxu0 0.0
        %1698 = vmatprep.subr.mxu0 0.0
        %1699 = vmatpush2.msra.mxu0 0.0
        %1700 = vmatprep.subr.mxu0 0.0
        %1701 = vmatpush2.msra.mxu0 0.0
        %1702 = vmatprep.subr.mxu0 0.0
        %1703 = vmatpush2.msra.mxu0 0.0
        %1704 = vmatprep.subr.mxu0 0.0
        %1705 = vmatpush2.msra.mxu0 0.0
        %1706 = vmatprep.subr.mxu0 0.0
        %1707 = vmatpush2.msra.mxu0 0.0
        %1708 = vmatprep.mubr.f32.mxu0 0.0
        %1709 = vmatmul.mubr.f32.gmra.mxu0 %v1404
        %v1710 = vpop.f32.mrf.mxu0
        %v1711 = vadd.f32 0.0, %v1710
        %v1712 = vpop.f32.mrf.mxu0
        %v1713 = vadd.f32 0.0, %v1712
        %1714 = vdwg.mxu0
        %v1715 = vld [vmem:[%s5] sm:$0xff]
        %1717 = vset.pattern.permute.xlu0 0
        %1718 = vperm.xlu0 %1717, %v1715
        %v1719 = vpop.permute.xlu0 %1718
        %v1721 = vmul.f32 %v1498, %v1719
        %v1722 = vmul.f32 %v1500, %v1719
        %v1723 = vmul.f32 %v1569, %v1719
        %v1724 = vmul.f32 %v1571, %v1719
        %v1725 = vmul.f32 %v1640, %v1719
        %v1726 = vmul.f32 %v1642, %v1719
        %v1727 = vmul.f32 %v1711, %v1719
        %v1728 = vmul.f32 %v1713, %v1719
        %v1729 = vld [vmem:[%s6] sm:$0xff]
        %1731 = vset.pattern.permute.xlu0 0
        %1732 = vperm.xlu0 %1731, %v1729
        %v1733 = vpop.permute.xlu0 %1732
        %v1735 = vadd.f32 %v1721, %v1733
        %v1736 = vadd.f32 %v1722, %v1733
        %v1737 = vadd.f32 %v1723, %v1733
        %v1738 = vadd.f32 %v1724, %v1733
        %v1739 = vadd.f32 %v1725, %v1733
        %v1740 = vadd.f32 %v1726, %v1733
        %v1741 = vadd.f32 %v1727, %v1733
        %v1742 = vadd.f32 %v1728, %v1733
        %v1743 = vmax.f32 %v1735, 0.0
        %v1744 = vmax.f32 %v1736, 0.0
        %v1745 = vmax.f32 %v1737, 0.0
        %v1746 = vmax.f32 %v1738, 0.0
        %v1747 = vmax.f32 %v1739, 0.0
        %v1748 = vmax.f32 %v1740, 0.0
        %v1749 = vmax.f32 %v1741, 0.0
        %v1750 = vmax.f32 %v1742, 0.0
        %1751 = vst [vmem:[#allocation4] sm:$0xff] 0.0
        %1752 = vst [vmem:[#allocation4 + $0x8] sm:$0xff] 0.0
        %1753 = vst [vmem:[#allocation4 + $0x10] sm:$0xff] 0.0
        %1754 = vst [vmem:[#allocation4 + $0x18] sm:$0xff] 0.0
        %1755 = vst [vmem:[#allocation4 + $0x20] sm:$0xff] 0.0
        %1756 = vst [vmem:[#allocation4 + $0x28] sm:$0xff] 0.0
        %1757 = vst [vmem:[#allocation4 + $0x30] sm:$0xff] 0.0
        %1758 = vst [vmem:[#allocation4 + $0x38] sm:$0xff] 0.0
        %1759 = vst [vmem:[#allocation4 + $0x40] sm:$0xff] 0.0
        %1760 = vst [vmem:[#allocation4 + $0x48] sm:$0xff] 0.0
        %1761 = vst [vmem:[#allocation4 + $0x50] sm:$0xff] 0.0
        %1762 = vst [vmem:[#allocation4 + $0x58] sm:$0xff] 0.0
        %1763 = vst [vmem:[#allocation4 + $0x60] sm:$0xff] 0.0
        %1764 = vst [vmem:[#allocation4 + $0x68] sm:$0xff] 0.0
        %1765 = vst [vmem:[#allocation4 + $0x70] sm:$0xff] 0.0
        %1766 = vst [vmem:[#allocation4 + $0x78] sm:$0xff] 0.0
        %1767 = vst [vmem:[#allocation4 + $0x80] sm:$0xff] 0.0
        %1768 = vst [vmem:[#allocation4 + $0x88] sm:$0xff] 0.0
        %1769 = vst [vmem:[#allocation4 + $0x90] sm:$0xff] 0.0
        %1770 = vst [vmem:[#allocation4 + $0x98] sm:$0xff] 0.0
        %1771 = vst [vmem:[#allocation4 + $0xa0] sm:$0xff] 0.0
        %1772 = vst [vmem:[#allocation4 + $0xa8] sm:$0xff] 0.0
        %1773 = vst [vmem:[#allocation4 + $0xb0] sm:$0xff] 0.0
        %1774 = vst [vmem:[#allocation4 + $0xb8] sm:$0xff] 0.0
        %1775 = vst [vmem:[#allocation4 + $0xc0] sm:$0xff] 0.0
        %1776 = vst [vmem:[#allocation4 + $0xc8] sm:$0xff] 0.0
        %1777 = vst [vmem:[#allocation4 + $0xd0] sm:$0xff] 0.0
        %1778 = vst [vmem:[#allocation4 + $0xd8] sm:$0xff] 0.0
        %1779 = vst [vmem:[#allocation4 + $0xe0] sm:$0xff] 0.0
        %1780 = vst [vmem:[#allocation4 + $0xe8] sm:$0xff] 0.0
        %1781 = vst [vmem:[#allocation4 + $0xf0] sm:$0xff] 0.0
        %1782 = vst [vmem:[#allocation4 + $0xf8] sm:$0xff] 0.0
        %1783 = vst [vmem:[#allocation4 + $0x100] sm:$0xff] 0.0
        %1784 = vst [vmem:[#allocation4 + $0x108] sm:$0xff] 0.0
        %1785 = vst [vmem:[#allocation4 + $0x110] sm:$0xff] 0.0
        %1786 = vst [vmem:[#allocation4 + $0x118] sm:$0xff] 0.0
        %1787 = vst [vmem:[#allocation4 + $0x120] sm:$0xff] 0.0
        %1788 = vst [vmem:[#allocation4 + $0x128] sm:$0xff] 0.0
        %1789 = vst [vmem:[#allocation4 + $0x130] sm:$0xff] 0.0
        %1790 = vst [vmem:[#allocation4 + $0x138] sm:$0xff] 0.0
        %1791 = vst [vmem:[#allocation4 + $0x140] sm:$0xff] 0.0
        %1792 = vst [vmem:[#allocation4 + $0x148] sm:$0xff] 0.0
        %1793 = vst [vmem:[#allocation4 + $0x150] sm:$0xff] 0.0
        %1794 = vst [vmem:[#allocation4 + $0x158] sm:$0xff] 0.0
        %1795 = vst [vmem:[#allocation4 + $0x160] sm:$0xff] 0.0
        %1796 = vst [vmem:[#allocation4 + $0x168] sm:$0xff] 0.0
        %1797 = vst [vmem:[#allocation4 + $0x170] sm:$0xff] 0.0
        %1798 = vst [vmem:[#allocation4 + $0x178] sm:$0xff] 0.0
        %1799 = vst [vmem:[#allocation4 + $0x180] sm:$0xff] 0.0
        %1800 = vst [vmem:[#allocation4 + $0x188] sm:$0xff] 0.0
        %1801 = vst [vmem:[#allocation4 + $0x190] sm:$0xff] 0.0
        %1802 = vst [vmem:[#allocation4 + $0x198] sm:$0xff] 0.0
        %1803 = vst [vmem:[#allocation4 + $0x1a0] sm:$0xff] 0.0
        %1804 = vst [vmem:[#allocation4 + $0x1a8] sm:$0xff] 0.0
        %1805 = vst [vmem:[#allocation4 + $0x1b0] sm:$0xff] 0.0
        %1806 = vst [vmem:[#allocation4 + $0x1b8] sm:$0xff] 0.0
        %1807 = vst [vmem:[#allocation4 + $0x1c0] sm:$0xff] 0.0
        %1808 = vst [vmem:[#allocation4 + $0x1c8] sm:$0xff] 0.0
        %1809 = vst [vmem:[#allocation4 + $0x1d0] sm:$0xff] 0.0
        %1810 = vst [vmem:[#allocation4 + $0x1d8] sm:$0xff] 0.0
        %1811 = vst [vmem:[#allocation4 + $0x1e0] sm:$0xff] 0.0
        %1812 = vst [vmem:[#allocation4 + $0x1e8] sm:$0xff] 0.0
        %1813 = vst [vmem:[#allocation4 + $0x1f0] sm:$0xff] 0.0
        %1814 = vst [vmem:[#allocation4 + $0x1f8] sm:$0xff] 0.0
        %1815 = vst [vmem:[#allocation4 + $0x200] sm:$0xff] 0.0
        %1816 = vst [vmem:[#allocation4 + $0x208] sm:$0xff] 0.0
        %1817 = vst [vmem:[#allocation4 + $0x210] sm:$0xff] 0.0
        %1818 = vst [vmem:[#allocation4 + $0x218] sm:$0xff] 0.0
        %1819 = vst [vmem:[#allocation4 + $0x220] sm:$0xff] 0.0
        %1820 = vst [vmem:[#allocation4 + $0x228] sm:$0xff] 0.0
        %1821 = vst [vmem:[#allocation4 + $0x230] sm:$0xff] 0.0
        %1822 = vst [vmem:[#allocation4 + $0x238] sm:$0xff] 0.0
        %v1831 = vmul.f32 %v1743, %v899
        %v1832 = vmul.f32 %v1744, %v903
        %v1833 = vmul.f32 %v1745, %v907
        %v1834 = vmul.f32 %v1746, %v911
        %v1835 = vmul.f32 %v1747, %v915
        %v1836 = vmul.f32 %v1748, %v919
        %v1837 = vmul.f32 %v1749, %v923
        %v1838 = vmul.f32 %v1750, %v927
        %v1847 = vmul.f32 %v1743, %v944
        %v1848 = vmul.f32 %v1744, %v948
        %v1849 = vmul.f32 %v1745, %v952
        %v1850 = vmul.f32 %v1746, %v956
        %v1851 = vmul.f32 %v1747, %v960
        %v1852 = vmul.f32 %v1748, %v964
        %v1853 = vmul.f32 %v1749, %v968
        %v1854 = vmul.f32 %v1750, %v972
        %1863 = vrot.lane.b32.xlu0 %v1847, 33
        %v1864 = vpop.permute.xlu0 %1863
        %1865 = vrot.lane.b32.xlu0 %v1848, 33
        %v1866 = vpop.permute.xlu0 %1865
        %1867 = vrot.lane.b32.xlu0 %v1849, 33
        %v1868 = vpop.permute.xlu0 %1867
        %1869 = vrot.lane.b32.xlu0 %v1850, 33
        %v1870 = vpop.permute.xlu0 %1869
        %1871 = vrot.lane.b32.xlu0 %v1851, 33
        %v1872 = vpop.permute.xlu0 %1871
        %1873 = vrot.lane.b32.xlu0 %v1852, 33
        %v1874 = vpop.permute.xlu0 %1873
        %1875 = vrot.lane.b32.xlu0 %v1853, 33
        %v1876 = vpop.permute.xlu0 %1875
        %1877 = vrot.lane.b32.xlu0 %v1854, 33
        %v1878 = vpop.permute.xlu0 %1877
        %v1879 = vsel %vm1009, %v1864, %v1866
        %v1880 = vsel %vm1009, %v1866, %v1868
        %v1881 = vsel %vm1009, %v1868, %v1870
        %v1882 = vsel %vm1009, %v1870, %v1872
        %v1883 = vsel %vm1009, %v1872, %v1874
        %v1884 = vsel %vm1009, %v1874, %v1876
        %v1885 = vsel %vm1009, %v1876, %v1878
        %vm1894 = vcmask 1047816
        %1895 = vst.msk [vmem:[#allocation4] sm:$0xff] %vm1894, %v1864
        %1896 = vst [vmem:[#allocation4 + $0x8] sm:$0xff] %v1879
        %1897 = vst [vmem:[#allocation4 + $0x10] sm:$0xff] %v1880
        %1898 = vst [vmem:[#allocation4 + $0x18] sm:$0xff] %v1881
        %1899 = vst [vmem:[#allocation4 + $0x20] sm:$0xff] %v1882
        %1900 = vst [vmem:[#allocation4 + $0x28] sm:$0xff] %v1883
        %1901 = vst [vmem:[#allocation4 + $0x30] sm:$0xff] %v1884
        %1902 = vst [vmem:[#allocation4 + $0x38] sm:$0xff] %v1885
        %1903 = vrot.lane.b32.xlu0 %v1847, 1
        %v1904 = vpop.permute.xlu0 %1903
        %1905 = vrot.lane.b32.xlu0 %v1848, 1
        %v1906 = vpop.permute.xlu0 %1905
        %1907 = vrot.lane.b32.xlu0 %v1849, 1
        %v1908 = vpop.permute.xlu0 %1907
        %1909 = vrot.lane.b32.xlu0 %v1850, 1
        %v1910 = vpop.permute.xlu0 %1909
        %1911 = vrot.lane.b32.xlu0 %v1851, 1
        %v1912 = vpop.permute.xlu0 %1911
        %1913 = vrot.lane.b32.xlu0 %v1852, 1
        %v1914 = vpop.permute.xlu0 %1913
        %1915 = vrot.lane.b32.xlu0 %v1853, 1
        %v1916 = vpop.permute.xlu0 %1915
        %1917 = vrot.lane.b32.xlu0 %v1854, 1
        %v1918 = vpop.permute.xlu0 %1917
        %v1919 = vsel %vm1054, %v1904, %v1906
        %v1920 = vsel %vm1054, %v1906, %v1908
        %v1921 = vsel %vm1054, %v1908, %v1910
        %v1922 = vsel %vm1054, %v1910, %v1912
        %v1923 = vsel %vm1054, %v1912, %v1914
        %v1924 = vsel %vm1054, %v1914, %v1916
        %v1925 = vsel %vm1054, %v1916, %v1918
        %vm1934 = vcmask 1047560
        %1935 = vst.msk [vmem:[#allocation4 + $0x40] sm:$0xff] %vm1934, %v1904
        %1936 = vst [vmem:[#allocation4 + $0x48] sm:$0xff] %v1919
        %1937 = vst [vmem:[#allocation4 + $0x50] sm:$0xff] %v1920
        %1938 = vst [vmem:[#allocation4 + $0x58] sm:$0xff] %v1921
        %1939 = vst [vmem:[#allocation4 + $0x60] sm:$0xff] %v1922
        %1940 = vst [vmem:[#allocation4 + $0x68] sm:$0xff] %v1923
        %1941 = vst [vmem:[#allocation4 + $0x70] sm:$0xff] %v1924
        %1942 = vst [vmem:[#allocation4 + $0x78] sm:$0xff] %v1925
        %1943 = vrot.lane.b32.xlu0 %v1847, 97
        %v1944 = vpop.permute.xlu0 %1943
        %1945 = vrot.lane.b32.xlu0 %v1848, 97
        %v1946 = vpop.permute.xlu0 %1945
        %1947 = vrot.lane.b32.xlu0 %v1849, 97
        %v1948 = vpop.permute.xlu0 %1947
        %1949 = vrot.lane.b32.xlu0 %v1850, 97
        %v1950 = vpop.permute.xlu0 %1949
        %1951 = vrot.lane.b32.xlu0 %v1851, 97
        %v1952 = vpop.permute.xlu0 %1951
        %1953 = vrot.lane.b32.xlu0 %v1852, 97
        %v1954 = vpop.permute.xlu0 %1953
        %1955 = vrot.lane.b32.xlu0 %v1853, 97
        %v1956 = vpop.permute.xlu0 %1955
        %1957 = vrot.lane.b32.xlu0 %v1854, 97
        %v1958 = vpop.permute.xlu0 %1957
        %v1959 = vsel %vm1095, %v1944, %v1946
        %v1960 = vsel %vm1095, %v1946, %v1948
        %v1961 = vsel %vm1095, %v1948, %v1950
        %v1962 = vsel %vm1095, %v1950, %v1952
        %v1963 = vsel %vm1095, %v1952, %v1954
        %v1964 = vsel %vm1095, %v1954, %v1956
        %v1965 = vsel %vm1095, %v1956, %v1958
        %1974 = vst [vmem:[#allocation4 + $0x80] sm:$0xff] %v1959
        %1975 = vst [vmem:[#allocation4 + $0x88] sm:$0xff] %v1960
        %1976 = vst [vmem:[#allocation4 + $0x90] sm:$0xff] %v1961
        %1977 = vst [vmem:[#allocation4 + $0x98] sm:$0xff] %v1962
        %1978 = vst [vmem:[#allocation4 + $0xa0] sm:$0xff] %v1963
        %1979 = vst [vmem:[#allocation4 + $0xa8] sm:$0xff] %v1964
        %1980 = vst [vmem:[#allocation4 + $0xb0] sm:$0xff] %v1965
        %1981 = vst.msk [vmem:[#allocation4 + $0xb8] sm:$0xff] %vm1095, %v1958
        %1990 = vrot.lane.b32.xlu0 %v1743, 32
        %v1991 = vpop.permute.xlu0 %1990
        %1992 = vrot.lane.b32.xlu0 %v1744, 32
        %v1993 = vpop.permute.xlu0 %1992
        %1994 = vrot.lane.b32.xlu0 %v1745, 32
        %v1995 = vpop.permute.xlu0 %1994
        %1996 = vrot.lane.b32.xlu0 %v1746, 32
        %v1997 = vpop.permute.xlu0 %1996
        %1998 = vrot.lane.b32.xlu0 %v1747, 32
        %v1999 = vpop.permute.xlu0 %1998
        %2000 = vrot.lane.b32.xlu0 %v1748, 32
        %v2001 = vpop.permute.xlu0 %2000
        %2002 = vrot.lane.b32.xlu0 %v1749, 32
        %v2003 = vpop.permute.xlu0 %2002
        %2004 = vrot.lane.b32.xlu0 %v1750, 32
        %v2005 = vpop.permute.xlu0 %2004
        %v2006 = vsel %vm1144, %v1991, %v1993
        %v2007 = vsel %vm1144, %v1993, %v1995
        %v2008 = vsel %vm1144, %v1995, %v1997
        %v2009 = vsel %vm1144, %v1997, %v1999
        %v2010 = vsel %vm1144, %v1999, %v2001
        %v2011 = vsel %vm1144, %v2001, %v2003
        %v2012 = vsel %vm1144, %v2003, %v2005
        %vm2021 = vcmask 1047808
        %2022 = vst.msk [vmem:[#allocation4 + $0xc0] sm:$0xff] %vm2021, %v1991
        %2023 = vst [vmem:[#allocation4 + $0xc8] sm:$0xff] %v2006
        %2024 = vst [vmem:[#allocation4 + $0xd0] sm:$0xff] %v2007
        %2025 = vst [vmem:[#allocation4 + $0xd8] sm:$0xff] %v2008
        %2026 = vst [vmem:[#allocation4 + $0xe0] sm:$0xff] %v2009
        %2027 = vst [vmem:[#allocation4 + $0xe8] sm:$0xff] %v2010
        %2028 = vst [vmem:[#allocation4 + $0xf0] sm:$0xff] %v2011
        %2029 = vst [vmem:[#allocation4 + $0xf8] sm:$0xff] %v2012
        %2030 = vst [vmem:[#allocation4 + $0x100] sm:$0xff] %v1743
        %2031 = vst [vmem:[#allocation4 + $0x108] sm:$0xff] %v1744
        %2032 = vst [vmem:[#allocation4 + $0x110] sm:$0xff] %v1745
        %2033 = vst [vmem:[#allocation4 + $0x118] sm:$0xff] %v1746
        %2034 = vst [vmem:[#allocation4 + $0x120] sm:$0xff] %v1747
        %2035 = vst [vmem:[#allocation4 + $0x128] sm:$0xff] %v1748
        %2036 = vst [vmem:[#allocation4 + $0x130] sm:$0xff] %v1749
        %2037 = vst [vmem:[#allocation4 + $0x138] sm:$0xff] %v1750
        %2038 = vrot.lane.b32.xlu0 %v1743, 96
        %v2039 = vpop.permute.xlu0 %2038
        %2040 = vrot.lane.b32.xlu0 %v1744, 96
        %v2041 = vpop.permute.xlu0 %2040
        %2042 = vrot.lane.b32.xlu0 %v1745, 96
        %v2043 = vpop.permute.xlu0 %2042
        %2044 = vrot.lane.b32.xlu0 %v1746, 96
        %v2045 = vpop.permute.xlu0 %2044
        %2046 = vrot.lane.b32.xlu0 %v1747, 96
        %v2047 = vpop.permute.xlu0 %2046
        %2048 = vrot.lane.b32.xlu0 %v1748, 96
        %v2049 = vpop.permute.xlu0 %2048
        %2050 = vrot.lane.b32.xlu0 %v1749, 96
        %v2051 = vpop.permute.xlu0 %2050
        %2052 = vrot.lane.b32.xlu0 %v1750, 96
        %v2053 = vpop.permute.xlu0 %2052
        %v2054 = vsel %vm1201, %v2039, %v2041
        %v2055 = vsel %vm1201, %v2041, %v2043
        %v2056 = vsel %vm1201, %v2043, %v2045
        %v2057 = vsel %vm1201, %v2045, %v2047
        %v2058 = vsel %vm1201, %v2047, %v2049
        %v2059 = vsel %vm1201, %v2049, %v2051
        %v2060 = vsel %vm1201, %v2051, %v2053
        %2069 = vst [vmem:[#allocation4 + $0x140] sm:$0xff] %v2054
        %2070 = vst [vmem:[#allocation4 + $0x148] sm:$0xff] %v2055
        %2071 = vst [vmem:[#allocation4 + $0x150] sm:$0xff] %v2056
        %2072 = vst [vmem:[#allocation4 + $0x158] sm:$0xff] %v2057
        %2073 = vst [vmem:[#allocation4 + $0x160] sm:$0xff] %v2058
        %2074 = vst [vmem:[#allocation4 + $0x168] sm:$0xff] %v2059
        %2075 = vst [vmem:[#allocation4 + $0x170] sm:$0xff] %v2060
        %2076 = vst.msk [vmem:[#allocation4 + $0x178] sm:$0xff] %vm1201, %v2053
        %2085 = vrot.lane.b32.xlu0 %v1831, 31
        %v2086 = vpop.permute.xlu0 %2085
        %2087 = vrot.lane.b32.xlu0 %v1832, 31
        %v2088 = vpop.permute.xlu0 %2087
        %2089 = vrot.lane.b32.xlu0 %v1833, 31
        %v2090 = vpop.permute.xlu0 %2089
        %2091 = vrot.lane.b32.xlu0 %v1834, 31
        %v2092 = vpop.permute.xlu0 %2091
        %2093 = vrot.lane.b32.xlu0 %v1835, 31
        %v2094 = vpop.permute.xlu0 %2093
        %2095 = vrot.lane.b32.xlu0 %v1836, 31
        %v2096 = vpop.permute.xlu0 %2095
        %2097 = vrot.lane.b32.xlu0 %v1837, 31
        %v2098 = vpop.permute.xlu0 %2097
        %2099 = vrot.lane.b32.xlu0 %v1838, 31
        %v2100 = vpop.permute.xlu0 %2099
        %v2101 = vsel %vm1250, %v2086, %v2088
        %v2102 = vsel %vm1250, %v2088, %v2090
        %v2103 = vsel %vm1250, %v2090, %v2092
        %v2104 = vsel %vm1250, %v2092, %v2094
        %v2105 = vsel %vm1250, %v2094, %v2096
        %v2106 = vsel %vm1250, %v2096, %v2098
        %v2107 = vsel %vm1250, %v2098, %v2100
        %vm2116 = vcmask 1047800
        %2117 = vst.msk [vmem:[#allocation4 + $0x180] sm:$0xff] %vm2116, %v2086
        %2118 = vst [vmem:[#allocation4 + $0x188] sm:$0xff] %v2101
        %2119 = vst [vmem:[#allocation4 + $0x190] sm:$0xff] %v2102
        %2120 = vst [vmem:[#allocation4 + $0x198] sm:$0xff] %v2103
        %2121 = vst [vmem:[#allocation4 + $0x1a0] sm:$0xff] %v2104
        %2122 = vst [vmem:[#allocation4 + $0x1a8] sm:$0xff] %v2105
        %2123 = vst [vmem:[#allocation4 + $0x1b0] sm:$0xff] %v2106
        %2124 = vst [vmem:[#allocation4 + $0x1b8] sm:$0xff] %v2107
        %2125 = vrot.lane.b32.xlu0 %v1831, 127
        %v2126 = vpop.permute.xlu0 %2125
        %2127 = vrot.lane.b32.xlu0 %v1832, 127
        %v2128 = vpop.permute.xlu0 %2127
        %2129 = vrot.lane.b32.xlu0 %v1833, 127
        %v2130 = vpop.permute.xlu0 %2129
        %2131 = vrot.lane.b32.xlu0 %v1834, 127
        %v2132 = vpop.permute.xlu0 %2131
        %2133 = vrot.lane.b32.xlu0 %v1835, 127
        %v2134 = vpop.permute.xlu0 %2133
        %2135 = vrot.lane.b32.xlu0 %v1836, 127
        %v2136 = vpop.permute.xlu0 %2135
        %2137 = vrot.lane.b32.xlu0 %v1837, 127
        %v2138 = vpop.permute.xlu0 %2137
        %2139 = vrot.lane.b32.xlu0 %v1838, 127
        %v2140 = vpop.permute.xlu0 %2139
        %v2141 = vsel %vm1295, %v2126, %v2128
        %v2142 = vsel %vm1295, %v2128, %v2130
        %v2143 = vsel %vm1295, %v2130, %v2132
        %v2144 = vsel %vm1295, %v2132, %v2134
        %v2145 = vsel %vm1295, %v2134, %v2136
        %v2146 = vsel %vm1295, %v2136, %v2138
        %v2147 = vsel %vm1295, %v2138, %v2140
        %2156 = vst [vmem:[#allocation4 + $0x1c0] sm:$0xff] %v2141
        %2157 = vst [vmem:[#allocation4 + $0x1c8] sm:$0xff] %v2142
        %2158 = vst [vmem:[#allocation4 + $0x1d0] sm:$0xff] %v2143
        %2159 = vst [vmem:[#allocation4 + $0x1d8] sm:$0xff] %v2144
        %2160 = vst [vmem:[#allocation4 + $0x1e0] sm:$0xff] %v2145
        %2161 = vst [vmem:[#allocation4 + $0x1e8] sm:$0xff] %v2146
        %2162 = vst [vmem:[#allocation4 + $0x1f0] sm:$0xff] %v2147
        %2163 = vst.msk [vmem:[#allocation4 + $0x1f8] sm:$0xff] %vm1295, %v2140
        %2164 = vrot.lane.b32.xlu0 %v1831, 95
        %v2165 = vpop.permute.xlu0 %2164
        %2166 = vrot.lane.b32.xlu0 %v1832, 95
        %v2167 = vpop.permute.xlu0 %2166
        %2168 = vrot.lane.b32.xlu0 %v1833, 95
        %v2169 = vpop.permute.xlu0 %2168
        %2170 = vrot.lane.b32.xlu0 %v1834, 95
        %v2171 = vpop.permute.xlu0 %2170
        %2172 = vrot.lane.b32.xlu0 %v1835, 95
        %v2173 = vpop.permute.xlu0 %2172
        %2174 = vrot.lane.b32.xlu0 %v1836, 95
        %v2175 = vpop.permute.xlu0 %2174
        %2176 = vrot.lane.b32.xlu0 %v1837, 95
        %v2177 = vpop.permute.xlu0 %2176
        %2178 = vrot.lane.b32.xlu0 %v1838, 95
        %v2179 = vpop.permute.xlu0 %2178
        %v2180 = vsel %vm1336, %v2165, %v2167
        %v2181 = vsel %vm1336, %v2167, %v2169
        %v2182 = vsel %vm1336, %v2169, %v2171
        %v2183 = vsel %vm1336, %v2171, %v2173
        %v2184 = vsel %vm1336, %v2173, %v2175
        %v2185 = vsel %vm1336, %v2175, %v2177
        %v2186 = vsel %vm1336, %v2177, %v2179
        %2195 = vst [vmem:[#allocation4 + $0x200] sm:$0xff] %v2180
        %2196 = vst [vmem:[#allocation4 + $0x208] sm:$0xff] %v2181
        %2197 = vst [vmem:[#allocation4 + $0x210] sm:$0xff] %v2182
        %2198 = vst [vmem:[#allocation4 + $0x218] sm:$0xff] %v2183
        %2199 = vst [vmem:[#allocation4 + $0x220] sm:$0xff] %v2184
        %2200 = vst [vmem:[#allocation4 + $0x228] sm:$0xff] %v2185
        %2201 = vst [vmem:[#allocation4 + $0x230] sm:$0xff] %v2186
        %2202 = vst.msk [vmem:[#allocation4 + $0x238] sm:$0xff] %vm1336, %v2179
        %v2203 = vld [vmem:[%s7] sm:$0xff]
        %v2204 = vld [vmem:[#allocation4] sm:$0xff]
        %v2205 = vld [vmem:[#allocation4 + $0x8] sm:$0xff]
        %v2206 = vld [vmem:[#allocation4 + $0x10] sm:$0xff]
        %v2207 = vld [vmem:[#allocation4 + $0x18] sm:$0xff]
        %v2208 = vld [vmem:[#allocation4 + $0x20] sm:$0xff]
        %v2209 = vld [vmem:[#allocation4 + $0x28] sm:$0xff]
        %v2210 = vld [vmem:[#allocation4 + $0x30] sm:$0xff]
        %v2211 = vld [vmem:[#allocation4 + $0x38] sm:$0xff]
        %v2212 = vld [vmem:[#allocation4 + $0x40] sm:$0xff]
        %v2213 = vld [vmem:[#allocation4 + $0x48] sm:$0xff]
        %v2214 = vld [vmem:[#allocation4 + $0x50] sm:$0xff]
        %v2215 = vld [vmem:[#allocation4 + $0x58] sm:$0xff]
        %v2216 = vld [vmem:[#allocation4 + $0x60] sm:$0xff]
        %v2217 = vld [vmem:[#allocation4 + $0x68] sm:$0xff]
        %v2218 = vld [vmem:[#allocation4 + $0x70] sm:$0xff]
        %v2219 = vld [vmem:[#allocation4 + $0x78] sm:$0xff]
        %v2220 = vld [vmem:[#allocation4 + $0x80] sm:$0xff]
        %v2221 = vld [vmem:[#allocation4 + $0x88] sm:$0xff]
        %v2222 = vld [vmem:[#allocation4 + $0x90] sm:$0xff]
        %v2223 = vld [vmem:[#allocation4 + $0x98] sm:$0xff]
        %v2224 = vld [vmem:[#allocation4 + $0xa0] sm:$0xff]
        %v2225 = vld [vmem:[#allocation4 + $0xa8] sm:$0xff]
        %v2226 = vld [vmem:[#allocation4 + $0xb0] sm:$0xff]
        %v2227 = vld [vmem:[#allocation4 + $0xb8] sm:$0xff]
        %v2228 = vld [vmem:[#allocation4 + $0xc0] sm:$0xff]
        %v2229 = vld [vmem:[#allocation4 + $0xc8] sm:$0xff]
        %v2230 = vld [vmem:[#allocation4 + $0xd0] sm:$0xff]
        %v2231 = vld [vmem:[#allocation4 + $0xd8] sm:$0xff]
        %v2232 = vld [vmem:[#allocation4 + $0xe0] sm:$0xff]
        %v2233 = vld [vmem:[#allocation4 + $0xe8] sm:$0xff]
        %v2234 = vld [vmem:[#allocation4 + $0xf0] sm:$0xff]
        %v2235 = vld [vmem:[#allocation4 + $0xf8] sm:$0xff]
        %v2236 = vld [vmem:[#allocation4 + $0x100] sm:$0xff]
        %v2237 = vld [vmem:[#allocation4 + $0x108] sm:$0xff]
        %v2238 = vld [vmem:[#allocation4 + $0x110] sm:$0xff]
        %v2239 = vld [vmem:[#allocation4 + $0x118] sm:$0xff]
        %v2240 = vld [vmem:[#allocation4 + $0x120] sm:$0xff]
        %v2241 = vld [vmem:[#allocation4 + $0x128] sm:$0xff]
        %v2242 = vld [vmem:[#allocation4 + $0x130] sm:$0xff]
        %v2243 = vld [vmem:[#allocation4 + $0x138] sm:$0xff]
        %v2244 = vld [vmem:[#allocation4 + $0x140] sm:$0xff]
        %v2245 = vld [vmem:[#allocation4 + $0x148] sm:$0xff]
        %v2246 = vld [vmem:[#allocation4 + $0x150] sm:$0xff]
        %v2247 = vld [vmem:[#allocation4 + $0x158] sm:$0xff]
        %v2248 = vld [vmem:[#allocation4 + $0x160] sm:$0xff]
        %v2249 = vld [vmem:[#allocation4 + $0x168] sm:$0xff]
        %v2250 = vld [vmem:[#allocation4 + $0x170] sm:$0xff]
        %v2251 = vld [vmem:[#allocation4 + $0x178] sm:$0xff]
        %v2252 = vld [vmem:[#allocation4 + $0x180] sm:$0xff]
        %v2253 = vld [vmem:[#allocation4 + $0x188] sm:$0xff]
        %v2254 = vld [vmem:[#allocation4 + $0x190] sm:$0xff]
        %v2255 = vld [vmem:[#allocation4 + $0x198] sm:$0xff]
        %v2256 = vld [vmem:[#allocation4 + $0x1a0] sm:$0xff]
        %v2257 = vld [vmem:[#allocation4 + $0x1a8] sm:$0xff]
        %v2258 = vld [vmem:[#allocation4 + $0x1b0] sm:$0xff]
        %v2259 = vld [vmem:[#allocation4 + $0x1b8] sm:$0xff]
        %v2260 = vld [vmem:[#allocation4 + $0x1c0] sm:$0xff]
        %v2261 = vld [vmem:[#allocation4 + $0x1c8] sm:$0xff]
        %v2262 = vld [vmem:[#allocation4 + $0x1d0] sm:$0xff]
        %v2263 = vld [vmem:[#allocation4 + $0x1d8] sm:$0xff]
        %v2264 = vld [vmem:[#allocation4 + $0x1e0] sm:$0xff]
        %v2265 = vld [vmem:[#allocation4 + $0x1e8] sm:$0xff]
        %v2266 = vld [vmem:[#allocation4 + $0x1f0] sm:$0xff]
        %v2267 = vld [vmem:[#allocation4 + $0x1f8] sm:$0xff]
        %v2268 = vld [vmem:[#allocation4 + $0x200] sm:$0xff]
        %v2269 = vld [vmem:[#allocation4 + $0x208] sm:$0xff]
        %v2270 = vld [vmem:[#allocation4 + $0x210] sm:$0xff]
        %v2271 = vld [vmem:[#allocation4 + $0x218] sm:$0xff]
        %v2272 = vld [vmem:[#allocation4 + $0x220] sm:$0xff]
        %v2273 = vld [vmem:[#allocation4 + $0x228] sm:$0xff]
        %v2274 = vld [vmem:[#allocation4 + $0x230] sm:$0xff]
        %v2275 = vld [vmem:[#allocation4 + $0x238] sm:$0xff]
        %vm2276 = vcmask 588800
        %v2278 = vsel %vm2276, %v2203, 0
        %2280 = vmatprep.subr.mxu0 0.0
        %2281 = vmatpush1.msra.mxu0 0.0
        %2282 = vmatprep.subr.mxu0 0.0
        %2283 = vmatpush1.msra.mxu0 0.0
        %2284 = vmatprep.subr.mxu0 0.0
        %2285 = vmatpush1.msra.mxu0 0.0
        %2286 = vmatprep.subr.mxu0 0.0
        %2287 = vmatpush1.msra.mxu0 0.0
        %2288 = vmatprep.subr.mxu0 0.0
        %2289 = vmatpush1.msra.mxu0 0.0
        %2290 = vmatprep.subr.mxu0 0.0
        %2291 = vmatpush1.msra.mxu0 0.0
        %2292 = vmatprep.subr.mxu0 0.0
        %2293 = vmatpush1.msra.mxu0 0.0
        %2294 = vmatprep.subr.mxu0 %v2269
        %2295 = vmatpush1.msra.mxu0 %v2268
        %2296 = vmatprep.subr.mxu0 %v2261
        %2297 = vmatpush1.msra.mxu0 %v2260
        %2298 = vmatprep.subr.mxu0 %v2253
        %2299 = vmatpush1.msra.mxu0 %v2252
        %2300 = vmatprep.subr.mxu0 %v2245
        %2301 = vmatpush1.msra.mxu0 %v2244
        %2302 = vmatprep.subr.mxu0 %v2237
        %2303 = vmatpush1.msra.mxu0 %v2236
        %2304 = vmatprep.subr.mxu0 %v2229
        %2305 = vmatpush1.msra.mxu0 %v2228
        %2306 = vmatprep.subr.mxu0 %v2221
        %2307 = vmatpush1.msra.mxu0 %v2220
        %2308 = vmatprep.subr.mxu0 %v2213
        %2309 = vmatpush1.msra.mxu0 %v2212
        %2310 = vmatprep.subr.mxu0 %v2205
        %2311 = vmatpush1.msra.mxu0 %v2204
        %2312 = vmatprep.subr.mxu0 0.0
        %2313 = vmatpush2.msra.mxu0 0.0
        %2314 = vmatprep.subr.mxu0 0.0
        %2315 = vmatpush2.msra.mxu0 0.0
        %2316 = vmatprep.subr.mxu0 0.0
        %2317 = vmatpush2.msra.mxu0 0.0
        %2318 = vmatprep.subr.mxu0 0.0
        %2319 = vmatpush2.msra.mxu0 0.0
        %2320 = vmatprep.subr.mxu0 0.0
        %2321 = vmatpush2.msra.mxu0 0.0
        %2322 = vmatprep.subr.mxu0 0.0
        %2323 = vmatpush2.msra.mxu0 0.0
        %2324 = vmatprep.subr.mxu0 0.0
        %2325 = vmatpush2.msra.mxu0 0.0
        %2326 = vmatprep.subr.mxu0 0.0
        %2327 = vmatpush2.msra.mxu0 0.0
        %2328 = vmatprep.subr.mxu0 0.0
        %2329 = vmatpush2.msra.mxu0 0.0
        %2330 = vmatprep.subr.mxu0 0.0
        %2331 = vmatpush2.msra.mxu0 0.0
        %2332 = vmatprep.subr.mxu0 0.0
        %2333 = vmatpush2.msra.mxu0 0.0
        %2334 = vmatprep.subr.mxu0 0.0
        %2335 = vmatpush2.msra.mxu0 0.0
        %2336 = vmatprep.subr.mxu0 0.0
        %2337 = vmatpush2.msra.mxu0 0.0
        %2338 = vmatprep.subr.mxu0 0.0
        %2339 = vmatpush2.msra.mxu0 0.0
        %2340 = vmatprep.subr.mxu0 0.0
        %2341 = vmatpush2.msra.mxu0 0.0
        %2342 = vmatprep.subr.mxu0 0.0
        %2343 = vmatpush2.msra.mxu0 0.0
        %2344 = vmatprep.mubr.f32.mxu0 0.0
        %2345 = vmatmul.mubr.f32.gmra.mxu0 %v2278
        %v2346 = vpop.f32.mrf.mxu0
        %v2347 = vadd.f32 0.0, %v2346
        %v2348 = vpop.f32.mrf.mxu0
        %v2349 = vadd.f32 0.0, %v2348
        %2350 = vdwg.mxu0
        %2351 = vmatprep.subr.mxu0 0.0
        %2352 = vmatpush1.msra.mxu0 0.0
        %2353 = vmatprep.subr.mxu0 0.0
        %2354 = vmatpush1.msra.mxu0 0.0
        %2355 = vmatprep.subr.mxu0 0.0
        %2356 = vmatpush1.msra.mxu0 0.0
        %2357 = vmatprep.subr.mxu0 0.0
        %2358 = vmatpush1.msra.mxu0 0.0
        %2359 = vmatprep.subr.mxu0 0.0
        %2360 = vmatpush1.msra.mxu0 0.0
        %2361 = vmatprep.subr.mxu0 0.0
        %2362 = vmatpush1.msra.mxu0 0.0
        %2363 = vmatprep.subr.mxu0 0.0
        %2364 = vmatpush1.msra.mxu0 0.0
        %2365 = vmatprep.subr.mxu0 %v2271
        %2366 = vmatpush1.msra.mxu0 %v2270
        %2367 = vmatprep.subr.mxu0 %v2263
        %2368 = vmatpush1.msra.mxu0 %v2262
        %2369 = vmatprep.subr.mxu0 %v2255
        %2370 = vmatpush1.msra.mxu0 %v2254
        %2371 = vmatprep.subr.mxu0 %v2247
        %2372 = vmatpush1.msra.mxu0 %v2246
        %2373 = vmatprep.subr.mxu0 %v2239
        %2374 = vmatpush1.msra.mxu0 %v2238
        %2375 = vmatprep.subr.mxu0 %v2231
        %2376 = vmatpush1.msra.mxu0 %v2230
        %2377 = vmatprep.subr.mxu0 %v2223
        %2378 = vmatpush1.msra.mxu0 %v2222
        %2379 = vmatprep.subr.mxu0 %v2215
        %2380 = vmatpush1.msra.mxu0 %v2214
        %2381 = vmatprep.subr.mxu0 %v2207
        %2382 = vmatpush1.msra.mxu0 %v2206
        %2383 = vmatprep.subr.mxu0 0.0
        %2384 = vmatpush2.msra.mxu0 0.0
        %2385 = vmatprep.subr.mxu0 0.0
        %2386 = vmatpush2.msra.mxu0 0.0
        %2387 = vmatprep.subr.mxu0 0.0
        %2388 = vmatpush2.msra.mxu0 0.0
        %2389 = vmatprep.subr.mxu0 0.0
        %2390 = vmatpush2.msra.mxu0 0.0
        %2391 = vmatprep.subr.mxu0 0.0
        %2392 = vmatpush2.msra.mxu0 0.0
        %2393 = vmatprep.subr.mxu0 0.0
        %2394 = vmatpush2.msra.mxu0 0.0
        %2395 = vmatprep.subr.mxu0 0.0
        %2396 = vmatpush2.msra.mxu0 0.0
        %2397 = vmatprep.subr.mxu0 0.0
        %2398 = vmatpush2.msra.mxu0 0.0
        %2399 = vmatprep.subr.mxu0 0.0
        %2400 = vmatpush2.msra.mxu0 0.0
        %2401 = vmatprep.subr.mxu0 0.0
        %2402 = vmatpush2.msra.mxu0 0.0
        %2403 = vmatprep.subr.mxu0 0.0
        %2404 = vmatpush2.msra.mxu0 0.0
        %2405 = vmatprep.subr.mxu0 0.0
        %2406 = vmatpush2.msra.mxu0 0.0
        %2407 = vmatprep.subr.mxu0 0.0
        %2408 = vmatpush2.msra.mxu0 0.0
        %2409 = vmatprep.subr.mxu0 0.0
        %2410 = vmatpush2.msra.mxu0 0.0
        %2411 = vmatprep.subr.mxu0 0.0
        %2412 = vmatpush2.msra.mxu0 0.0
        %2413 = vmatprep.subr.mxu0 0.0
        %2414 = vmatpush2.msra.mxu0 0.0
        %2415 = vmatprep.mubr.f32.mxu0 0.0
        %2416 = vmatmul.mubr.f32.gmra.mxu0 %v2278
        %v2417 = vpop.f32.mrf.mxu0
        %v2418 = vadd.f32 0.0, %v2417
        %v2419 = vpop.f32.mrf.mxu0
        %v2420 = vadd.f32 0.0, %v2419
        %2421 = vdwg.mxu0
        %2422 = vmatprep.subr.mxu0 0.0
        %2423 = vmatpush1.msra.mxu0 0.0
        %2424 = vmatprep.subr.mxu0 0.0
        %2425 = vmatpush1.msra.mxu0 0.0
        %2426 = vmatprep.subr.mxu0 0.0
        %2427 = vmatpush1.msra.mxu0 0.0
        %2428 = vmatprep.subr.mxu0 0.0
        %2429 = vmatpush1.msra.mxu0 0.0
        %2430 = vmatprep.subr.mxu0 0.0
        %2431 = vmatpush1.msra.mxu0 0.0
        %2432 = vmatprep.subr.mxu0 0.0
        %2433 = vmatpush1.msra.mxu0 0.0
        %2434 = vmatprep.subr.mxu0 0.0
        %2435 = vmatpush1.msra.mxu0 0.0
        %2436 = vmatprep.subr.mxu0 %v2273
        %2437 = vmatpush1.msra.mxu0 %v2272
        %2438 = vmatprep.subr.mxu0 %v2265
        %2439 = vmatpush1.msra.mxu0 %v2264
        %2440 = vmatprep.subr.mxu0 %v2257
        %2441 = vmatpush1.msra.mxu0 %v2256
        %2442 = vmatprep.subr.mxu0 %v2249
        %2443 = vmatpush1.msra.mxu0 %v2248
        %2444 = vmatprep.subr.mxu0 %v2241
        %2445 = vmatpush1.msra.mxu0 %v2240
        %2446 = vmatprep.subr.mxu0 %v2233
        %2447 = vmatpush1.msra.mxu0 %v2232
        %2448 = vmatprep.subr.mxu0 %v2225
        %2449 = vmatpush1.msra.mxu0 %v2224
        %2450 = vmatprep.subr.mxu0 %v2217
        %2451 = vmatpush1.msra.mxu0 %v2216
        %2452 = vmatprep.subr.mxu0 %v2209
        %2453 = vmatpush1.msra.mxu0 %v2208
        %2454 = vmatprep.subr.mxu0 0.0
        %2455 = vmatpush2.msra.mxu0 0.0
        %2456 = vmatprep.subr.mxu0 0.0
        %2457 = vmatpush2.msra.mxu0 0.0
        %2458 = vmatprep.subr.mxu0 0.0
        %2459 = vmatpush2.msra.mxu0 0.0
        %2460 = vmatprep.subr.mxu0 0.0
        %2461 = vmatpush2.msra.mxu0 0.0
        %2462 = vmatprep.subr.mxu0 0.0
        %2463 = vmatpush2.msra.mxu0 0.0
        %2464 = vmatprep.subr.mxu0 0.0
        %2465 = vmatpush2.msra.mxu0 0.0
        %2466 = vmatprep.subr.mxu0 0.0
        %2467 = vmatpush2.msra.mxu0 0.0
        %2468 = vmatprep.subr.mxu0 0.0
        %2469 = vmatpush2.msra.mxu0 0.0
        %2470 = vmatprep.subr.mxu0 0.0
        %2471 = vmatpush2.msra.mxu0 0.0
        %2472 = vmatprep.subr.mxu0 0.0
        %2473 = vmatpush2.msra.mxu0 0.0
        %2474 = vmatprep.subr.mxu0 0.0
        %2475 = vmatpush2.msra.mxu0 0.0
        %2476 = vmatprep.subr.mxu0 0.0
        %2477 = vmatpush2.msra.mxu0 0.0
        %2478 = vmatprep.subr.mxu0 0.0
        %2479 = vmatpush2.msra.mxu0 0.0
        %2480 = vmatprep.subr.mxu0 0.0
        %2481 = vmatpush2.msra.mxu0 0.0
        %2482 = vmatprep.subr.mxu0 0.0
        %2483 = vmatpush2.msra.mxu0 0.0
        %2484 = vmatprep.subr.mxu0 0.0
        %2485 = vmatpush2.msra.mxu0 0.0
        %2486 = vmatprep.mubr.f32.mxu0 0.0
        %2487 = vmatmul.mubr.f32.gmra.mxu0 %v2278
        %v2488 = vpop.f32.mrf.mxu0
        %v2489 = vadd.f32 0.0, %v2488
        %v2490 = vpop.f32.mrf.mxu0
        %v2491 = vadd.f32 0.0, %v2490
        %2492 = vdwg.mxu0
        %2493 = vmatprep.subr.mxu0 0.0
        %2494 = vmatpush1.msra.mxu0 0.0
        %2495 = vmatprep.subr.mxu0 0.0
        %2496 = vmatpush1.msra.mxu0 0.0
        %2497 = vmatprep.subr.mxu0 0.0
        %2498 = vmatpush1.msra.mxu0 0.0
        %2499 = vmatprep.subr.mxu0 0.0
        %2500 = vmatpush1.msra.mxu0 0.0
        %2501 = vmatprep.subr.mxu0 0.0
        %2502 = vmatpush1.msra.mxu0 0.0
        %2503 = vmatprep.subr.mxu0 0.0
        %2504 = vmatpush1.msra.mxu0 0.0
        %2505 = vmatprep.subr.mxu0 0.0
        %2506 = vmatpush1.msra.mxu0 0.0
        %2507 = vmatprep.subr.mxu0 %v2275
        %2508 = vmatpush1.msra.mxu0 %v2274
        %2509 = vmatprep.subr.mxu0 %v2267
        %2510 = vmatpush1.msra.mxu0 %v2266
        %2511 = vmatprep.subr.mxu0 %v2259
        %2512 = vmatpush1.msra.mxu0 %v2258
        %2513 = vmatprep.subr.mxu0 %v2251
        %2514 = vmatpush1.msra.mxu0 %v2250
        %2515 = vmatprep.subr.mxu0 %v2243
        %2516 = vmatpush1.msra.mxu0 %v2242
        %2517 = vmatprep.subr.mxu0 %v2235
        %2518 = vmatpush1.msra.mxu0 %v2234
        %2519 = vmatprep.subr.mxu0 %v2227
        %2520 = vmatpush1.msra.mxu0 %v2226
        %2521 = vmatprep.subr.mxu0 %v2219
        %2522 = vmatpush1.msra.mxu0 %v2218
        %2523 = vmatprep.subr.mxu0 %v2211
        %2524 = vmatpush1.msra.mxu0 %v2210
        %2525 = vmatprep.subr.mxu0 0.0
        %2526 = vmatpush2.msra.mxu0 0.0
        %2527 = vmatprep.subr.mxu0 0.0
        %2528 = vmatpush2.msra.mxu0 0.0
        %2529 = vmatprep.subr.mxu0 0.0
        %2530 = vmatpush2.msra.mxu0 0.0
        %2531 = vmatprep.subr.mxu0 0.0
        %2532 = vmatpush2.msra.mxu0 0.0
        %2533 = vmatprep.subr.mxu0 0.0
        %2534 = vmatpush2.msra.mxu0 0.0
        %2535 = vmatprep.subr.mxu0 0.0
        %2536 = vmatpush2.msra.mxu0 0.0
        %2537 = vmatprep.subr.mxu0 0.0
        %2538 = vmatpush2.msra.mxu0 0.0
        %2539 = vmatprep.subr.mxu0 0.0
        %2540 = vmatpush2.msra.mxu0 0.0
        %2541 = vmatprep.subr.mxu0 0.0
        %2542 = vmatpush2.msra.mxu0 0.0
        %2543 = vmatprep.subr.mxu0 0.0
        %2544 = vmatpush2.msra.mxu0 0.0
        %2545 = vmatprep.subr.mxu0 0.0
        %2546 = vmatpush2.msra.mxu0 0.0
        %2547 = vmatprep.subr.mxu0 0.0
        %2548 = vmatpush2.msra.mxu0 0.0
        %2549 = vmatprep.subr.mxu0 0.0
        %2550 = vmatpush2.msra.mxu0 0.0
        %2551 = vmatprep.subr.mxu0 0.0
        %2552 = vmatpush2.msra.mxu0 0.0
        %2553 = vmatprep.subr.mxu0 0.0
        %2554 = vmatpush2.msra.mxu0 0.0
        %2555 = vmatprep.subr.mxu0 0.0
        %2556 = vmatpush2.msra.mxu0 0.0
        %2557 = vmatprep.mubr.f32.mxu0 0.0
        %2558 = vmatmul.mubr.f32.gmra.mxu0 %v2278
        %v2559 = vpop.f32.mrf.mxu0
        %v2560 = vadd.f32 0.0, %v2559
        %v2561 = vpop.f32.mrf.mxu0
        %v2562 = vadd.f32 0.0, %v2561
        %2563 = vdwg.mxu0
        %v2564 = vld [vmem:[%s8] sm:$0xff]
        %2566 = vset.pattern.permute.xlu0 0
        %2567 = vperm.xlu0 %2566, %v2564
        %v2568 = vpop.permute.xlu0 %2567
        %v2570 = vmul.f32 %v2347, %v2568
        %v2571 = vmul.f32 %v2349, %v2568
        %v2572 = vmul.f32 %v2418, %v2568
        %v2573 = vmul.f32 %v2420, %v2568
        %v2574 = vmul.f32 %v2489, %v2568
        %v2575 = vmul.f32 %v2491, %v2568
        %v2576 = vmul.f32 %v2560, %v2568
        %v2577 = vmul.f32 %v2562, %v2568
        %v2578 = vld [vmem:[%s9] sm:$0xff]
        %2580 = vset.pattern.permute.xlu0 0
        %2581 = vperm.xlu0 %2580, %v2578
        %v2582 = vpop.permute.xlu0 %2581
        %v2584 = vadd.f32 %v2570, %v2582
        %v2585 = vadd.f32 %v2571, %v2582
        %v2586 = vadd.f32 %v2572, %v2582
        %v2587 = vadd.f32 %v2573, %v2582
        %v2588 = vadd.f32 %v2574, %v2582
        %v2589 = vadd.f32 %v2575, %v2582
        %v2590 = vadd.f32 %v2576, %v2582
        %v2591 = vadd.f32 %v2577, %v2582
        %v2592 = vmax.f32 %v2584, 0.0
        %v2593 = vmax.f32 %v2585, 0.0
        %v2594 = vmax.f32 %v2586, 0.0
        %v2595 = vmax.f32 %v2587, 0.0
        %v2596 = vmax.f32 %v2588, 0.0
        %v2597 = vmax.f32 %v2589, 0.0
        %v2598 = vmax.f32 %v2590, 0.0
        %v2599 = vmax.f32 %v2591, 0.0
        %2600 = vst [vmem:[%s352] sm:$0xff] %v2592
        %2601 = vst [vmem:[%s352 + $0x8] sm:$0xff] %v2593
        %2602 = vst [vmem:[%s352 + $0x10] sm:$0xff] %v2594
        %2603 = vst [vmem:[%s352 + $0x18] sm:$0xff] %v2595
        %2604 = vst [vmem:[%s352 + $0x20] sm:$0xff] %v2596
        %2605 = vst [vmem:[%s352 + $0x28] sm:$0xff] %v2597
        %2606 = vst [vmem:[%s352 + $0x30] sm:$0xff] %v2598
        %2607 = vst [vmem:[%s352 + $0x38] sm:$0xff] %v2599
        %s2608 = sand.u32 %s247, 1
        %s2609 = scalar_lea.sflag [#allocation6], %s2608
        %s2610 = sand.u32 %s247, 1
        %s2611 = smul.addr %s2610, 64
        %s2612 = scalar_lea.vmem [#allocation5], %s2611
        // Predicated region
        $region61: #{tpu_custom_call.1} parent=59 // pred_check
          %p2613 = pneg %p257
        $region62: #{tpu_custom_call.1} parent=59 // pred_check_branch
          %2615 = sbr.rel (%p2613) target = $region64
        $region63: #{tpu_custom_call.1} parent=59 // pred_region
          %s2617 = ssub.s32 1024, 1024
          %2618 = vsyncadd %s2609, %s2617
          %s2619 = smul.addr %s24, 8
          %s2620 = smul.addr %s2619, 128
          %s2621 = scalar_lea.hbm %s10, %s2620
          %s2623 = sshll.u32 %s2612, 4
          %s2624 = int_to_ptr.vmem [resolvable:$true] %s2623
          %2626 = dma.vmem_to_hbm [thread:$0]  %s2624, 1024, %s2621, %s2609
        $region64: #{tpu_custom_call.1} parent=59 // pred_fallthru
          _
      $region60: #{tpu_custom_call.1} parent=5 // pred_fallthru
        _
      %p2627 = scmp.le.s32.totalorder 2, %s19
      // Predicated region
      $region65: #{tpu_custom_call.1} parent=5 // pred_check
        %p2628 = pneg %p2627
      $region66: #{tpu_custom_call.1} parent=5 // pred_check_branch
        %2630 = sbr.rel (%p2628) target = $region68
      $region67: #{tpu_custom_call.1} parent=5 // pred_region
        %s2631 = ssub.s32 %s19, 2
        // Predicated region
        $region69: #{tpu_custom_call.1} parent=67 // pred_check
          %p2632 = pneg %p263
        $region70: #{tpu_custom_call.1} parent=67 // pred_check_branch
          %2634 = sbr.rel (%p2632) target = $region72
        $region71: #{tpu_custom_call.1} parent=67 // pred_region
          %s2635 = sand.u32 %s248, 1
          %s2636 = scalar_lea.sflag [#allocation6], %s2635
          %s2637 = sand.u32 %s248, 1
          %s2638 = smul.addr %s2637, 64
          %s2639 = scalar_lea.vmem [#allocation5], %s2638
          %2640 = dma.done %s2636, 1024
        $region72: #{tpu_custom_call.1} parent=67 // pred_fallthru
          _
      $region68: #{tpu_custom_call.1} parent=5 // pred_fallthru
        _
    $region6: #{tpu_custom_call.1} parent=1 // loop_footer
      %s23 = sadd.s32 1, %s19
    $region7: #{tpu_custom_call.1} parent=1 // loop_footer_branch
      %18 = sbr.rel target = $region3
    $region8: #{tpu_custom_call.1} parent=1 // loop_exit
      _
    %2641 = vsyncpa [#allocation6], 1
    %s2642 = scalar_lea.sflag [#allocation6], 1
    %2643 = vsyncpa %s2642, 1

</llo_original>
